<compile_context>
chip_gen: v7x
topology: tpu7x:2x2x1
jax: 0.10.0
libtpu: 0.0.40
codegen_flags: <defaults>
</compile_context>

<pallas_src>
import functools
import math
from dataclasses import dataclass

import jax
import jax.numpy as jnp
from jax import lax
from jax.experimental import pallas as pl
from jax.experimental.pallas import tpu as pltpu


@dataclass(frozen=True)
class Config:
    vocab_size: int = 128
    n_embd: int = 32          # == hidden_dim
    hidden_dim: int = 32
    block_size: int = 8
    n_layer: int = 2
    n_head: int = 2
    head_size: int = 16       # n_head * head_size == hidden_dim
    dropout: float = 0.0      # eval mode -> dropout is identity
    residual_scale: float = 1.0


LANE = 128


def _round_up(x, m):
    return ((x + m - 1) // m) * m


# ---------------------------------------------------------------------------
# exact-erf GELU from Pallas-supported primitives (abs/exp/div/where).
# Abramowitz & Stegun 7.1.26, |abs err| <= 1.5e-7 (f32-level) -> matches nn.GELU().
# ---------------------------------------------------------------------------
_ERF_P = 0.3275911
_ERF_A = (0.254829592, -0.284496736, 1.421413741, -1.453152027, 1.061405429)


def _erf(x):
    a = jnp.abs(x)
    t = 1.0 / (1.0 + _ERF_P * a)
    poly = ((((_ERF_A[4] * t + _ERF_A[3]) * t + _ERF_A[2]) * t + _ERF_A[1]) * t
            + _ERF_A[0]) * t
    e = 1.0 - poly * jnp.exp(-a * a)
    return jnp.where(x >= 0.0, e, -e)


def _gelu(x):
    return 0.5 * x * (1.0 + _erf(x * (1.0 / math.sqrt(2.0))))


def _ln_masked(x, g, b, hmask, n_real, eps=1e-5):
    # x: (M, HP) f32 with padding lanes == 0; statistics over the n_real real lanes.
    mu = jnp.sum(x, axis=-1, keepdims=True) * (1.0 / n_real)
    c = (x - mu) * hmask
    var = jnp.sum(c * c, axis=-1, keepdims=True) * (1.0 / n_real)
    return c * lax.rsqrt(var + eps) * g + b


# rows of the packed per-layer param block (L, NUM_VEC_ROWS, K):
R_LN1G, R_LN1B, R_LN2G, R_LN2B = 0, 1, 2, 3
R_BQ, R_BK, R_BV = 4, 5, 6
R_BPROJ, R_B1, R_B2, R_B3 = 7, 8, 9, 10
R_ATT_S, R_FFD_S = 11, 12
NUM_VEC_ROWS = 13


# ---------------------------------------------------------------------------
# Kernel A: all transformer blocks + fused final LayerNorm.  grid = (n_layer,).
# ---------------------------------------------------------------------------
def blocks_kernel(x_ref, vecs_ref, wqkv_ref, wproj_ref, w1_ref, w2_ref, w3_ref,
                  lnf_ref, res_ref, *, n_head, head_size, hidden, batch, seq_len):
    l = pl.program_id(0)
    n_layer = pl.num_programs(0)

    @pl.when(l == 0)
    def _():
        res_ref[...] = x_ref[...]          # seed the VMEM-resident residual carry

    x = res_ref[...]                       # (M, HP) f32; padding lanes are always 0
    M, HP = x.shape
    B, S = batch, seq_len
    nh, hs, H = n_head, head_size, hidden
    HSP = wproj_ref.shape[2]               # lane-padded head size
    FFP = w1_ref.shape[2]                  # (padded) FFN width

    lane = lax.broadcasted_iota(jnp.int32, (1, HP), 1)
    hmask = (lane < H).astype(jnp.float32)          # LayerNorm over the real H lanes

    vb = vecs_ref[0]                       # (NUM_VEC_ROWS, K) packed small params, f32
    ln1_g, ln1_b = vb[R_LN1G:R_LN1G + 1, :HP], vb[R_LN1B:R_LN1B + 1, :HP]
    ln2_g, ln2_b = vb[R_LN2G:R_LN2G + 1, :HP], vb[R_LN2B:R_LN2B + 1, :HP]
    b_proj = vb[R_BPROJ:R_BPROJ + 1, :HP]
    b1 = vb[R_B1:R_B1 + 1, :FFP]
    b2 = vb[R_B2:R_B2 + 1, :FFP]
    b3 = vb[R_B3:R_B3 + 1, :HP]
    att_s = vb[R_ATT_S:R_ATT_S + 1, :HP]   # residual scales as broadcast rows
    ffd_s = vb[R_FFD_S:R_FFD_S + 1, :HP]   # (no single-lane extracts)

    # causal mask built in-kernel -> no HBM traffic, scales with S for free
    rows = lax.broadcasted_iota(jnp.int32, (S, S), 0)
    cols = lax.broadcasted_iota(jnp.int32, (S, S), 1)
    cmask = jnp.where(rows >= cols, 0.0, -1e30).astype(jnp.float32)

    bf16, f32 = jnp.bfloat16, jnp.float32

    # -------- multi-head causal self-attention (pre-LN) --------
    xn = _ln_masked(x, ln1_g, ln1_b, hmask, H)
    xn_b = xn.astype(bf16)
    inv_sqrt_hs = 1.0 / math.sqrt(hs)

    att = jnp.zeros((M, HP), f32)
    for h in range(nh):                    # static loop; every slice is 128-lane aligned
        bq = vb[R_BQ:R_BQ + 1, h * HSP:(h + 1) * HSP]
        bk = vb[R_BK:R_BK + 1, h * HSP:(h + 1) * HSP]
        bv = vb[R_BV:R_BV + 1, h * HSP:(h + 1) * HSP]
        q = jnp.dot(xn_b, wqkv_ref[0, 0, h], preferred_element_type=f32) + bq
        k = jnp.dot(xn_b, wqkv_ref[0, 1, h], preferred_element_type=f32) + bk
        v = jnp.dot(xn_b, wqkv_ref[0, 2, h], preferred_element_type=f32) + bv
        q = q.reshape(B, S, HSP).astype(bf16)
        k = k.reshape(B, S, HSP).astype(bf16)
        v = v.reshape(B, S, HSP).astype(bf16)
        s = jnp.einsum('bqd,bkd->bqk', q, k,
                       preferred_element_type=f32) * inv_sqrt_hs
        s = s + cmask[None]
        p = jnp.exp(s - jnp.max(s, axis=-1, keepdims=True))
        p = p / jnp.sum(p, axis=-1, keepdims=True)        # exact softmax (f32)
        o = jnp.einsum('bqk,bkd->bqd', p.astype(bf16), v,
                       preferred_element_type=f32)
        # accumulate head output straight into the projection (no lane concat)
        att = att + jnp.dot(o.reshape(M, HSP).astype(bf16), wproj_ref[0, h],
                            preferred_element_type=f32)
    att = att + b_proj
    x = x + att_s * att                    # scaled residual add

    # -------- feed-forward (pre-LN): Linear-GELU-Linear-GELU-Linear --------
    xn2 = _ln_masked(x, ln2_g, ln2_b, hmask, H)
    h1 = _gelu(jnp.dot(xn2.astype(bf16), w1_ref[0], preferred_element_type=f32) + b1)
    h2 = _gelu(jnp.dot(h1.astype(bf16), w2_ref[0], preferred_element_type=f32) + b2)
    h3 = jnp.dot(h2.astype(bf16), w3_ref[0], preferred_element_type=f32) + b3
    x = x + ffd_s * h3                     # scaled residual add

    res_ref[...] = x                       # dense (M, 128) whole-block store

    # fuse the final LayerNorm so the lm_head kernel is a pure tiled matmul
    @pl.when(l == n_layer - 1)
    def _():
        lnf = lnf_ref[...]
        res_ref[...] = _ln_masked(x, lnf[0:1, :], lnf[1:2, :], hmask, H)


# ---------------------------------------------------------------------------
# Kernel B: weight-tied lm_head, tiled over vocab ("parallel").
# ---------------------------------------------------------------------------
def lm_head_kernel(xf_ref, wlm_ref, logits_ref):
    logits_ref[...] = jnp.dot(xf_ref[...].astype(jnp.bfloat16), wlm_ref[...],
                              preferred_element_type=jnp.float32)


# ---------------------------------------------------------------------------
# Parameters: master (unpadded f32) copies for the jnp reference + kernel-layout
# copies (zero-padded to the 128-lane tile, weights in bf16, lm_head pre-transposed).
# All layout work happens ONCE here, outside jit.
# ---------------------------------------------------------------------------
def make_params(cfg: Config, key):
    assert cfg.n_embd == cfg.hidden_dim
    assert cfg.n_head * cfg.head_size == cfg.hidden_dim
    L, H, V = cfg.n_layer, cfg.hidden_dim, cfg.vocab_size
    nh, hs = cfg.n_head, cfg.head_size
    FF = 4 * H
    HP, HSP = _round_up(H, LANE), _round_up(hs, LANE)
    FFP, VP = _round_up(FF, LANE), _round_up(V, LANE)
    K = max(nh * HSP, FFP, HP)
    std = 0.02
    scale_init = cfg.residual_scale / math.sqrt(cfg.n_layer)
    f32, bf16 = jnp.float32, jnp.bfloat16
    ks = jax.random.split(key, 8)

    # master weights (biases are zero-init, LN affine is (1, 0) -> stored implicitly)
    w_emb = jax.random.normal(ks[0], (V, H), f32) * std       # tied token emb / lm_head
    w_pos = jax.random.normal(ks[1], (cfg.block_size, H), f32) * 0.01
    wq = jax.random.normal(ks[2], (L, nh, H, hs), f32) * std
    wk = jax.random.normal(ks[3], (L, nh, H, hs), f32) * std
    wv = jax.random.normal(ks[4], (L, nh, H, hs), f32) * std
    wproj = jax.random.normal(ks[5], (L, H, H), f32) * std
    w1 = jax.random.normal(ks[6], (L, H, FF), f32) * std
    kk = jax.random.split(ks[7], 2)
    w2 = jax.random.normal(kk[0], (L, FF, FF), f32) * std
    w3 = jax.random.normal(kk[1], (L, FF, H), f32) * std

    # kernel-layout (lane-padded, bf16) weights
    wqkv_k = jnp.zeros((L, 3, nh, HP, HSP), f32)
    wqkv_k = wqkv_k.at[:, 0, :, :H, :hs].set(wq)
    wqkv_k = wqkv_k.at[:, 1, :, :H, :hs].set(wk)
    wqkv_k = wqkv_k.at[:, 2, :, :H, :hs].set(wv)

    wproj_k = jnp.zeros((L, nh, HSP, HP), f32)
    wproj_k = wproj_k.at[:, :, :hs, :H].set(wproj.reshape(L, nh, hs, H))

    w1_k = jnp.zeros((L, HP, FFP), f32).at[:, :H, :FF].set(w1)
    w2_k = jnp.zeros((L, FFP, FFP), f32).at[:, :FF, :FF].set(w2)
    w3_k = jnp.zeros((L, FFP, HP), f32).at[:, :FF, :H].set(w3)

    # packed per-layer small params (one DMA per layer), f32
    vecs = jnp.zeros((L, NUM_VEC_ROWS, K), f32)
    vecs = vecs.at[:, R_LN1G, :H].set(1.0)            # LN gammas
    vecs = vecs.at[:, R_LN2G, :H].set(1.0)
    vecs = vecs.at[:, R_ATT_S, :].set(scale_init)     # residual scales (broadcast rows)
    vecs = vecs.at[:, R_FFD_S, :].set(scale_init)

    lnf = jnp.zeros((2, HP), f32).at[0, :H].set(1.0)  # final LN gamma/beta

    w_emb_p = jnp.zeros((V, HP), f32).at[:, :H].set(w_emb)
    w_pos_p = jnp.zeros((cfg.block_size, HP), f32).at[:, :H].set(w_pos)
    wlm_k = jnp.zeros((HP, VP), f32).at[:H, :V].set(w_emb.T)   # tied, pre-transposed once

    return dict(
        # reference-path masters
        w_emb=w_emb, w_pos=w_pos, wq=wq, wk=wk, wv=wv, wproj=wproj,
        w1=w1, w2=w2, w3=w3, scale=scale_init,
        # kernel-path arrays
        w_emb_p=w_emb_p, w_pos_p=w_pos_p, vecs=vecs, lnf=lnf,
        wqkv_k=wqkv_k.astype(bf16), wproj_k=wproj_k.astype(bf16),
        w1_k=w1_k.astype(bf16), w2_k=w2_k.astype(bf16), w3_k=w3_k.astype(bf16),
        wlm_k=wlm_k.astype(bf16),
    )


# ---------------------------------------------------------------------------
# Forward wrapper (embedding gather is plain-JAX glue; the rest is two kernels)
# ---------------------------------------------------------------------------
def gpt_forward(idx, params, cfg: Config):
    B, S = idx.shape
    H, L, V = cfg.hidden_dim, cfg.n_layer, cfg.vocab_size
    nh = cfg.n_head
    HP = params["w_emb_p"].shape[1]
    HSP = params["wproj_k"].shape[2]
    FFP = params["w1_k"].shape[2]
    VP = params["wlm_k"].shape[1]
    NR, K = params["vecs"].shape[1], params["vecs"].shape[2]
    M = B * S

    tok = jnp.take(params["w_emb_p"], idx, axis=0)                 # (B, S, HP)
    pos = params["w_pos_p"][:S] * (1.0 / math.sqrt(cfg.n_embd))    # (S, HP)
    x = (tok + pos[None]).reshape(M, HP).astype(jnp.float32)

    kern = functools.partial(blocks_kernel, n_head=nh, head_size=cfg.head_size,
                             hidden=H, batch=B, seq_len=S)

    # TODO(synk): when B*S grows, add a leading "parallel" grid axis over M tiles so
    # v7x's second TensorCore gets work, and set vmem_limit_bytes / per-weight
    # pipeline_mode when per-layer weight blocks approach the scoped-VMEM limit
    # (16 MiB default on v5e, 32 MiB on v6e/v7x).
    xf = pl.pallas_call(
        kern,
        out_shape=jax.ShapeDtypeStruct((M, HP), jnp.float32),
        grid=(L,),
        in_specs=[
            pl.BlockSpec((M, HP), lambda l: (0, 0)),                       # embeddings
            pl.BlockSpec((1, NR, K), lambda l: (l, 0, 0)),                 # packed per-layer params
            pl.BlockSpec((1, 3, nh, HP, HSP), lambda l: (l, 0, 0, 0, 0)),  # Wq/Wk/Wv
            pl.BlockSpec((1, nh, HSP, HP), lambda l: (l, 0, 0, 0)),        # Wproj (per head)
            pl.BlockSpec((1, HP, FFP), lambda l: (l, 0, 0)),               # W1
            pl.BlockSpec((1, FFP, FFP), lambda l: (l, 0, 0)),              # W2
            pl.BlockSpec((1, FFP, HP), lambda l: (l, 0, 0)),               # W3
            pl.BlockSpec((2, HP), lambda l: (0, 0)),                       # final LN gamma/beta
        ],
        out_specs=pl.BlockSpec((M, HP), lambda l: (0, 0)),   # residual carry / LN_final(x)
        compiler_params=pltpu.CompilerParams(dimension_semantics=("arbitrary",)),
    )(x, params["vecs"], params["wqkv_k"], params["wproj_k"],
      params["w1_k"], params["w2_k"], params["w3_k"], params["lnf"])

    # weight-tied lm_head: separate vocab-tiled kernel (keeps large vocabs out of the
    # layer loop's VMEM budget; trivially one tile at this toy vocab).
    TV = min(LANE, VP)
    logits_flat = pl.pallas_call(
        lm_head_kernel,
        out_shape=jax.ShapeDtypeStruct((M, VP), jnp.float32),
        grid=(VP // TV,),
        in_specs=[pl.BlockSpec((M, HP), lambda j: (0, 0)),
                  pl.BlockSpec((HP, TV), lambda j: (0, j))],
        out_specs=pl.BlockSpec((M, TV), lambda j: (0, j)),
        compiler_params=pltpu.CompilerParams(dimension_semantics=("parallel",)),
    )(xf, params["wlm_k"])

    # TODO(synk): targets / cross-entropy loss and the autoregressive generate()
    # sampling loop (tokenizer, torch.multinomial) are host-side, not kernels.
    return logits_flat[:, :V].reshape(B, S, V)


# ---------------------------------------------------------------------------
# Pure-jnp (XLA) reference with the same bf16-at-the-MXU numerics, for validation.
# ---------------------------------------------------------------------------
def gpt_reference(idx, params, cfg: Config):
    B, S = idx.shape
    H, L = cfg.hidden_dim, cfg.n_layer
    nh, hs = cfg.n_head, cfg.head_size
    f32 = jnp.float32
    bf = lambda a: a.astype(jnp.bfloat16)
    scale = params["scale"]

    def ln(x, eps=1e-5):                  # LN affine is init (gamma=1, beta=0)
        mu = jnp.mean(x, axis=-1, keepdims=True)
        var = jnp.mean((x - mu) ** 2, axis=-1, keepdims=True)
        return (x - mu) * lax.rsqrt(var + eps)

    tok = jnp.take(params["w_emb"], idx, axis=0)
    pos = params["w_pos"][:S] / math.sqrt(cfg.n_embd)
    x = tok + pos[None]

    rows = lax.broadcasted_iota(jnp.int32, (S, S), 0)
    cols = lax.broadcasted_iota(jnp.int32, (S, S), 1)
    cmask = jnp.where(rows >= cols, 0.0, -1e30).astype(f32)

    for l in range(L):
        xn = ln(x)
        heads = []
        for h in range(nh):
            q = jnp.einsum('bsh,hd->bsd', bf(xn), bf(params["wq"][l, h]),
                           preferred_element_type=f32)
            k = jnp.einsum('bsh,hd->bsd', bf(xn), bf(params["wk"][l, h]),
                           preferred_element_type=f32)
            v = jnp.einsum('bsh,hd->bsd', bf(xn), bf(params["wv"][l, h]),
                           preferred_element_type=f32)
            s = jnp.einsum('bqd,bkd->bqk', bf(q), bf(k),
                           preferred_element_type=f32) / math.sqrt(hs)
            s = s + cmask[None]
            p = jnp.exp(s - jnp.max(s, axis=-1, keepdims=True))
            p = p / jnp.sum(p, axis=-1, keepdims=True)
            heads.append(jnp.einsum('bqk,bkd->bqd', bf(p), bf(v),
                                    preferred_element_type=f32))
        o = jnp.concatenate(heads, axis=-1)
        att = jnp.einsum('bsh,hk->bsk', bf(o), bf(params["wproj"][l]),
                         preferred_element_type=f32)
        x = x + scale * att               # biases are zero-initialized -> omitted

        xn2 = ln(x)
        h1 = jax.nn.gelu(jnp.einsum('bsh,hf->bsf', bf(xn2), bf(params["w1"][l]),
                                    preferred_element_type=f32), approximate=False)
        h2 = jax.nn.gelu(jnp.einsum('bsf,fg->bsg', bf(h1), bf(params["w2"][l]),
                                    preferred_element_type=f32), approximate=False)
        h3 = jnp.einsum('bsf,fh->bsh', bf(h2), bf(params["w3"][l]),
                        preferred_element_type=f32)
        x = x + scale * h3

    xf = ln(x)
    return jnp.einsum('bsh,hv->bsv', bf(xf), bf(params["w_emb"].T),
                      preferred_element_type=f32)


if __name__ == "__main__":
    cfg = Config()
    key = jax.random.PRNGKey(0)
    pkey, ikey = jax.random.split(key)
    params = make_params(cfg, pkey)

    idx = jax.random.randint(ikey, (2, cfg.block_size), 0, cfg.vocab_size,
                             dtype=jnp.int32)

    logits = jax.jit(lambda i: gpt_forward(i, params, cfg))(idx)
    jax.block_until_ready(logits)

    assert logits.shape == (2, cfg.block_size, cfg.vocab_size)
    assert bool(jnp.all(jnp.isfinite(logits)))

    ref = gpt_reference(idx, params, cfg)
    err = float(jnp.max(jnp.abs(logits - ref)))
    assert err < 1e-2, f"kernel vs reference mismatch: max abs err = {err}"

    print("KERNEL_OK")
</pallas_src>

<mosaic_0001>
module attributes {stable_mosaic.version = 11 : i64} {
  func.func @lm_head_kernel(%arg0: i32, %arg1: memref<16x128xf32, #tpu.memory_space<vmem>>, %arg2: memref<128x128xbf16, #tpu.memory_space<vmem>>, %arg3: memref<16x128xf32, #tpu.memory_space<vmem>>) attributes {dimension_semantics = [#tpu.dimension_semantics<parallel>], iteration_bounds = array<i64: 1>, scalar_prefetch = 0 : i64, scratch_operands = 0 : i64, tpu.core_type = #tpu.core_type<tc>, window_params = [{pipeline_mode = #tpu.pipeline_mode<synchronous>, transform_indices = @transform_0, window_bounds = array<i64: 16, 128>}, {transform_indices = @transform_1, window_bounds = array<i64: 128, 128>}, {transform_indices = @transform_2, window_bounds = array<i64: 16, 128>}]} {
    %c0 = arith.constant 0 : index
    %c0_0 = arith.constant 0 : index
    %0 = vector.load %arg1[%c0, %c0_0] : memref<16x128xf32, #tpu.memory_space<vmem>>, vector<16x128xf32>
    %1 = arith.truncf %0 : vector<16x128xf32> to vector<16x128xbf16>
    %c0_1 = arith.constant 0 : index
    %c0_2 = arith.constant 0 : index
    %2 = vector.load %arg2[%c0_1, %c0_2] : memref<128x128xbf16, #tpu.memory_space<vmem>>, vector<128x128xbf16>
    %cst = arith.constant dense<0.000000e+00> : vector<16x128xf32>
    %3 = tpu.matmul %1, %2, %cst {dimension_numbers = #tpu.dot_dimension_numbers<[1], [0], [0], [1], [0, 0, 1, 1], [], []>} : vector<16x128xbf16>, vector<128x128xbf16>, vector<16x128xf32> -> vector<16x128xf32>
    %c0_3 = arith.constant 0 : index
    %c0_4 = arith.constant 0 : index
    %4 = vector.load %arg3[%c0_3, %c0_4] : memref<16x128xf32, #tpu.memory_space<vmem>>, vector<16x128xf32>
    tpu.vector_store %arg3[%c0_3, %c0_4], %3 {strides = array<i32>} : memref<16x128xf32, #tpu.memory_space<vmem>>, vector<16x128xf32>,
    return
  }
  func.func @transform_0(%arg0: i32) -> (i32, i32) {
    %c0_i32 = arith.constant 0 : i32
    %c0_i32_0 = arith.constant 0 : i32
    %c0_i32_1 = arith.constant 0 : i32
    return %c0_i32, %c0_i32_0 : i32, i32
  }
  func.func @transform_1(%arg0: i32) -> (i32, i32) {
    %c0_i32 = arith.constant 0 : i32
    %c0_i32_0 = arith.constant 0 : i32
    return %c0_i32, %arg0 : i32, i32
  }
  func.func @transform_2(%arg0: i32) -> (i32, i32) {
    %c0_i32 = arith.constant 0 : i32
    %c0_i32_0 = arith.constant 0 : i32
    return %c0_i32, %arg0 : i32, i32
  }
}

module attributes {stable_mosaic.version = 11 : i64} {
  func.func @blocks_kernel(%arg0: i32, %arg1: memref<16x128xf32, #tpu.memory_space<vmem>>, %arg2: memref<1x13x256xf32, #tpu.memory_space<vmem>>, %arg3: memref<1x3x2x128x128xbf16, #tpu.memory_space<vmem>>, %arg4: memref<1x2x128x128xbf16, #tpu.memory_space<vmem>>, %arg5: memref<1x128x128xbf16, #tpu.memory_space<vmem>>, %arg6: memref<1x128x128xbf16, #tpu.memory_space<vmem>>, %arg7: memref<1x128x128xbf16, #tpu.memory_space<vmem>>, %arg8: memref<2x128xf32, #tpu.memory_space<vmem>>, %arg9: memref<16x128xf32, #tpu.memory_space<vmem>>) attributes {dimension_semantics = [#tpu.dimension_semantics<arbitrary>], iteration_bounds = array<i64: 2>, scalar_prefetch = 0 : i64, scratch_operands = 0 : i64, tpu.core_type = #tpu.core_type<tc>, window_params = [{pipeline_mode = #tpu.pipeline_mode<synchronous>, transform_indices = @transform_0, window_bounds = array<i64: 16, 128>}, {transform_indices = @transform_1, window_bounds = array<i64: 1, 13, 256>}, {transform_indices = @transform_2, window_bounds = array<i64: 1, 3, 2, 128, 128>}, {transform_indices = @transform_3, window_bounds = array<i64: 1, 2, 128, 128>}, {transform_indices = @transform_4, window_bounds = array<i64: 1, 128, 128>}, {transform_indices = @transform_5, window_bounds = array<i64: 1, 128, 128>}, {transform_indices = @transform_6, window_bounds = array<i64: 1, 128, 128>}, {pipeline_mode = #tpu.pipeline_mode<synchronous>, transform_indices = @transform_7, window_bounds = array<i64: 2, 128>}, {pipeline_mode = #tpu.pipeline_mode<synchronous>, transform_indices = @transform_8, window_bounds = array<i64: 16, 128>}]} {
    %c0_i32 = arith.constant 0 : i32
    %0 = arith.cmpi eq, %arg0, %c0_i32 : i32
    %1 = arith.extui %0 : i1 to i32
    %c0_i32_0 = arith.constant 0 : i32
    %2 = arith.cmpi ne, %1, %c0_i32_0 : i32
    scf.if %2 {
      %c0_116 = arith.constant 0 : index
      %c0_117 = arith.constant 0 : index
      %277 = vector.load %arg1[%c0_116, %c0_117] : memref<16x128xf32, #tpu.memory_space<vmem>>, vector<16x128xf32>
      %c0_118 = arith.constant 0 : index
      %c0_119 = arith.constant 0 : index
      %278 = vector.load %arg9[%c0_118, %c0_119] : memref<16x128xf32, #tpu.memory_space<vmem>>, vector<16x128xf32>
      tpu.vector_store %arg9[%c0_118, %c0_119], %277 {strides = array<i32>} : memref<16x128xf32, #tpu.memory_space<vmem>>, vector<16x128xf32>,
    } else {
    }
    %c0 = arith.constant 0 : index
    %c0_1 = arith.constant 0 : index
    %3 = vector.load %arg9[%c0, %c0_1] : memref<16x128xf32, #tpu.memory_space<vmem>>, vector<16x128xf32>
    %4 = tpu.iota {dimensions = array<i32: 1>} : vector<1x128xi32>
    %c32_i32 = arith.constant 32 : i32
    %5 = vector.broadcast %c32_i32 : i32 to vector<1x128xi32>
    %6 = arith.cmpi slt, %4, %5 : vector<1x128xi32>
    %7 = arith.extui %6 : vector<1x128xi1> to vector<1x128xi32>
    %8 = arith.sitofp %7 : vector<1x128xi32> to vector<1x128xf32>
    %c0_2 = arith.constant 0 : index
    %c0_3 = arith.constant 0 : index
    %c0_4 = arith.constant 0 : index
    %9 = vector.load %arg2[%c0_2, %c0_3, %c0_4] : memref<1x13x256xf32, #tpu.memory_space<vmem>>, vector<1x13x256xf32>
    %10 = vector.shape_cast %9 : vector<1x13x256xf32> to vector<13x256xf32>
    %11 = vector.extract_strided_slice %10 {offsets = [0, 0], sizes = [1, 128], strides = [1, 1]} : vector<13x256xf32> to vector<1x128xf32>
    %12 = vector.extract_strided_slice %10 {offsets = [1, 0], sizes = [1, 128], strides = [1, 1]} : vector<13x256xf32> to vector<1x128xf32>
    %13 = vector.extract_strided_slice %10 {offsets = [2, 0], sizes = [1, 128], strides = [1, 1]} : vector<13x256xf32> to vector<1x128xf32>
    %14 = vector.extract_strided_slice %10 {offsets = [3, 0], sizes = [1, 128], strides = [1, 1]} : vector<13x256xf32> to vector<1x128xf32>
    %15 = vector.extract_strided_slice %10 {offsets = [7, 0], sizes = [1, 128], strides = [1, 1]} : vector<13x256xf32> to vector<1x128xf32>
    %16 = vector.extract_strided_slice %10 {offsets = [8, 0], sizes = [1, 128], strides = [1, 1]} : vector<13x256xf32> to vector<1x128xf32>
    %17 = vector.extract_strided_slice %10 {offsets = [9, 0], sizes = [1, 128], strides = [1, 1]} : vector<13x256xf32> to vector<1x128xf32>
    %18 = vector.extract_strided_slice %10 {offsets = [10, 0], sizes = [1, 128], strides = [1, 1]} : vector<13x256xf32> to vector<1x128xf32>
    %19 = vector.extract_strided_slice %10 {offsets = [11, 0], sizes = [1, 128], strides = [1, 1]} : vector<13x256xf32> to vector<1x128xf32>
    %20 = vector.extract_strided_slice %10 {offsets = [12, 0], sizes = [1, 128], strides = [1, 1]} : vector<13x256xf32> to vector<1x128xf32>
    %21 = tpu.iota {dimensions = array<i32: 0>} : vector<8x8xi32>
    %22 = tpu.iota {dimensions = array<i32: 1>} : vector<8x8xi32>
    %23 = arith.cmpi sge, %21, %22 : vector<8x8xi32>
    %cst = arith.constant 0.000000e+00 : f32
    %cst_5 = arith.constant -1.000000e+30 : f32
    %24 = vector.broadcast %cst : f32 to vector<8x8xf32>
    %25 = vector.broadcast %cst_5 : f32 to vector<8x8xf32>
    %26 = arith.select %23, %24, %25 : vector<8x8xi1>, vector<8x8xf32>
    %cst_6 = arith.constant dense<0.000000e+00> : vector<16xf32>
    %27 = vector.multi_reduction <add>, %3, %cst_6 [1] : vector<16x128xf32> to vector<16xf32>
    %28 = vector.shape_cast %27 : vector<16xf32> to vector<16x1xf32>
    %cst_7 = arith.constant 3.125000e-02 : f32
    %29 = vector.broadcast %cst_7 : f32 to vector<16x1xf32>
    %30 = arith.mulf %28, %29 : vector<16x1xf32>
    %31 = vector.broadcast %30 : vector<16x1xf32> to vector<16x128xf32>
    %32 = arith.subf %3, %31 : vector<16x128xf32>
    %33 = vector.broadcast %8 : vector<1x128xf32> to vector<16x128xf32>
    %34 = arith.mulf %32, %33 : vector<16x128xf32>
    %35 = arith.mulf %34, %34 : vector<16x128xf32>
    %cst_8 = arith.constant dense<0.000000e+00> : vector<16xf32>
    %36 = vector.multi_reduction <add>, %35, %cst_8 [1] : vector<16x128xf32> to vector<16xf32>
    %37 = vector.shape_cast %36 : vector<16xf32> to vector<16x1xf32>
    %cst_9 = arith.constant 3.125000e-02 : f32
    %38 = vector.broadcast %cst_9 : f32 to vector<16x1xf32>
    %39 = arith.mulf %37, %38 : vector<16x1xf32>
    %cst_10 = arith.constant 9.99999974E-6 : f32
    %40 = vector.broadcast %cst_10 : f32 to vector<16x1xf32>
    %41 = arith.addf %39, %40 : vector<16x1xf32>
    %42 = math.rsqrt %41 : vector<16x1xf32>
    %43 = vector.broadcast %42 : vector<16x1xf32> to vector<16x128xf32>
    %44 = arith.mulf %34, %43 : vector<16x128xf32>
    %45 = vector.broadcast %11 : vector<1x128xf32> to vector<16x128xf32>
    %46 = arith.mulf %44, %45 : vector<16x128xf32>
    %47 = vector.broadcast %12 : vector<1x128xf32> to vector<16x128xf32>
    %48 = arith.addf %46, %47 : vector<16x128xf32>
    %49 = arith.truncf %48 : vector<16x128xf32> to vector<16x128xbf16>
    %cst_11 = arith.constant 0.000000e+00 : f32
    %50 = vector.broadcast %cst_11 : f32 to vector<16x128xf32>
    %51 = vector.extract_strided_slice %10 {offsets = [4, 0], sizes = [1, 128], strides = [1, 1]} : vector<13x256xf32> to vector<1x128xf32>
    %52 = vector.extract_strided_slice %10 {offsets = [5, 0], sizes = [1, 128], strides = [1, 1]} : vector<13x256xf32> to vector<1x128xf32>
    %53 = vector.extract_strided_slice %10 {offsets = [6, 0], sizes = [1, 128], strides = [1, 1]} : vector<13x256xf32> to vector<1x128xf32>
    %c0_12 = arith.constant 0 : index
    %c0_13 = arith.constant 0 : index
    %c0_14 = arith.constant 0 : index
    %c0_15 = arith.constant 0 : index
    %c0_16 = arith.constant 0 : index
    %54 = vector.load %arg3[%c0_12, %c0_13, %c0_14, %c0_15, %c0_16] : memref<1x3x2x128x128xbf16, #tpu.memory_space<vmem>>, vector<1x1x1x128x128xbf16>
    %55 = vector.shape_cast %54 : vector<1x1x1x128x128xbf16> to vector<128x128xbf16>
    %cst_17 = arith.constant dense<0.000000e+00> : vector<16x128xf32>
    %56 = tpu.matmul %49, %55, %cst_17 {dimension_numbers = #tpu.dot_dimension_numbers<[1], [0], [0], [1], [0, 0, 1, 1], [], []>} : vector<16x128xbf16>, vector<128x128xbf16>, vector<16x128xf32> -> vector<16x128xf32>
    %57 = vector.broadcast %51 : vector<1x128xf32> to vector<16x128xf32>
    %58 = arith.addf %56, %57 : vector<16x128xf32>
    %c0_18 = arith.constant 0 : index
    %c1 = arith.constant 1 : index
    %c0_19 = arith.constant 0 : index
    %c0_20 = arith.constant 0 : index
    %c0_21 = arith.constant 0 : index
    %59 = vector.load %arg3[%c0_18, %c1, %c0_19, %c0_20, %c0_21] : memref<1x3x2x128x128xbf16, #tpu.memory_space<vmem>>, vector<1x1x1x128x128xbf16>
    %60 = vector.shape_cast %59 : vector<1x1x1x128x128xbf16> to vector<128x128xbf16>
    %cst_22 = arith.constant dense<0.000000e+00> : vector<16x128xf32>
    %61 = tpu.matmul %49, %60, %cst_22 {dimension_numbers = #tpu.dot_dimension_numbers<[1], [0], [0], [1], [0, 0, 1, 1], [], []>} : vector<16x128xbf16>, vector<128x128xbf16>, vector<16x128xf32> -> vector<16x128xf32>
    %62 = vector.broadcast %52 : vector<1x128xf32> to vector<16x128xf32>
    %63 = arith.addf %61, %62 : vector<16x128xf32>
    %c0_23 = arith.constant 0 : index
    %c2 = arith.constant 2 : index
    %c0_24 = arith.constant 0 : index
    %c0_25 = arith.constant 0 : index
    %c0_26 = arith.constant 0 : index
    %64 = vector.load %arg3[%c0_23, %c2, %c0_24, %c0_25, %c0_26] : memref<1x3x2x128x128xbf16, #tpu.memory_space<vmem>>, vector<1x1x1x128x128xbf16>
    %65 = vector.shape_cast %64 : vector<1x1x1x128x128xbf16> to vector<128x128xbf16>
    %cst_27 = arith.constant dense<0.000000e+00> : vector<16x128xf32>
    %66 = tpu.matmul %49, %65, %cst_27 {dimension_numbers = #tpu.dot_dimension_numbers<[1], [0], [0], [1], [0, 0, 1, 1], [], []>} : vector<16x128xbf16>, vector<128x128xbf16>, vector<16x128xf32> -> vector<16x128xf32>
    %67 = vector.broadcast %53 : vector<1x128xf32> to vector<16x128xf32>
    %68 = arith.addf %66, %67 : vector<16x128xf32>
    %69 = vector.shape_cast %58 : vector<16x128xf32> to vector<2x8x128xf32>
    %70 = arith.truncf %69 : vector<2x8x128xf32> to vector<2x8x128xbf16>
    %71 = vector.shape_cast %63 : vector<16x128xf32> to vector<2x8x128xf32>
    %72 = arith.truncf %71 : vector<2x8x128xf32> to vector<2x8x128xbf16>
    %73 = vector.shape_cast %68 : vector<16x128xf32> to vector<2x8x128xf32>
    %74 = arith.truncf %73 : vector<2x8x128xf32> to vector<2x8x128xbf16>
    "tpu.trace_start"() <{level = 10 : i32, message = "bqd,bkd->bqk"}> : () -> ()
    %cst_28 = arith.constant dense<0.000000e+00> : vector<2x8x8xf32>
    %75 = tpu.matmul %70, %72, %cst_28 {dimension_numbers = #tpu.dot_dimension_numbers<[2], [2], [1], [1], [0, 0, 0, 1, 1, 1], [0], [0]>} : vector<2x8x128xbf16>, vector<2x8x128xbf16>, vector<2x8x8xf32> -> vector<2x8x8xf32>
    "tpu.trace_stop"() : () -> ()
    %cst_29 = arith.constant 2.500000e-01 : f32
    %76 = vector.broadcast %cst_29 : f32 to vector<2x8x8xf32>
    %77 = arith.mulf %75, %76 : vector<2x8x8xf32>
    %78 = vector.shape_cast %26 : vector<8x8xf32> to vector<1x8x8xf32>
    %79 = vector.broadcast %78 : vector<1x8x8xf32> to vector<2x8x8xf32>
    %80 = arith.addf %77, %79 : vector<2x8x8xf32>
    %cst_30 = arith.constant dense<0xFF800000> : vector<2x8xf32>
    %81 = vector.multi_reduction <maximumf>, %80, %cst_30 [2] : vector<2x8x8xf32> to vector<2x8xf32>
    %82 = vector.shape_cast %81 : vector<2x8xf32> to vector<2x8x1xf32>
    %83 = vector.broadcast %82 : vector<2x8x1xf32> to vector<2x8x8xf32>
    %84 = arith.subf %80, %83 : vector<2x8x8xf32>
    %85 = math.exp %84 : vector<2x8x8xf32>
    %cst_31 = arith.constant dense<0.000000e+00> : vector<2x8xf32>
    %86 = vector.multi_reduction <add>, %85, %cst_31 [2] : vector<2x8x8xf32> to vector<2x8xf32>
    %87 = vector.shape_cast %86 : vector<2x8xf32> to vector<2x8x1xf32>
    %88 = vector.broadcast %87 : vector<2x8x1xf32> to vector<2x8x8xf32>
    %89 = arith.divf %85, %88 : vector<2x8x8xf32>
    %90 = arith.truncf %89 : vector<2x8x8xf32> to vector<2x8x8xbf16>
    "tpu.trace_start"() <{level = 10 : i32, message = "bqk,bkd->bqd"}> : () -> ()
    %cst_32 = arith.constant dense<0.000000e+00> : vector<2x8x128xf32>
    %91 = tpu.matmul %90, %74, %cst_32 {dimension_numbers = #tpu.dot_dimension_numbers<[2], [1], [1], [2], [0, 0, 0, 1, 1, 2], [0], [0]>} : vector<2x8x8xbf16>, vector<2x8x128xbf16>, vector<2x8x128xf32> -> vector<2x8x128xf32>
    "tpu.trace_stop"() : () -> ()
    %92 = vector.shape_cast %91 : vector<2x8x128xf32> to vector<16x128xf32>
    %93 = arith.truncf %92 : vector<16x128xf32> to vector<16x128xbf16>
    %c0_33 = arith.constant 0 : index
    %c0_34 = arith.constant 0 : index
    %c0_35 = arith.constant 0 : index
    %c0_36 = arith.constant 0 : index
    %94 = vector.load %arg4[%c0_33, %c0_34, %c0_35, %c0_36] : memref<1x2x128x128xbf16, #tpu.memory_space<vmem>>, vector<1x1x128x128xbf16>
    %95 = vector.shape_cast %94 : vector<1x1x128x128xbf16> to vector<128x128xbf16>
    %cst_37 = arith.constant dense<0.000000e+00> : vector<16x128xf32>
    %96 = tpu.matmul %93, %95, %cst_37 {dimension_numbers = #tpu.dot_dimension_numbers<[1], [0], [0], [1], [0, 0, 1, 1], [], []>} : vector<16x128xbf16>, vector<128x128xbf16>, vector<16x128xf32> -> vector<16x128xf32>
    %97 = arith.addf %50, %96 : vector<16x128xf32>
    %98 = vector.extract_strided_slice %10 {offsets = [4, 128], sizes = [1, 128], strides = [1, 1]} : vector<13x256xf32> to vector<1x128xf32>
    %99 = vector.extract_strided_slice %10 {offsets = [5, 128], sizes = [1, 128], strides = [1, 1]} : vector<13x256xf32> to vector<1x128xf32>
    %100 = vector.extract_strided_slice %10 {offsets = [6, 128], sizes = [1, 128], strides = [1, 1]} : vector<13x256xf32> to vector<1x128xf32>
    %c0_38 = arith.constant 0 : index
    %c0_39 = arith.constant 0 : index
    %c1_40 = arith.constant 1 : index
    %c0_41 = arith.constant 0 : index
    %c0_42 = arith.constant 0 : index
    %101 = vector.load %arg3[%c0_38, %c0_39, %c1_40, %c0_41, %c0_42] : memref<1x3x2x128x128xbf16, #tpu.memory_space<vmem>>, vector<1x1x1x128x128xbf16>
    %102 = vector.shape_cast %101 : vector<1x1x1x128x128xbf16> to vector<128x128xbf16>
    %cst_43 = arith.constant dense<0.000000e+00> : vector<16x128xf32>
    %103 = tpu.matmul %49, %102, %cst_43 {dimension_numbers = #tpu.dot_dimension_numbers<[1], [0], [0], [1], [0, 0, 1, 1], [], []>} : vector<16x128xbf16>, vector<128x128xbf16>, vector<16x128xf32> -> vector<16x128xf32>
    %104 = vector.broadcast %98 : vector<1x128xf32> to vector<16x128xf32>
    %105 = arith.addf %103, %104 : vector<16x128xf32>
    %c0_44 = arith.constant 0 : index
    %c1_45 = arith.constant 1 : index
    %c1_46 = arith.constant 1 : index
    %c0_47 = arith.constant 0 : index
    %c0_48 = arith.constant 0 : index
    %106 = vector.load %arg3[%c0_44, %c1_45, %c1_46, %c0_47, %c0_48] : memref<1x3x2x128x128xbf16, #tpu.memory_space<vmem>>, vector<1x1x1x128x128xbf16>
    %107 = vector.shape_cast %106 : vector<1x1x1x128x128xbf16> to vector<128x128xbf16>
    %cst_49 = arith.constant dense<0.000000e+00> : vector<16x128xf32>
    %108 = tpu.matmul %49, %107, %cst_49 {dimension_numbers = #tpu.dot_dimension_numbers<[1], [0], [0], [1], [0, 0, 1, 1], [], []>} : vector<16x128xbf16>, vector<128x128xbf16>, vector<16x128xf32> -> vector<16x128xf32>
    %109 = vector.broadcast %99 : vector<1x128xf32> to vector<16x128xf32>
    %110 = arith.addf %108, %109 : vector<16x128xf32>
    %c0_50 = arith.constant 0 : index
    %c2_51 = arith.constant 2 : index
    %c1_52 = arith.constant 1 : index
    %c0_53 = arith.constant 0 : index
    %c0_54 = arith.constant 0 : index
    %111 = vector.load %arg3[%c0_50, %c2_51, %c1_52, %c0_53, %c0_54] : memref<1x3x2x128x128xbf16, #tpu.memory_space<vmem>>, vector<1x1x1x128x128xbf16>
    %112 = vector.shape_cast %111 : vector<1x1x1x128x128xbf16> to vector<128x128xbf16>
    %cst_55 = arith.constant dense<0.000000e+00> : vector<16x128xf32>
    %113 = tpu.matmul %49, %112, %cst_55 {dimension_numbers = #tpu.dot_dimension_numbers<[1], [0], [0], [1], [0, 0, 1, 1], [], []>} : vector<16x128xbf16>, vector<128x128xbf16>, vector<16x128xf32> -> vector<16x128xf32>
    %114 = vector.broadcast %100 : vector<1x128xf32> to vector<16x128xf32>
    %115 = arith.addf %113, %114 : vector<16x128xf32>
    %116 = vector.shape_cast %105 : vector<16x128xf32> to vector<2x8x128xf32>
    %117 = arith.truncf %116 : vector<2x8x128xf32> to vector<2x8x128xbf16>
    %118 = vector.shape_cast %110 : vector<16x128xf32> to vector<2x8x128xf32>
    %119 = arith.truncf %118 : vector<2x8x128xf32> to vector<2x8x128xbf16>
    %120 = vector.shape_cast %115 : vector<16x128xf32> to vector<2x8x128xf32>
    %121 = arith.truncf %120 : vector<2x8x128xf32> to vector<2x8x128xbf16>
    "tpu.trace_start"() <{level = 10 : i32, message = "bqd,bkd->bqk"}> : () -> ()
    %cst_56 = arith.constant dense<0.000000e+00> : vector<2x8x8xf32>
    %122 = tpu.matmul %117, %119, %cst_56 {dimension_numbers = #tpu.dot_dimension_numbers<[2], [2], [1], [1], [0, 0, 0, 1, 1, 1], [0], [0]>} : vector<2x8x128xbf16>, vector<2x8x128xbf16>, vector<2x8x8xf32> -> vector<2x8x8xf32>
    "tpu.trace_stop"() : () -> ()
    %cst_57 = arith.constant 2.500000e-01 : f32
    %123 = vector.broadcast %cst_57 : f32 to vector<2x8x8xf32>
    %124 = arith.mulf %122, %123 : vector<2x8x8xf32>
    %125 = vector.shape_cast %26 : vector<8x8xf32> to vector<1x8x8xf32>
    %126 = vector.broadcast %125 : vector<1x8x8xf32> to vector<2x8x8xf32>
    %127 = arith.addf %124, %126 : vector<2x8x8xf32>
    %cst_58 = arith.constant dense<0xFF800000> : vector<2x8xf32>
    %128 = vector.multi_reduction <maximumf>, %127, %cst_58 [2] : vector<2x8x8xf32> to vector<2x8xf32>
    %129 = vector.shape_cast %128 : vector<2x8xf32> to vector<2x8x1xf32>
    %130 = vector.broadcast %129 : vector<2x8x1xf32> to vector<2x8x8xf32>
    %131 = arith.subf %127, %130 : vector<2x8x8xf32>
    %132 = math.exp %131 : vector<2x8x8xf32>
    %cst_59 = arith.constant dense<0.000000e+00> : vector<2x8xf32>
    %133 = vector.multi_reduction <add>, %132, %cst_59 [2] : vector<2x8x8xf32> to vector<2x8xf32>
    %134 = vector.shape_cast %133 : vector<2x8xf32> to vector<2x8x1xf32>
    %135 = vector.broadcast %134 : vector<2x8x1xf32> to vector<2x8x8xf32>
    %136 = arith.divf %132, %135 : vector<2x8x8xf32>
    %137 = arith.truncf %136 : vector<2x8x8xf32> to vector<2x8x8xbf16>
    "tpu.trace_start"() <{level = 10 : i32, message = "bqk,bkd->bqd"}> : () -> ()
    %cst_60 = arith.constant dense<0.000000e+00> : vector<2x8x128xf32>
    %138 = tpu.matmul %137, %121, %cst_60 {dimension_numbers = #tpu.dot_dimension_numbers<[2], [1], [1], [2], [0, 0, 0, 1, 1, 2], [0], [0]>} : vector<2x8x8xbf16>, vector<2x8x128xbf16>, vector<2x8x128xf32> -> vector<2x8x128xf32>
    "tpu.trace_stop"() : () -> ()
    %139 = vector.shape_cast %138 : vector<2x8x128xf32> to vector<16x128xf32>
    %140 = arith.truncf %139 : vector<16x128xf32> to vector<16x128xbf16>
    %c0_61 = arith.constant 0 : index
    %c1_62 = arith.constant 1 : index
    %c0_63 = arith.constant 0 : index
    %c0_64 = arith.constant 0 : index
    %141 = vector.load %arg4[%c0_61, %c1_62, %c0_63, %c0_64] : memref<1x2x128x128xbf16, #tpu.memory_space<vmem>>, vector<1x1x128x128xbf16>
    %142 = vector.shape_cast %141 : vector<1x1x128x128xbf16> to vector<128x128xbf16>
    %cst_65 = arith.constant dense<0.000000e+00> : vector<16x128xf32>
    %143 = tpu.matmul %140, %142, %cst_65 {dimension_numbers = #tpu.dot_dimension_numbers<[1], [0], [0], [1], [0, 0, 1, 1], [], []>} : vector<16x128xbf16>, vector<128x128xbf16>, vector<16x128xf32> -> vector<16x128xf32>
    %144 = arith.addf %97, %143 : vector<16x128xf32>
    %145 = vector.broadcast %15 : vector<1x128xf32> to vector<16x128xf32>
    %146 = arith.addf %144, %145 : vector<16x128xf32>
    %147 = vector.broadcast %19 : vector<1x128xf32> to vector<16x128xf32>
    %148 = arith.mulf %147, %146 : vector<16x128xf32>
    %149 = arith.addf %3, %148 : vector<16x128xf32>
    %cst_66 = arith.constant dense<0.000000e+00> : vector<16xf32>
    %150 = vector.multi_reduction <add>, %149, %cst_66 [1] : vector<16x128xf32> to vector<16xf32>
    %151 = vector.shape_cast %150 : vector<16xf32> to vector<16x1xf32>
    %cst_67 = arith.constant 3.125000e-02 : f32
    %152 = vector.broadcast %cst_67 : f32 to vector<16x1xf32>
    %153 = arith.mulf %151, %152 : vector<16x1xf32>
    %154 = vector.broadcast %153 : vector<16x1xf32> to vector<16x128xf32>
    %155 = arith.subf %149, %154 : vector<16x128xf32>
    %156 = vector.broadcast %8 : vector<1x128xf32> to vector<16x128xf32>
    %157 = arith.mulf %155, %156 : vector<16x128xf32>
    %158 = arith.mulf %157, %157 : vector<16x128xf32>
    %cst_68 = arith.constant dense<0.000000e+00> : vector<16xf32>
    %159 = vector.multi_reduction <add>, %158, %cst_68 [1] : vector<16x128xf32> to vector<16xf32>
    %160 = vector.shape_cast %159 : vector<16xf32> to vector<16x1xf32>
    %cst_69 = arith.constant 3.125000e-02 : f32
    %161 = vector.broadcast %cst_69 : f32 to vector<16x1xf32>
    %162 = arith.mulf %160, %161 : vector<16x1xf32>
    %cst_70 = arith.constant 9.99999974E-6 : f32
    %163 = vector.broadcast %cst_70 : f32 to vector<16x1xf32>
    %164 = arith.addf %162, %163 : vector<16x1xf32>
    %165 = math.rsqrt %164 : vector<16x1xf32>
    %166 = vector.broadcast %165 : vector<16x1xf32> to vector<16x128xf32>
    %167 = arith.mulf %157, %166 : vector<16x128xf32>
    %168 = vector.broadcast %13 : vector<1x128xf32> to vector<16x128xf32>
    %169 = arith.mulf %167, %168 : vector<16x128xf32>
    %170 = vector.broadcast %14 : vector<1x128xf32> to vector<16x128xf32>
    %171 = arith.addf %169, %170 : vector<16x128xf32>
    %172 = arith.truncf %171 : vector<16x128xf32> to vector<16x128xbf16>
    %c0_71 = arith.constant 0 : index
    %c0_72 = arith.constant 0 : index
    %c0_73 = arith.constant 0 : index
    %173 = vector.load %arg5[%c0_71, %c0_72, %c0_73] : memref<1x128x128xbf16, #tpu.memory_space<vmem>>, vector<1x128x128xbf16>
    %174 = vector.shape_cast %173 : vector<1x128x128xbf16> to vector<128x128xbf16>
    %cst_74 = arith.constant dense<0.000000e+00> : vector<16x128xf32>
    %175 = tpu.matmul %172, %174, %cst_74 {dimension_numbers = #tpu.dot_dimension_numbers<[1], [0], [0], [1], [0, 0, 1, 1], [], []>} : vector<16x128xbf16>, vector<128x128xbf16>, vector<16x128xf32> -> vector<16x128xf32>
    %176 = vector.broadcast %16 : vector<1x128xf32> to vector<16x128xf32>
    %177 = arith.addf %175, %176 : vector<16x128xf32>
    %cst_75 = arith.constant 5.000000e-01 : f32
    %178 = vector.broadcast %cst_75 : f32 to vector<16x128xf32>
    %179 = arith.mulf %178, %177 : vector<16x128xf32>
    %cst_76 = arith.constant 0.707106769 : f32
    %180 = vector.broadcast %cst_76 : f32 to vector<16x128xf32>
    %181 = arith.mulf %177, %180 : vector<16x128xf32>
    %182 = math.absf %181 : vector<16x128xf32>
    %cst_77 = arith.constant 0.327591091 : f32
    %183 = vector.broadcast %cst_77 : f32 to vector<16x128xf32>
    %184 = arith.mulf %183, %182 : vector<16x128xf32>
    %cst_78 = arith.constant 1.000000e+00 : f32
    %185 = vector.broadcast %cst_78 : f32 to vector<16x128xf32>
    %186 = arith.addf %185, %184 : vector<16x128xf32>
    %cst_79 = arith.constant 1.000000e+00 : f32
    %187 = vector.broadcast %cst_79 : f32 to vector<16x128xf32>
    %188 = arith.divf %187, %186 : vector<16x128xf32>
    %cst_80 = arith.constant 1.06140542 : f32
    %189 = vector.broadcast %cst_80 : f32 to vector<16x128xf32>
    %190 = arith.mulf %189, %188 : vector<16x128xf32>
    %cst_81 = arith.constant -1.45315206 : f32
    %191 = vector.broadcast %cst_81 : f32 to vector<16x128xf32>
    %192 = arith.addf %190, %191 : vector<16x128xf32>
    %193 = arith.mulf %192, %188 : vector<16x128xf32>
    %cst_82 = arith.constant 1.42141378 : f32
    %194 = vector.broadcast %cst_82 : f32 to vector<16x128xf32>
    %195 = arith.addf %193, %194 : vector<16x128xf32>
    %196 = arith.mulf %195, %188 : vector<16x128xf32>
    %cst_83 = arith.constant -0.284496725 : f32
    %197 = vector.broadcast %cst_83 : f32 to vector<16x128xf32>
    %198 = arith.addf %196, %197 : vector<16x128xf32>
    %199 = arith.mulf %198, %188 : vector<16x128xf32>
    %cst_84 = arith.constant 0.254829586 : f32
    %200 = vector.broadcast %cst_84 : f32 to vector<16x128xf32>
    %201 = arith.addf %199, %200 : vector<16x128xf32>
    %202 = arith.mulf %201, %188 : vector<16x128xf32>
    %cst_85 = arith.constant 0.000000e+00 : f32
    %203 = vector.broadcast %cst_85 : f32 to vector<16x128xf32>
    %204 = arith.subf %203, %182 : vector<16x128xf32>
    %205 = arith.mulf %204, %182 : vector<16x128xf32>
    %206 = math.exp %205 : vector<16x128xf32>
    %207 = arith.mulf %202, %206 : vector<16x128xf32>
    %cst_86 = arith.constant 1.000000e+00 : f32
    %208 = vector.broadcast %cst_86 : f32 to vector<16x128xf32>
    %209 = arith.subf %208, %207 : vector<16x128xf32>
    %cst_87 = arith.constant 0.000000e+00 : f32
    %210 = vector.broadcast %cst_87 : f32 to vector<16x128xf32>
    %211 = arith.cmpf oge, %181, %210 : vector<16x128xf32>
    %cst_88 = arith.constant 0.000000e+00 : f32
    %212 = vector.broadcast %cst_88 : f32 to vector<16x128xf32>
    %213 = arith.subf %212, %209 : vector<16x128xf32>
    %214 = arith.select %211, %209, %213 : vector<16x128xi1>, vector<16x128xf32>
    %cst_89 = arith.constant 1.000000e+00 : f32
    %215 = vector.broadcast %cst_89 : f32 to vector<16x128xf32>
    %216 = arith.addf %215, %214 : vector<16x128xf32>
    %217 = arith.mulf %179, %216 : vector<16x128xf32>
    %218 = arith.truncf %217 : vector<16x128xf32> to vector<16x128xbf16>
    %c0_90 = arith.constant 0 : index
    %c0_91 = arith.constant 0 : index
    %c0_92 = arith.constant 0 : index
    %219 = vector.load %arg6[%c0_90, %c0_91, %c0_92] : memref<1x128x128xbf16, #tpu.memory_space<vmem>>, vector<1x128x128xbf16>
    %220 = vector.shape_cast %219 : vector<1x128x128xbf16> to vector<128x128xbf16>
    %cst_93 = arith.constant dense<0.000000e+00> : vector<16x128xf32>
    %221 = tpu.matmul %218, %220, %cst_93 {dimension_numbers = #tpu.dot_dimension_numbers<[1], [0], [0], [1], [0, 0, 1, 1], [], []>} : vector<16x128xbf16>, vector<128x128xbf16>, vector<16x128xf32> -> vector<16x128xf32>
    %222 = vector.broadcast %17 : vector<1x128xf32> to vector<16x128xf32>
    %223 = arith.addf %221, %222 : vector<16x128xf32>
    %cst_94 = arith.constant 5.000000e-01 : f32
    %224 = vector.broadcast %cst_94 : f32 to vector<16x128xf32>
    %225 = arith.mulf %224, %223 : vector<16x128xf32>
    %cst_95 = arith.constant 0.707106769 : f32
    %226 = vector.broadcast %cst_95 : f32 to vector<16x128xf32>
    %227 = arith.mulf %223, %226 : vector<16x128xf32>
    %228 = math.absf %227 : vector<16x128xf32>
    %cst_96 = arith.constant 0.327591091 : f32
    %229 = vector.broadcast %cst_96 : f32 to vector<16x128xf32>
    %230 = arith.mulf %229, %228 : vector<16x128xf32>
    %cst_97 = arith.constant 1.000000e+00 : f32
    %231 = vector.broadcast %cst_97 : f32 to vector<16x128xf32>
    %232 = arith.addf %231, %230 : vector<16x128xf32>
    %cst_98 = arith.constant 1.000000e+00 : f32
    %233 = vector.broadcast %cst_98 : f32 to vector<16x128xf32>
    %234 = arith.divf %233, %232 : vector<16x128xf32>
    %cst_99 = arith.constant 1.06140542 : f32
    %235 = vector.broadcast %cst_99 : f32 to vector<16x128xf32>
    %236 = arith.mulf %235, %234 : vector<16x128xf32>
    %cst_100 = arith.constant -1.45315206 : f32
    %237 = vector.broadcast %cst_100 : f32 to vector<16x128xf32>
    %238 = arith.addf %236, %237 : vector<16x128xf32>
    %239 = arith.mulf %238, %234 : vector<16x128xf32>
    %cst_101 = arith.constant 1.42141378 : f32
    %240 = vector.broadcast %cst_101 : f32 to vector<16x128xf32>
    %241 = arith.addf %239, %240 : vector<16x128xf32>
    %242 = arith.mulf %241, %234 : vector<16x128xf32>
    %cst_102 = arith.constant -0.284496725 : f32
    %243 = vector.broadcast %cst_102 : f32 to vector<16x128xf32>
    %244 = arith.addf %242, %243 : vector<16x128xf32>
    %245 = arith.mulf %244, %234 : vector<16x128xf32>
    %cst_103 = arith.constant 0.254829586 : f32
    %246 = vector.broadcast %cst_103 : f32 to vector<16x128xf32>
    %247 = arith.addf %245, %246 : vector<16x128xf32>
    %248 = arith.mulf %247, %234 : vector<16x128xf32>
    %cst_104 = arith.constant 0.000000e+00 : f32
    %249 = vector.broadcast %cst_104 : f32 to vector<16x128xf32>
    %250 = arith.subf %249, %228 : vector<16x128xf32>
    %251 = arith.mulf %250, %228 : vector<16x128xf32>
    %252 = math.exp %251 : vector<16x128xf32>
    %253 = arith.mulf %248, %252 : vector<16x128xf32>
    %cst_105 = arith.constant 1.000000e+00 : f32
    %254 = vector.broadcast %cst_105 : f32 to vector<16x128xf32>
    %255 = arith.subf %254, %253 : vector<16x128xf32>
    %cst_106 = arith.constant 0.000000e+00 : f32
    %256 = vector.broadcast %cst_106 : f32 to vector<16x128xf32>
    %257 = arith.cmpf oge, %227, %256 : vector<16x128xf32>
    %cst_107 = arith.constant 0.000000e+00 : f32
    %258 = vector.broadcast %cst_107 : f32 to vector<16x128xf32>
    %259 = arith.subf %258, %255 : vector<16x128xf32>
    %260 = arith.select %257, %255, %259 : vector<16x128xi1>, vector<16x128xf32>
    %cst_108 = arith.constant 1.000000e+00 : f32
    %261 = vector.broadcast %cst_108 : f32 to vector<16x128xf32>
    %262 = arith.addf %261, %260 : vector<16x128xf32>
    %263 = arith.mulf %225, %262 : vector<16x128xf32>
    %264 = arith.truncf %263 : vector<16x128xf32> to vector<16x128xbf16>
    %c0_109 = arith.constant 0 : index
    %c0_110 = arith.constant 0 : index
    %c0_111 = arith.constant 0 : index
    %265 = vector.load %arg7[%c0_109, %c0_110, %c0_111] : memref<1x128x128xbf16, #tpu.memory_space<vmem>>, vector<1x128x128xbf16>
    %266 = vector.shape_cast %265 : vector<1x128x128xbf16> to vector<128x128xbf16>
    %cst_112 = arith.constant dense<0.000000e+00> : vector<16x128xf32>
    %267 = tpu.matmul %264, %266, %cst_112 {dimension_numbers = #tpu.dot_dimension_numbers<[1], [0], [0], [1], [0, 0, 1, 1], [], []>} : vector<16x128xbf16>, vector<128x128xbf16>, vector<16x128xf32> -> vector<16x128xf32>
    %268 = vector.broadcast %18 : vector<1x128xf32> to vector<16x128xf32>
    %269 = arith.addf %267, %268 : vector<16x128xf32>
    %270 = vector.broadcast %20 : vector<1x128xf32> to vector<16x128xf32>
    %271 = arith.mulf %270, %269 : vector<16x128xf32>
    %272 = arith.addf %149, %271 : vector<16x128xf32>
    %c0_113 = arith.constant 0 : index
    %c0_114 = arith.constant 0 : index
    %273 = vector.load %arg9[%c0_113, %c0_114] : memref<16x128xf32, #tpu.memory_space<vmem>>, vector<16x128xf32>
    tpu.vector_store %arg9[%c0_113, %c0_114], %272 {strides = array<i32>} : memref<16x128xf32, #tpu.memory_space<vmem>>, vector<16x128xf32>,
    %c1_i32 = arith.constant 1 : i32
    %274 = arith.cmpi eq, %arg0, %c1_i32 : i32
    %275 = arith.extui %274 : i1 to i32
    %c0_i32_115 = arith.constant 0 : i32
    %276 = arith.cmpi ne, %275, %c0_i32_115 : i32
    scf.if %276 {
      %c0_116 = arith.constant 0 : index
      %c0_117 = arith.constant 0 : index
      %277 = vector.load %arg8[%c0_116, %c0_117] : memref<2x128xf32, #tpu.memory_space<vmem>>, vector<2x128xf32>
      %278 = vector.extract_strided_slice %277 {offsets = [0, 0], sizes = [1, 128], strides = [1, 1]} : vector<2x128xf32> to vector<1x128xf32>
      %279 = vector.extract_strided_slice %277 {offsets = [1, 0], sizes = [1, 128], strides = [1, 1]} : vector<2x128xf32> to vector<1x128xf32>
      %cst_118 = arith.constant dense<0.000000e+00> : vector<16xf32>
      %280 = vector.multi_reduction <add>, %272, %cst_118 [1] : vector<16x128xf32> to vector<16xf32>
      %281 = vector.shape_cast %280 : vector<16xf32> to vector<16x1xf32>
      %cst_119 = arith.constant 3.125000e-02 : f32
      %282 = vector.broadcast %cst_119 : f32 to vector<16x1xf32>
      %283 = arith.mulf %281, %282 : vector<16x1xf32>
      %284 = vector.broadcast %283 : vector<16x1xf32> to vector<16x128xf32>
      %285 = arith.subf %272, %284 : vector<16x128xf32>
      %286 = vector.broadcast %8 : vector<1x128xf32> to vector<16x128xf32>
      %287 = arith.mulf %285, %286 : vector<16x128xf32>
      %288 = arith.mulf %287, %287 : vector<16x128xf32>
      %cst_120 = arith.constant dense<0.000000e+00> : vector<16xf32>
      %289 = vector.multi_reduction <add>, %288, %cst_120 [1] : vector<16x128xf32> to vector<16xf32>
      %290 = vector.shape_cast %289 : vector<16xf32> to vector<16x1xf32>
      %cst_121 = arith.constant 3.125000e-02 : f32
      %291 = vector.broadcast %cst_121 : f32 to vector<16x1xf32>
      %292 = arith.mulf %290, %291 : vector<16x1xf32>
      %cst_122 = arith.constant 9.99999974E-6 : f32
      %293 = vector.broadcast %cst_122 : f32 to vector<16x1xf32>
      %294 = arith.addf %292, %293 : vector<16x1xf32>
      %295 = math.rsqrt %294 : vector<16x1xf32>
      %296 = vector.broadcast %295 : vector<16x1xf32> to vector<16x128xf32>
      %297 = arith.mulf %287, %296 : vector<16x128xf32>
      %298 = vector.broadcast %278 : vector<1x128xf32> to vector<16x128xf32>
      %299 = arith.mulf %297, %298 : vector<16x128xf32>
      %300 = vector.broadcast %279 : vector<1x128xf32> to vector<16x128xf32>
      %301 = arith.addf %299, %300 : vector<16x128xf32>
      %c0_123 = arith.constant 0 : index
      %c0_124 = arith.constant 0 : index
      %302 = vector.load %arg9[%c0_123, %c0_124] : memref<16x128xf32, #tpu.memory_space<vmem>>, vector<16x128xf32>
      tpu.vector_store %arg9[%c0_123, %c0_124], %301 {strides = array<i32>} : memref<16x128xf32, #tpu.memory_space<vmem>>, vector<16x128xf32>,
    } else {
    }
    return
  }
  func.func @transform_0(%arg0: i32) -> (i32, i32) {
    %c0_i32 = arith.constant 0 : i32
    %c0_i32_0 = arith.constant 0 : i32
    %c0_i32_1 = arith.constant 0 : i32
    return %c0_i32, %c0_i32_0 : i32, i32
  }
  func.func @transform_1(%arg0: i32) -> (i32, i32, i32) {
    %c0_i32 = arith.constant 0 : i32
    %c0_i32_0 = arith.constant 0 : i32
    %c0_i32_1 = arith.constant 0 : i32
    return %arg0, %c0_i32, %c0_i32_0 : i32, i32, i32
  }
  func.func @transform_2(%arg0: i32) -> (i32, i32, i32, i32, i32) {
    %c0_i32 = arith.constant 0 : i32
    %c0_i32_0 = arith.constant 0 : i32
    %c0_i32_1 = arith.constant 0 : i32
    %c0_i32_2 = arith.constant 0 : i32
    %c0_i32_3 = arith.constant 0 : i32
    return %arg0, %c0_i32, %c0_i32_0, %c0_i32_1, %c0_i32_2 : i32, i32, i32, i32, i32
  }
  func.func @transform_3(%arg0: i32) -> (i32, i32, i32, i32) {
    %c0_i32 = arith.constant 0 : i32
    %c0_i32_0 = arith.constant 0 : i32
    %c0_i32_1 = arith.constant 0 : i32
    %c0_i32_2 = arith.constant 0 : i32
    return %arg0, %c0_i32, %c0_i32_0, %c0_i32_1 : i32, i32, i32, i32
  }
  func.func @transform_4(%arg0: i32) -> (i32, i32, i32) {
    %c0_i32 = arith.constant 0 : i32
    %c0_i32_0 = arith.constant 0 : i32
    %c0_i32_1 = arith.constant 0 : i32
    return %arg0, %c0_i32, %c0_i32_0 : i32, i32, i32
  }
  func.func @transform_5(%arg0: i32) -> (i32, i32, i32) {
    %c0_i32 = arith.constant 0 : i32
    %c0_i32_0 = arith.constant 0 : i32
    %c0_i32_1 = arith.constant 0 : i32
    return %arg0, %c0_i32, %c0_i32_0 : i32, i32, i32
  }
  func.func @transform_6(%arg0: i32) -> (i32, i32, i32) {
    %c0_i32 = arith.constant 0 : i32
    %c0_i32_0 = arith.constant 0 : i32
    %c0_i32_1 = arith.constant 0 : i32
    return %arg0, %c0_i32, %c0_i32_0 : i32, i32, i32
  }
  func.func @transform_7(%arg0: i32) -> (i32, i32) {
    %c0_i32 = arith.constant 0 : i32
    %c0_i32_0 = arith.constant 0 : i32
    %c0_i32_1 = arith.constant 0 : i32
    return %c0_i32, %c0_i32_0 : i32, i32
  }
  func.func @transform_8(%arg0: i32) -> (i32, i32) {
    %c0_i32 = arith.constant 0 : i32
    %c0_i32_0 = arith.constant 0 : i32
    %c0_i32_1 = arith.constant 0 : i32
    return %c0_i32, %c0_i32_0 : i32, i32
  }
}

</mosaic_0001>

<llo_original>
// kernel: _lambda_.3
$region0: #{_lambda_.3}
  #allocation0 [shape = 'u32[]', space=smem, size = 0x4, offset = 0x4, fixed_abs, tag = 'smem constant byte address 0x4 - core index']
  #allocation1 [shape = 'u32[144,128]{1,0:T(1,128)}', space=vmem, size = 0x12000, scoped, tag = 'internal scratch']
  %s0 = inlined_call_operand.vmem [shape: f32[16,128], index: 0, kind: input, shape index: {}]
  %s1 = inlined_call_operand.vmem [shape: bf16[128,128], index: 1, kind: input, shape index: {}]
  %s2 = inlined_call_operand.hbm [shape: f32[16,128], index: 2, kind: output, shape index: {}]
  %s3 = sld [smem:[#allocation0]]
  $region18: #{_lambda_.3} parent=0
    _
  %s5 = ssub.s32 1, %s3
  %s6 = scalar_select 0, %s5, %s3
  $region1: #{_lambda_.3} parent=0
    #allocation2 [shape = 'u8[8192]{0}', space=vmem, size = 0x2000, scoped, tag = 'output window, operand 0, single buffered']
    #allocation3 [shape = 's32[1]{0}', space=sflag, size = 0x4, scoped, tag = 'scoped memory for _lambda_.3']
    %7 = vsyncpa [#allocation3], 0
    // Predicated region
    $region2: #{_lambda_.3} parent=1 // pred_check
      _
    $region3: #{_lambda_.3} parent=1 // pred_check_branch
      %9 = sbr.rel (0) target = $region5
    $region4: #{_lambda_.3} parent=1 // pred_region
      _
    $region5: #{_lambda_.3} parent=1 // pred_fallthru
      _
    // Predicated region
    $region6: #{_lambda_.3} parent=1 // pred_check
      _
    $region7: #{_lambda_.3} parent=1 // pred_check_branch
      %11 = sbr.rel (0) target = $region9
    $region8: #{_lambda_.3} parent=1 // pred_region
      _
    $region9: #{_lambda_.3} parent=1 // pred_fallthru
      _
    %v13 = vld [vmem:[%s0] sm:$0xff]
    %v14 = vld [vmem:[%s0 + $0x8] sm:$0xff]
    %v15 = vpack.c.bf16 %v14, %v13
    %v16 = vld [vmem:[%s1] sm:$0xf]
    %v17 = vld [vmem:[%s1 + $0x4] sm:$0xf]
    %v18 = vld [vmem:[%s1 + $0x8] sm:$0xf]
    %v19 = vld [vmem:[%s1 + $0xc] sm:$0xf]
    %v20 = vld [vmem:[%s1 + $0x10] sm:$0xf]
    %v21 = vld [vmem:[%s1 + $0x14] sm:$0xf]
    %v22 = vld [vmem:[%s1 + $0x18] sm:$0xf]
    %v23 = vld [vmem:[%s1 + $0x1c] sm:$0xf]
    %v24 = vld [vmem:[%s1 + $0x20] sm:$0xf]
    %v25 = vld [vmem:[%s1 + $0x24] sm:$0xf]
    %v26 = vld [vmem:[%s1 + $0x28] sm:$0xf]
    %v27 = vld [vmem:[%s1 + $0x2c] sm:$0xf]
    %v28 = vld [vmem:[%s1 + $0x30] sm:$0xf]
    %v29 = vld [vmem:[%s1 + $0x34] sm:$0xf]
    %v30 = vld [vmem:[%s1 + $0x38] sm:$0xf]
    %v31 = vld [vmem:[%s1 + $0x3c] sm:$0xf]
    %v48 = vunpack.c.l.b16 %v16
    %v49 = vunpack.c.l.b16 %v17
    %v50 = vunpack.c.l.b16 %v18
    %v51 = vunpack.c.l.b16 %v19
    %v52 = vunpack.c.l.b16 %v20
    %v53 = vunpack.c.l.b16 %v21
    %v54 = vunpack.c.l.b16 %v22
    %v55 = vunpack.c.l.b16 %v23
    %v56 = vunpack.c.l.b16 %v24
    %v57 = vunpack.c.l.b16 %v25
    %v58 = vunpack.c.l.b16 %v26
    %v59 = vunpack.c.l.b16 %v27
    %v60 = vunpack.c.l.b16 %v28
    %v61 = vunpack.c.l.b16 %v29
    %v62 = vunpack.c.l.b16 %v30
    %v63 = vunpack.c.l.b16 %v31
    %v64 = vpack.c.b16 %v49, %v48
    %v65 = vpack.c.b16 %v51, %v50
    %v66 = vpack.c.b16 %v53, %v52
    %v67 = vpack.c.b16 %v55, %v54
    %v68 = vpack.c.b16 %v57, %v56
    %v69 = vpack.c.b16 %v59, %v58
    %v70 = vpack.c.b16 %v61, %v60
    %v71 = vpack.c.b16 %v63, %v62
    %80 = vmatprep.subr.bf16.mxu0 0
    %81 = vmatpush1.bf16.msra.mxu0 %v64
    %82 = vmatprep.subr.bf16.mxu0 0
    %83 = vmatpush1.bf16.msra.mxu0 %v65
    %84 = vmatprep.subr.bf16.mxu0 0
    %85 = vmatpush1.bf16.msra.mxu0 %v66
    %86 = vmatprep.subr.bf16.mxu0 0
    %87 = vmatpush1.bf16.msra.mxu0 %v67
    %88 = vmatprep.subr.bf16.mxu0 0
    %89 = vmatpush1.bf16.msra.mxu0 %v68
    %90 = vmatprep.subr.bf16.mxu0 0
    %91 = vmatpush1.bf16.msra.mxu0 %v69
    %92 = vmatprep.subr.bf16.mxu0 0
    %93 = vmatpush1.bf16.msra.mxu0 %v70
    %94 = vmatprep.subr.bf16.mxu0 0
    %95 = vmatpush1.bf16.msra.mxu0 %v71
    %96 = vmatprep.subr.bf16.mxu0 0
    %97 = vmatpush1.bf16.msra.mxu0 0
    %98 = vmatprep.subr.bf16.mxu0 0
    %99 = vmatpush1.bf16.msra.mxu0 0
    %100 = vmatprep.subr.bf16.mxu0 0
    %101 = vmatpush1.bf16.msra.mxu0 0
    %102 = vmatprep.subr.bf16.mxu0 0
    %103 = vmatpush1.bf16.msra.mxu0 0
    %104 = vmatprep.subr.bf16.mxu0 0
    %105 = vmatpush1.bf16.msra.mxu0 0
    %106 = vmatprep.subr.bf16.mxu0 0
    %107 = vmatpush1.bf16.msra.mxu0 0
    %108 = vmatprep.subr.bf16.mxu0 0
    %109 = vmatpush1.bf16.msra.mxu0 0
    %110 = vmatprep.subr.bf16.mxu0 0
    %111 = vmatpush1.bf16.msra.mxu0 0
    %112 = vmatprep.mubr.bf16.mxu0 0
    %113 = vmatmul.mubr.bf16.gmra.mrb[0].mxu0 %v15
    %v114 = vpop.f32.mrb[0].mxu0
    %v115 = vadd.f32 0.0, %v114
    %v116 = vpop.f32.mrb[0].mxu0
    %v117 = vpop.f32.mrb[0].mxu0
    %v118 = vadd.f32 0.0, %v117
    %v119 = vpop.f32.mrb[0].mxu0
    %120 = vdwg.mxu0
    %121 = vst [vmem:[#allocation2] sm:$0xff] %v115
    %122 = vst [vmem:[#allocation2 + $0x8] sm:$0xff] %v118
    // Predicated region
    $region10: #{_lambda_.3} parent=1 // pred_check
      _
    $region11: #{_lambda_.3} parent=1 // pred_check_branch
      %124 = sbr.rel (0) target = $region13
    $region12: #{_lambda_.3} parent=1 // pred_region
      %s126 = ssub.s32 256, 256
      %127 = vsyncadd [#allocation3], %s126
      %s128 = sshll.u32 [#allocation2], 4
      %s129 = int_to_ptr.vmem [resolvable:$true] %s128
      %134 = dma.vmem_to_hbm [thread:$0]  %s129, 256, %s2, [#allocation3], 128, 128, 8
    $region13: #{_lambda_.3} parent=1 // pred_fallthru
      _
    // Predicated region
    $region14: #{_lambda_.3} parent=1 // pred_check
      _
    $region15: #{_lambda_.3} parent=1 // pred_check_branch
      %136 = sbr.rel (0) target = $region17
    $region16: #{_lambda_.3} parent=1 // pred_region
      %137 = dma.done [#allocation3], 256
    $region17: #{_lambda_.3} parent=1 // pred_fallthru
      _
    %138 = vsyncpa [#allocation3], 1

// kernel: _lambda_.2
$region0: #{_lambda_.2}
  #allocation0 [shape = 'u32[]', space=smem, size = 0x4, offset = 0x4, fixed_abs, tag = 'smem constant byte address 0x4 - core index']
  #allocation1 [shape = 'u32[144,128]{1,0:T(1,128)}', space=vmem, size = 0x12000, scoped, tag = 'internal scratch']
  %s0 = inlined_call_operand.vmem [shape: f32[16,128], index: 0, kind: input, shape index: {}]
  %s1 = inlined_call_operand.hbm [shape: f32[2,13,256], index: 1, kind: input, shape index: {}]
  %s2 = inlined_call_operand.hbm [shape: bf16[2,3,2,128,128], index: 2, kind: input, shape index: {}]
  %s3 = inlined_call_operand.vmem [shape: bf16[2,2,128,128], index: 3, kind: input, shape index: {}]
  %s4 = inlined_call_operand.hbm [shape: bf16[2,128,128], index: 4, kind: input, shape index: {}]
  %s5 = inlined_call_operand.hbm [shape: bf16[2,128,128], index: 5, kind: input, shape index: {}]
  %s6 = inlined_call_operand.hbm [shape: bf16[2,128,128], index: 6, kind: input, shape index: {}]
  %s7 = inlined_call_operand.hbm [shape: f32[2,128], index: 7, kind: input, shape index: {}]
  %s8 = inlined_call_operand.vmem [shape: f32[16,128], index: 8, kind: output, shape index: {}]
  %s9 = sld [smem:[#allocation0]]
  $region97: #{_lambda_.2} parent=0
    _
  %s11 = ssub.s32 1, %s9
  %s12 = scalar_select 0, %s11, %s9
  $region1: #{_lambda_.2} parent=0
    #allocation2 [shape = 'u8[32768]{0}', space=vmem, size = 0x8000, scoped, tag = 'input window, operand 1']
    #allocation3 [shape = 's32[2]{0}', space=sflag, size = 0x8, scoped, tag = 'scoped memory for _lambda_.2']
    #allocation4 [shape = 'u8[393216]{0}', space=vmem, size = 0x60000, scoped, tag = 'input window, operand 2']
    #allocation5 [shape = 's32[2]{0}', space=sflag, size = 0x8, scoped, tag = 'scoped memory for _lambda_.2']
    #allocation6 [shape = 'u8[65536]{0}', space=vmem, size = 0x10000, scoped, tag = 'input window, operand 4']
    #allocation7 [shape = 'u8[65536]{0}', space=vmem, size = 0x10000, scoped, tag = 'input window, operand 5']
    #allocation8 [shape = 's32[2]{0}', space=sflag, size = 0x8, scoped, tag = 'scoped memory for _lambda_.2']
    #allocation9 [shape = 'u8[65536]{0}', space=vmem, size = 0x10000, scoped, tag = 'input window, operand 6']
    #allocation10 [shape = 'u8[1024]{0}', space=vmem, size = 0x400, scoped, tag = 'input window, operand 7, single buffered']
    #allocation11 [shape = 's32[1]{0}', space=sflag, size = 0x4, scoped, tag = 'scoped memory for _lambda_.2']
    %13 = vsyncpa [#allocation3], 0
    %s14 = scalar_lea.sflag [#allocation3], 1
    %15 = vsyncpa %s14, 0
    %16 = vsyncpa [#allocation5], 0
    %s17 = scalar_lea.sflag [#allocation5], 1
    %18 = vsyncpa %s17, 0
    %19 = vsyncpa [#allocation8], 0
    %s20 = scalar_lea.sflag [#allocation8], 1
    %21 = vsyncpa %s20, 0
    %22 = vsyncpa [#allocation11], 0
    loop: start=0, step=1, limit=4
    $region2: #{_lambda_.2} parent=1 // loop_pre_header
      _
    $region3: #{_lambda_.2} parent=1 // loop_header
      %s24 = sphi 0, %s28
      %p25 = scmp.ge.s32.totalorder %s24, 4
      %s32 = sphi 0, %s32
      %s34 = sphi 0, %s32
      %s35 = sphi 0, %s34
      %s49 = sphi 0, %s35
      %s55 = sphi 0, %s57
      %s58 = sphi 0, %s55
      %s59 = sphi 0, %s58
      %s75 = sphi 0, %s59
      %s81 = sphi 0, %s83
      %s84 = sphi 0, %s81
      %s85 = sphi 0, %s84
      %s101 = sphi 0, %s85
      %s107 = sphi 0, %s109
      %s110 = sphi 0, %s107
      %s111 = sphi 0, %s110
      %s127 = sphi 0, %s111
      %s133 = sphi 0, %s135
      %s136 = sphi 0, %s133
      %s137 = sphi 0, %s136
      %s153 = sphi 0, %s137
      %s159 = sphi 0, %s161
      %s162 = sphi 0, %s159
      %s163 = sphi 0, %s162
      %s179 = sphi 0, %s163
      %s185 = sphi 0, %s187
      %s188 = sphi 0, %s185
      %s189 = sphi 0, %s188
      %s205 = sphi 0, %s189
      %s209 = sphi 0, %s209
      %s211 = sphi 0, %s209
      %s212 = sphi 0, %s211
      %s226 = sphi 0, %s212
      %s230 = sphi 0, %s230
      %s232 = sphi 0, %s230
      %s233 = sphi 0, %s232
      %s247 = sphi 0, %s233
    $region4: #{_lambda_.2} parent=1 // loop_header_branch
      %27 = sbr.rel (%p25) target = $region8
    $region5: #{_lambda_.2} parent=1 // loop_body
      %s29 = ssub.s32 %s24, 1
      %s30 = ssub.s32 %s24, 2
      %s31 = sadd.s32 %s24, 1
      %s33 = sadd.s32 %s32, 1
      %p36 = scmp.eq.s32.totalorder %s24, 1
      %p37 = scmp.ne.s32.totalorder %s32, %s34
      %p38 = scmp.eq.s32.totalorder %s24, 0
      %p39 = por %p37, %p38
      %p40 = scmp.ne.s32.totalorder %s32, %s34
      %p41 = scmp.eq.s32.totalorder %s29, 1
      %p42 = por %p40, %p41
      %p43 = scmp.ne.s32.totalorder %s34, %s35
      %p44 = scmp.eq.s32.totalorder %s29, 0
      %p45 = por %p43, %p44
      %p46 = scmp.ne.s32.totalorder %s34, %s35
      %p47 = scmp.eq.s32.totalorder %s30, 1
      %p48 = por %p46, %p47
      %p50 = scmp.ne.s32.totalorder %s35, %s49
      %p51 = scmp.eq.s32.totalorder %s30, 0
      %p52 = por %p50, %p51
      %s53 = ssub.s32 %s24, %s31
      %p54 = scmp.eq.s32.totalorder %s53, 0
      %s56 = sadd.s32 %s55, 1
      %s57 = scalar_select %p54, %s55, %s56
      %p60 = pneg %p54
      %p61 = scmp.eq.s32.totalorder %s24, 1
      %p62 = por %p60, %p61
      %p63 = scmp.ne.s32.totalorder %s55, %s58
      %p64 = scmp.eq.s32.totalorder %s24, 0
      %p65 = por %p63, %p64
      %p66 = scmp.ne.s32.totalorder %s55, %s58
      %p67 = scmp.eq.s32.totalorder %s29, 1
      %p68 = por %p66, %p67
      %p69 = scmp.ne.s32.totalorder %s58, %s59
      %p70 = scmp.eq.s32.totalorder %s29, 0
      %p71 = por %p69, %p70
      %p72 = scmp.ne.s32.totalorder %s58, %s59
      %p73 = scmp.eq.s32.totalorder %s30, 1
      %p74 = por %p72, %p73
      %p76 = scmp.ne.s32.totalorder %s59, %s75
      %p77 = scmp.eq.s32.totalorder %s30, 0
      %p78 = por %p76, %p77
      %s79 = ssub.s32 %s24, %s31
      %p80 = scmp.eq.s32.totalorder %s79, 0
      %s82 = sadd.s32 %s81, 1
      %s83 = scalar_select %p80, %s81, %s82
      %p86 = pneg %p80
      %p87 = scmp.eq.s32.totalorder %s24, 1
      %p88 = por %p86, %p87
      %p89 = scmp.ne.s32.totalorder %s81, %s84
      %p90 = scmp.eq.s32.totalorder %s24, 0
      %p91 = por %p89, %p90
      %p92 = scmp.ne.s32.totalorder %s81, %s84
      %p93 = scmp.eq.s32.totalorder %s29, 1
      %p94 = por %p92, %p93
      %p95 = scmp.ne.s32.totalorder %s84, %s85
      %p96 = scmp.eq.s32.totalorder %s29, 0
      %p97 = por %p95, %p96
      %p98 = scmp.ne.s32.totalorder %s84, %s85
      %p99 = scmp.eq.s32.totalorder %s30, 1
      %p100 = por %p98, %p99
      %p102 = scmp.ne.s32.totalorder %s85, %s101
      %p103 = scmp.eq.s32.totalorder %s30, 0
      %p104 = por %p102, %p103
      %s105 = ssub.s32 %s24, %s31
      %p106 = scmp.eq.s32.totalorder %s105, 0
      %s108 = sadd.s32 %s107, 1
      %s109 = scalar_select %p106, %s107, %s108
      %p112 = pneg %p106
      %p113 = scmp.eq.s32.totalorder %s24, 1
      %p114 = por %p112, %p113
      %p115 = scmp.ne.s32.totalorder %s107, %s110
      %p116 = scmp.eq.s32.totalorder %s24, 0
      %p117 = por %p115, %p116
      %p118 = scmp.ne.s32.totalorder %s107, %s110
      %p119 = scmp.eq.s32.totalorder %s29, 1
      %p120 = por %p118, %p119
      %p121 = scmp.ne.s32.totalorder %s110, %s111
      %p122 = scmp.eq.s32.totalorder %s29, 0
      %p123 = por %p121, %p122
      %p124 = scmp.ne.s32.totalorder %s110, %s111
      %p125 = scmp.eq.s32.totalorder %s30, 1
      %p126 = por %p124, %p125
      %p128 = scmp.ne.s32.totalorder %s111, %s127
      %p129 = scmp.eq.s32.totalorder %s30, 0
      %p130 = por %p128, %p129
      %s131 = ssub.s32 %s24, %s31
      %p132 = scmp.eq.s32.totalorder %s131, 0
      %s134 = sadd.s32 %s133, 1
      %s135 = scalar_select %p132, %s133, %s134
      %p138 = pneg %p132
      %p139 = scmp.eq.s32.totalorder %s24, 1
      %p140 = por %p138, %p139
      %p141 = scmp.ne.s32.totalorder %s133, %s136
      %p142 = scmp.eq.s32.totalorder %s24, 0
      %p143 = por %p141, %p142
      %p144 = scmp.ne.s32.totalorder %s133, %s136
      %p145 = scmp.eq.s32.totalorder %s29, 1
      %p146 = por %p144, %p145
      %p147 = scmp.ne.s32.totalorder %s136, %s137
      %p148 = scmp.eq.s32.totalorder %s29, 0
      %p149 = por %p147, %p148
      %p150 = scmp.ne.s32.totalorder %s136, %s137
      %p151 = scmp.eq.s32.totalorder %s30, 1
      %p152 = por %p150, %p151
      %p154 = scmp.ne.s32.totalorder %s137, %s153
      %p155 = scmp.eq.s32.totalorder %s30, 0
      %p156 = por %p154, %p155
      %s157 = ssub.s32 %s24, %s31
      %p158 = scmp.eq.s32.totalorder %s157, 0
      %s160 = sadd.s32 %s159, 1
      %s161 = scalar_select %p158, %s159, %s160
      %p164 = pneg %p158
      %p165 = scmp.eq.s32.totalorder %s24, 1
      %p166 = por %p164, %p165
      %p167 = scmp.ne.s32.totalorder %s159, %s162
      %p168 = scmp.eq.s32.totalorder %s24, 0
      %p169 = por %p167, %p168
      %p170 = scmp.ne.s32.totalorder %s159, %s162
      %p171 = scmp.eq.s32.totalorder %s29, 1
      %p172 = por %p170, %p171
      %p173 = scmp.ne.s32.totalorder %s162, %s163
      %p174 = scmp.eq.s32.totalorder %s29, 0
      %p175 = por %p173, %p174
      %p176 = scmp.ne.s32.totalorder %s162, %s163
      %p177 = scmp.eq.s32.totalorder %s30, 1
      %p178 = por %p176, %p177
      %p180 = scmp.ne.s32.totalorder %s163, %s179
      %p181 = scmp.eq.s32.totalorder %s30, 0
      %p182 = por %p180, %p181
      %s183 = ssub.s32 %s24, %s31
      %p184 = scmp.eq.s32.totalorder %s183, 0
      %s186 = sadd.s32 %s185, 1
      %s187 = scalar_select %p184, %s185, %s186
      %p190 = pneg %p184
      %p191 = scmp.eq.s32.totalorder %s24, 1
      %p192 = por %p190, %p191
      %p193 = scmp.ne.s32.totalorder %s185, %s188
      %p194 = scmp.eq.s32.totalorder %s24, 0
      %p195 = por %p193, %p194
      %p196 = scmp.ne.s32.totalorder %s185, %s188
      %p197 = scmp.eq.s32.totalorder %s29, 1
      %p198 = por %p196, %p197
      %p199 = scmp.ne.s32.totalorder %s188, %s189
      %p200 = scmp.eq.s32.totalorder %s29, 0
      %p201 = por %p199, %p200
      %p202 = scmp.ne.s32.totalorder %s188, %s189
      %p203 = scmp.eq.s32.totalorder %s30, 1
      %p204 = por %p202, %p203
      %p206 = scmp.ne.s32.totalorder %s189, %s205
      %p207 = scmp.eq.s32.totalorder %s30, 0
      %p208 = por %p206, %p207
      %s210 = sadd.s32 %s209, 1
      %p213 = scmp.eq.s32.totalorder %s24, 1
      %p214 = scmp.ne.s32.totalorder %s209, %s211
      %p215 = scmp.eq.s32.totalorder %s24, 0
      %p216 = por %p214, %p215
      %p217 = scmp.ne.s32.totalorder %s209, %s211
      %p218 = scmp.eq.s32.totalorder %s29, 1
      %p219 = por %p217, %p218
      %p220 = scmp.ne.s32.totalorder %s211, %s212
      %p221 = scmp.eq.s32.totalorder %s29, 0
      %p222 = por %p220, %p221
      %p223 = scmp.ne.s32.totalorder %s211, %s212
      %p224 = scmp.eq.s32.totalorder %s30, 1
      %p225 = por %p223, %p224
      %p227 = scmp.ne.s32.totalorder %s212, %s226
      %p228 = scmp.eq.s32.totalorder %s30, 0
      %p229 = por %p227, %p228
      %s231 = sadd.s32 %s230, 1
      %p234 = scmp.eq.s32.totalorder %s24, 1
      %p235 = scmp.ne.s32.totalorder %s230, %s232
      %p236 = scmp.eq.s32.totalorder %s24, 0
      %p237 = por %p235, %p236
      %p238 = scmp.ne.s32.totalorder %s230, %s232
      %p239 = scmp.eq.s32.totalorder %s29, 1
      %p240 = por %p238, %p239
      %p241 = scmp.ne.s32.totalorder %s232, %s233
      %p242 = scmp.eq.s32.totalorder %s29, 0
      %p243 = por %p241, %p242
      %p244 = scmp.ne.s32.totalorder %s232, %s233
      %p245 = scmp.eq.s32.totalorder %s30, 1
      %p246 = por %p244, %p245
      %p248 = scmp.ne.s32.totalorder %s233, %s247
      %p249 = scmp.eq.s32.totalorder %s30, 0
      %p250 = por %p248, %p249
      %p251 = scmp.le.s32.totalorder 1, %s24
      %p252 = scmp.lt.s32.totalorder %s24, 3
      %p253 = pnand %p251, %p252
      %p254 = pneg %p253
      // Predicated region
      $region9: #{_lambda_.2} parent=5 // pred_check
        _
      $region10: #{_lambda_.2} parent=5 // pred_check_branch
        %256 = sbr.rel (%p253) target = $region12
      $region11: #{_lambda_.2} parent=5 // pred_region
        %s257 = ssub.s32 %s24, 1
        // Predicated region
        $region13: #{_lambda_.2} parent=11 // pred_check
          %p258 = pneg %p45
        $region14: #{_lambda_.2} parent=11 // pred_check_branch
          %260 = sbr.rel (%p258) target = $region16
        $region15: #{_lambda_.2} parent=11 // pred_region
          _
        $region16: #{_lambda_.2} parent=11 // pred_fallthru
          _
        // Predicated region
        $region17: #{_lambda_.2} parent=11 // pred_check
          %p261 = pneg %p222
        $region18: #{_lambda_.2} parent=11 // pred_check_branch
          %263 = sbr.rel (%p261) target = $region20
        $region19: #{_lambda_.2} parent=11 // pred_region
          %s265 = ssub.s32 32, 32
          %266 = vsyncadd [#allocation11], %s265
          %s268 = sshll.u32 [#allocation10], 4
          %s269 = int_to_ptr.vmem [resolvable:$true] %s268
          %271 = dma.hbm_to_vmem [thread:$0]  %s7, 32, %s269, [#allocation11]
        $region20: #{_lambda_.2} parent=11 // pred_fallthru
          _
      $region12: #{_lambda_.2} parent=5 // pred_fallthru
        _
      %p272 = scmp.lt.s32.totalorder %s24, 2
      // Predicated region
      $region21: #{_lambda_.2} parent=5 // pred_check
        %p273 = pneg %p272
      $region22: #{_lambda_.2} parent=5 // pred_check_branch
        %275 = sbr.rel (%p273) target = $region24
      $region23: #{_lambda_.2} parent=5 // pred_region
        // Predicated region
        $region25: #{_lambda_.2} parent=23 // pred_check
          %p276 = pneg %p65
        $region26: #{_lambda_.2} parent=23 // pred_check_branch
          %278 = sbr.rel (%p276) target = $region28
        $region27: #{_lambda_.2} parent=23 // pred_region
          %s279 = sand.u32 %s55, 1
          %s280 = scalar_lea.sflag [#allocation3], %s279
          %s281 = sand.u32 %s55, 1
          %s282 = smul.addr %s281, 32
          %s283 = scalar_lea.vmem [#allocation2], %s282
          %s285 = ssub.s32 512, 512
          %286 = vsyncadd %s280, %s285
          %s287 = smul.addr %s24, 4
          %s288 = smul.addr %s287, 128
          %s289 = scalar_lea.hbm %s1, %s288
          %s290 = sshll.u32 %s283, 4
          %s291 = int_to_ptr.vmem [resolvable:$true] %s290
          %296 = dma.hbm_to_vmem [thread:$0]  %s289, 512, %s291, %s280, 256, 256, 16
        $region28: #{_lambda_.2} parent=23 // pred_fallthru
          _
        // Predicated region
        $region29: #{_lambda_.2} parent=23 // pred_check
          %p297 = pneg %p91
        $region30: #{_lambda_.2} parent=23 // pred_check_branch
          %299 = sbr.rel (%p297) target = $region32
        $region31: #{_lambda_.2} parent=23 // pred_region
          %s300 = sand.u32 %s24, 1
          %s301 = scalar_lea.sflag [#allocation5], %s300
          %s302 = sand.u32 %s81, 1
          %s303 = smul.addr %s302, 384
          %s304 = scalar_lea.vmem [#allocation4], %s303
          %s306 = ssub.s32 6144, 6144
          %307 = vsyncadd %s301, %s306
          %s308 = smul.addr %s24, 96
          %s309 = smul.addr %s308, 64
          %s310 = scalar_lea.hbm %s2, %s309
          %s311 = sshll.u32 %s304, 4
          %s312 = int_to_ptr.vmem [resolvable:$true] %s311
          %317 = dma.hbm_to_vmem [thread:$0]  %s310, 6144, %s312, %s301, 64, 64, 4
        $region32: #{_lambda_.2} parent=23 // pred_fallthru
          _
        // Predicated region
        $region33: #{_lambda_.2} parent=23 // pred_check
          %p318 = pneg %p117
        $region34: #{_lambda_.2} parent=23 // pred_check_branch
          %320 = sbr.rel (%p318) target = $region36
        $region35: #{_lambda_.2} parent=23 // pred_region
          %p321 = scmp.lt.s32.totalorder %s24, 1
          %s322 = scalar_select %p321, %s24, 1
          %s323 = smul.addr %s322, 32
          %s324 = smul.addr %s323, 4
          %s325 = scalar_lea.vmem %s3, %s324
        $region36: #{_lambda_.2} parent=23 // pred_fallthru
          _
        // Predicated region
        $region37: #{_lambda_.2} parent=23 // pred_check
          %p326 = pneg %p143
        $region38: #{_lambda_.2} parent=23 // pred_check_branch
          %328 = sbr.rel (%p326) target = $region40
        $region39: #{_lambda_.2} parent=23 // pred_region
          %s329 = sand.u32 %s24, 1
          %s330 = scalar_lea.sflag [#allocation5], %s329
          %s331 = sand.u32 %s133, 1
          %s332 = smul.addr %s331, 64
          %s333 = scalar_lea.vmem [#allocation6], %s332
          %s335 = ssub.s32 1024, 1024
          %336 = vsyncadd %s330, %s335
          %s337 = smul.addr %s24, 16
          %s338 = smul.addr %s337, 64
          %s339 = scalar_lea.hbm %s4, %s338
          %s340 = sshll.u32 %s333, 4
          %s341 = int_to_ptr.vmem [resolvable:$true] %s340
          %346 = dma.hbm_to_vmem [thread:$0]  %s339, 1024, %s341, %s330, 64, 64, 4
        $region40: #{_lambda_.2} parent=23 // pred_fallthru
          _
        // Predicated region
        $region41: #{_lambda_.2} parent=23 // pred_check
          %p347 = pneg %p169
        $region42: #{_lambda_.2} parent=23 // pred_check_branch
          %349 = sbr.rel (%p347) target = $region44
        $region43: #{_lambda_.2} parent=23 // pred_region
          %s350 = sand.u32 %s24, 1
          %s351 = scalar_lea.sflag [#allocation8], %s350
          %s352 = sand.u32 %s159, 1
          %s353 = smul.addr %s352, 64
          %s354 = scalar_lea.vmem [#allocation7], %s353
          %s356 = ssub.s32 1024, 1024
          %357 = vsyncadd %s351, %s356
          %s358 = smul.addr %s24, 16
          %s359 = smul.addr %s358, 64
          %s360 = scalar_lea.hbm %s5, %s359
          %s361 = sshll.u32 %s354, 4
          %s362 = int_to_ptr.vmem [resolvable:$true] %s361
          %367 = dma.hbm_to_vmem [thread:$0]  %s360, 1024, %s362, %s351, 64, 64, 4
        $region44: #{_lambda_.2} parent=23 // pred_fallthru
          _
        // Predicated region
        $region45: #{_lambda_.2} parent=23 // pred_check
          %p368 = pneg %p195
        $region46: #{_lambda_.2} parent=23 // pred_check_branch
          %370 = sbr.rel (%p368) target = $region48
        $region47: #{_lambda_.2} parent=23 // pred_region
          %s371 = sand.u32 %s24, 1
          %s372 = scalar_lea.sflag [#allocation8], %s371
          %s373 = sand.u32 %s185, 1
          %s374 = smul.addr %s373, 64
          %s375 = scalar_lea.vmem [#allocation9], %s374
          %s377 = ssub.s32 1024, 1024
          %378 = vsyncadd %s372, %s377
          %s379 = smul.addr %s24, 16
          %s380 = smul.addr %s379, 64
          %s381 = scalar_lea.hbm %s6, %s380
          %s382 = sshll.u32 %s375, 4
          %s383 = int_to_ptr.vmem [resolvable:$true] %s382
          %388 = dma.hbm_to_vmem [thread:$0]  %s381, 1024, %s383, %s372, 64, 64, 4
        $region48: #{_lambda_.2} parent=23 // pred_fallthru
          _
      $region24: #{_lambda_.2} parent=5 // pred_fallthru
        _
      %p389 = scmp.le.s32.totalorder 1, %s24
      %p390 = scmp.lt.s32.totalorder %s24, 3
      %p391 = pnand %p389, %p390
      %p392 = pneg %p391
      // Predicated region
      $region49: #{_lambda_.2} parent=5 // pred_check
        _
      $region50: #{_lambda_.2} parent=5 // pred_check_branch
        %394 = sbr.rel (%p391) target = $region52
      $region51: #{_lambda_.2} parent=5 // pred_region
        %s395 = ssub.s32 %s24, 1
        %s396 = sand.u32 %s58, 1
        %s397 = scalar_lea.sflag [#allocation3], %s396
        %s398 = sand.u32 %s58, 1
        %s399 = smul.addr %s398, 32
        %s400 = scalar_lea.vmem [#allocation2], %s399
        // Predicated region
        $region53: #{_lambda_.2} parent=51 // pred_check
          %p401 = pneg %p71
        $region54: #{_lambda_.2} parent=51 // pred_check_branch
          %403 = sbr.rel (%p401) target = $region56
        $region55: #{_lambda_.2} parent=51 // pred_region
          %404 = dma.done %s397, 512
        $region56: #{_lambda_.2} parent=51 // pred_fallthru
          _
        %s405 = sand.u32 %s29, 1
        %s406 = scalar_lea.sflag [#allocation5], %s405
        %s407 = sand.u32 %s84, 1
        %s408 = smul.addr %s407, 384
        %s409 = scalar_lea.vmem [#allocation4], %s408
        // Predicated region
        $region57: #{_lambda_.2} parent=51 // pred_check
          %p410 = pneg %p97
        $region58: #{_lambda_.2} parent=51 // pred_check_branch
          %412 = sbr.rel (%p410) target = $region60
        $region59: #{_lambda_.2} parent=51 // pred_region
          %413 = dma.done %s406, 6144
        $region60: #{_lambda_.2} parent=51 // pred_fallthru
          _
        %s414 = sand.u32 %s29, 1
        %s415 = scalar_lea.sflag [#allocation5], %s414
        %s416 = sand.u32 %s136, 1
        %s417 = smul.addr %s416, 64
        %s418 = scalar_lea.vmem [#allocation6], %s417
        // Predicated region
        $region61: #{_lambda_.2} parent=51 // pred_check
          %p419 = pneg %p149
        $region62: #{_lambda_.2} parent=51 // pred_check_branch
          %421 = sbr.rel (%p419) target = $region64
        $region63: #{_lambda_.2} parent=51 // pred_region
          %422 = dma.done %s415, 1024
        $region64: #{_lambda_.2} parent=51 // pred_fallthru
          _
        %s423 = sand.u32 %s29, 1
        %s424 = scalar_lea.sflag [#allocation8], %s423
        %s425 = sand.u32 %s162, 1
        %s426 = smul.addr %s425, 64
        %s427 = scalar_lea.vmem [#allocation7], %s426
        // Predicated region
        $region65: #{_lambda_.2} parent=51 // pred_check
          %p428 = pneg %p175
        $region66: #{_lambda_.2} parent=51 // pred_check_branch
          %430 = sbr.rel (%p428) target = $region68
        $region67: #{_lambda_.2} parent=51 // pred_region
          %431 = dma.done %s424, 1024
        $region68: #{_lambda_.2} parent=51 // pred_fallthru
          _
        %s432 = sand.u32 %s29, 1
        %s433 = scalar_lea.sflag [#allocation8], %s432
        %s434 = sand.u32 %s188, 1
        %s435 = smul.addr %s434, 64
        %s436 = scalar_lea.vmem [#allocation9], %s435
        // Predicated region
        $region69: #{_lambda_.2} parent=51 // pred_check
          %p437 = pneg %p201
        $region70: #{_lambda_.2} parent=51 // pred_check_branch
          %439 = sbr.rel (%p437) target = $region72
        $region71: #{_lambda_.2} parent=51 // pred_region
          %440 = dma.done %s433, 1024
        $region72: #{_lambda_.2} parent=51 // pred_fallthru
          _
        // Predicated region
        $region73: #{_lambda_.2} parent=51 // pred_check
          %p441 = pneg %p222
        $region74: #{_lambda_.2} parent=51 // pred_check_branch
          %443 = sbr.rel (%p441) target = $region76
        $region75: #{_lambda_.2} parent=51 // pred_region
          %444 = dma.done [#allocation11], 32
        $region76: #{_lambda_.2} parent=51 // pred_fallthru
          _
        %p445 = pneg %p45
        %p446 = pneg %p42
        %s447 = sand.u32 %s58, 1
        %s448 = scalar_lea.sflag [#allocation3], %s447
        %s449 = sand.u32 %s58, 1
        %s450 = smul.addr %s449, 32
        %s451 = scalar_lea.vmem [#allocation2], %s450
        %p452 = pneg %p71
        %p453 = pneg %p68
        %s454 = sand.u32 %s29, 1
        %s455 = scalar_lea.sflag [#allocation5], %s454
        %s456 = sand.u32 %s84, 1
        %s457 = smul.addr %s456, 384
        %s458 = scalar_lea.vmem [#allocation4], %s457
        %p459 = pneg %p97
        %p460 = pneg %p94
        %p461 = scmp.lt.s32.totalorder %s29, 1
        %s462 = scalar_select %p461, %s29, 1
        %s463 = smul.addr %s462, 32
        %s464 = smul.addr %s463, 4
        %s465 = scalar_lea.vmem %s3, %s464
        %p466 = pneg %p123
        %p467 = pneg %p120
        %s468 = sand.u32 %s29, 1
        %s469 = scalar_lea.sflag [#allocation5], %s468
        %s470 = sand.u32 %s136, 1
        %s471 = smul.addr %s470, 64
        %s472 = scalar_lea.vmem [#allocation6], %s471
        %p473 = pneg %p149
        %p474 = pneg %p146
        %s475 = sand.u32 %s29, 1
        %s476 = scalar_lea.sflag [#allocation8], %s475
        %s477 = sand.u32 %s162, 1
        %s478 = smul.addr %s477, 64
        %s479 = scalar_lea.vmem [#allocation7], %s478
        %p480 = pneg %p175
        %p481 = pneg %p172
        %s482 = sand.u32 %s29, 1
        %s483 = scalar_lea.sflag [#allocation8], %s482
        %s484 = sand.u32 %s188, 1
        %s485 = smul.addr %s484, 64
        %s486 = scalar_lea.vmem [#allocation9], %s485
        %p487 = pneg %p201
        %p488 = pneg %p198
        %p489 = pneg %p222
        %p490 = pneg %p219
        %p491 = pneg %p243
        %p492 = pneg %p240
        %p493 = scmp.lt.s32.totalorder %s29, 1
        %s494 = scalar_select %p493, %s29, 1
        %s495 = smul.addr %s494, 32
        %s496 = smul.addr %s495, 4
        %s497 = scalar_lea.vmem %s3, %s496
        %p499 = scmp.eq.s32.totalorder %s29, 0
        // Predicated region
        $region77: #{_lambda_.2} parent=51 // pred_check
          %p500 = pneg %p499
        $region78: #{_lambda_.2} parent=51 // pred_check_branch
          %502 = sbr.rel (%p500) target = $region80
        $region79: #{_lambda_.2} parent=51 // pred_region
          %v503 = vld [vmem:[%s0] sm:$0xff]
          %v504 = vld [vmem:[%s0 + $0x8] sm:$0xff]
          %505 = vst [vmem:[%s8] sm:$0xff] %v503
          %506 = vst [vmem:[%s8 + $0x8] sm:$0xff] %v504
        $region80: #{_lambda_.2} parent=51 // pred_fallthru
          _
        %v507 = vld [vmem:[%s8] sm:$0xff]
        %v508 = vld [vmem:[%s8 + $0x8] sm:$0xff]
        %v509 = vlaneseq
        %v510 = vand.u32 %v509, 127
        %vm511 = vcmp.lt.s32.totalorder %v510, 32
        %v512 = vsel %vm511, 1, 0
        %v513 = vcvt.s32.f32 %v512
        %v514 = vld [vmem:[%s400] sm:$0xff]
        %v515 = vld [vmem:[%s400 + $0x8] sm:$0xff]
        %v516 = vld [vmem:[%s400 + $0x10] sm:$0x1f]
        %v517 = vlaneseq
        %v518 = vshrl.u32 %v517, 7
        %vm519 = vcmp.ge.s32.totalorder %v518, %v510
        %v520 = vsel %vm519, 0.0, -1e+30
        %521 = vadd.xlane.f32.xlu0 %v507
        %v522 = vpop.xlane.xlu0 %521
        %523 = vadd.xlane.f32.xlu0 %v508
        %v524 = vpop.xlane.xlu0 %523
        %v525 = vmul.f32 %v522, 0.03125
        %v526 = vmul.f32 %v524, 0.03125
        %v527 = vsub.f32 %v507, %v525
        %v528 = vsub.f32 %v508, %v526
        %v529 = vmul.f32 %v527, %v513
        %v530 = vmul.f32 %v528, %v513
        %v531 = vmul.f32 %v529, %v529
        %v532 = vmul.f32 %v530, %v530
        %533 = vadd.xlane.f32.xlu0 %v531
        %v534 = vpop.xlane.xlu0 %533
        %535 = vadd.xlane.f32.xlu0 %v532
        %v536 = vpop.xlane.xlu0 %535
        %v537 = vmul.f32 %v534, 0.03125
        %v538 = vmul.f32 %v536, 0.03125
        %v539 = vadd.f32 %v537, 1e-05
        %v540 = vadd.f32 %v538, 1e-05
        %v541 = vrsqrt.pop %v539
        %v542 = vrsqrt.pop %v540
        %v543 = vmul.f32 %v529, %v541
        %v544 = vmul.f32 %v530, %v542
        %v545 = vlaneseq
        %v546 = vshrl.u32 %v545, 7
        %v547 = vsub.s32 0, %v546
        %v548 = vrot.slane %v514, %v547
        %v549 = vmul.f32 %v543, %v548
        %v550 = vmul.f32 %v544, %v548
        %v551 = vlaneseq
        %v552 = vshrl.u32 %v551, 7
        %v553 = vsub.s32 1, %v552
        %v554 = vrot.slane %v514, %v553
        %v555 = vadd.f32 %v549, %v554
        %v556 = vadd.f32 %v550, %v554
        %v557 = vpack.c.bf16 %v556, %v555
        %v558 = vld [vmem:[%s409] sm:$0xf]
        %v559 = vld [vmem:[%s409 + $0x4] sm:$0xf]
        %v560 = vld [vmem:[%s409 + $0x8] sm:$0xf]
        %v561 = vld [vmem:[%s409 + $0xc] sm:$0xf]
        %v562 = vld [vmem:[%s409 + $0x10] sm:$0xf]
        %v563 = vld [vmem:[%s409 + $0x14] sm:$0xf]
        %v564 = vld [vmem:[%s409 + $0x18] sm:$0xf]
        %v565 = vld [vmem:[%s409 + $0x1c] sm:$0xf]
        %v566 = vld [vmem:[%s409 + $0x20] sm:$0xf]
        %v567 = vld [vmem:[%s409 + $0x24] sm:$0xf]
        %v568 = vld [vmem:[%s409 + $0x28] sm:$0xf]
        %v569 = vld [vmem:[%s409 + $0x2c] sm:$0xf]
        %v570 = vld [vmem:[%s409 + $0x30] sm:$0xf]
        %v571 = vld [vmem:[%s409 + $0x34] sm:$0xf]
        %v572 = vld [vmem:[%s409 + $0x38] sm:$0xf]
        %v573 = vld [vmem:[%s409 + $0x3c] sm:$0xf]
        %v574 = vlaneseq
        %v575 = vshrl.u32 %v574, 7
        %v576 = vsub.s32 4, %v575
        %v577 = vrot.slane %v514, %v576
        %v594 = vunpack.c.l.b16 %v558
        %v595 = vunpack.c.l.b16 %v559
        %v596 = vunpack.c.l.b16 %v560
        %v597 = vunpack.c.l.b16 %v561
        %v598 = vunpack.c.l.b16 %v562
        %v599 = vunpack.c.l.b16 %v563
        %v600 = vunpack.c.l.b16 %v564
        %v601 = vunpack.c.l.b16 %v565
        %v602 = vunpack.c.l.b16 %v566
        %v603 = vunpack.c.l.b16 %v567
        %v604 = vunpack.c.l.b16 %v568
        %v605 = vunpack.c.l.b16 %v569
        %v606 = vunpack.c.l.b16 %v570
        %v607 = vunpack.c.l.b16 %v571
        %v608 = vunpack.c.l.b16 %v572
        %v609 = vunpack.c.l.b16 %v573
        %v610 = vpack.c.b16 %v595, %v594
        %v611 = vpack.c.b16 %v597, %v596
        %v612 = vpack.c.b16 %v599, %v598
        %v613 = vpack.c.b16 %v601, %v600
        %v614 = vpack.c.b16 %v603, %v602
        %v615 = vpack.c.b16 %v605, %v604
        %v616 = vpack.c.b16 %v607, %v606
        %v617 = vpack.c.b16 %v609, %v608
        %626 = vmatprep.subr.bf16.mxu0 0
        %627 = vmatpush1.bf16.msra.mxu0 %v610
        %628 = vmatprep.subr.bf16.mxu0 0
        %629 = vmatpush1.bf16.msra.mxu0 %v611
        %630 = vmatprep.subr.bf16.mxu0 0
        %631 = vmatpush1.bf16.msra.mxu0 %v612
        %632 = vmatprep.subr.bf16.mxu0 0
        %633 = vmatpush1.bf16.msra.mxu0 %v613
        %634 = vmatprep.subr.bf16.mxu0 0
        %635 = vmatpush1.bf16.msra.mxu0 %v614
        %636 = vmatprep.subr.bf16.mxu0 0
        %637 = vmatpush1.bf16.msra.mxu0 %v615
        %638 = vmatprep.subr.bf16.mxu0 0
        %639 = vmatpush1.bf16.msra.mxu0 %v616
        %640 = vmatprep.subr.bf16.mxu0 0
        %641 = vmatpush1.bf16.msra.mxu0 %v617
        %642 = vmatprep.subr.bf16.mxu0 0
        %643 = vmatpush1.bf16.msra.mxu0 0
        %644 = vmatprep.subr.bf16.mxu0 0
        %645 = vmatpush1.bf16.msra.mxu0 0
        %646 = vmatprep.subr.bf16.mxu0 0
        %647 = vmatpush1.bf16.msra.mxu0 0
        %648 = vmatprep.subr.bf16.mxu0 0
        %649 = vmatpush1.bf16.msra.mxu0 0
        %650 = vmatprep.subr.bf16.mxu0 0
        %651 = vmatpush1.bf16.msra.mxu0 0
        %652 = vmatprep.subr.bf16.mxu0 0
        %653 = vmatpush1.bf16.msra.mxu0 0
        %654 = vmatprep.subr.bf16.mxu0 0
        %655 = vmatpush1.bf16.msra.mxu0 0
        %656 = vmatprep.subr.bf16.mxu0 0
        %657 = vmatpush1.bf16.msra.mxu0 0
        %658 = vmatprep.mubr.bf16.mxu0 0
        %659 = vmatmul.mubr.bf16.gmra.mrb[0].mxu0 %v557
        %v660 = vpop.f32.mrb[0].mxu0
        %v661 = vadd.f32 %v577, %v660
        %v662 = vpop.f32.mrb[0].mxu0
        %v663 = vpop.f32.mrb[0].mxu0
        %v664 = vadd.f32 %v577, %v663
        %v665 = vpop.f32.mrb[0].mxu0
        %666 = vdwg.mxu0
        %s667 = scalar_lea.vmem %s409, 128 [#allocation4]
        %v668 = vld [vmem:[%s667] sm:$0xf]
        %v669 = vld [vmem:[%s667 + $0x4] sm:$0xf]
        %v670 = vld [vmem:[%s667 + $0x8] sm:$0xf]
        %v671 = vld [vmem:[%s667 + $0xc] sm:$0xf]
        %v672 = vld [vmem:[%s667 + $0x10] sm:$0xf]
        %v673 = vld [vmem:[%s667 + $0x14] sm:$0xf]
        %v674 = vld [vmem:[%s667 + $0x18] sm:$0xf]
        %v675 = vld [vmem:[%s667 + $0x1c] sm:$0xf]
        %v676 = vld [vmem:[%s667 + $0x20] sm:$0xf]
        %v677 = vld [vmem:[%s667 + $0x24] sm:$0xf]
        %v678 = vld [vmem:[%s667 + $0x28] sm:$0xf]
        %v679 = vld [vmem:[%s667 + $0x2c] sm:$0xf]
        %v680 = vld [vmem:[%s667 + $0x30] sm:$0xf]
        %v681 = vld [vmem:[%s667 + $0x34] sm:$0xf]
        %v682 = vld [vmem:[%s667 + $0x38] sm:$0xf]
        %v683 = vld [vmem:[%s667 + $0x3c] sm:$0xf]
        %v684 = vlaneseq
        %v685 = vshrl.u32 %v684, 7
        %v686 = vsub.s32 5, %v685
        %v687 = vrot.slane %v514, %v686
        %v704 = vunpack.c.l.b16 %v668
        %v705 = vunpack.c.l.b16 %v669
        %v706 = vunpack.c.l.b16 %v670
        %v707 = vunpack.c.l.b16 %v671
        %v708 = vunpack.c.l.b16 %v672
        %v709 = vunpack.c.l.b16 %v673
        %v710 = vunpack.c.l.b16 %v674
        %v711 = vunpack.c.l.b16 %v675
        %v712 = vunpack.c.l.b16 %v676
        %v713 = vunpack.c.l.b16 %v677
        %v714 = vunpack.c.l.b16 %v678
        %v715 = vunpack.c.l.b16 %v679
        %v716 = vunpack.c.l.b16 %v680
        %v717 = vunpack.c.l.b16 %v681
        %v718 = vunpack.c.l.b16 %v682
        %v719 = vunpack.c.l.b16 %v683
        %v720 = vpack.c.b16 %v705, %v704
        %v721 = vpack.c.b16 %v707, %v706
        %v722 = vpack.c.b16 %v709, %v708
        %v723 = vpack.c.b16 %v711, %v710
        %v724 = vpack.c.b16 %v713, %v712
        %v725 = vpack.c.b16 %v715, %v714
        %v726 = vpack.c.b16 %v717, %v716
        %v727 = vpack.c.b16 %v719, %v718
        %736 = vmatprep.subr.bf16.mxu0 0
        %737 = vmatpush1.bf16.msra.mxu0 %v720
        %738 = vmatprep.subr.bf16.mxu0 0
        %739 = vmatpush1.bf16.msra.mxu0 %v721
        %740 = vmatprep.subr.bf16.mxu0 0
        %741 = vmatpush1.bf16.msra.mxu0 %v722
        %742 = vmatprep.subr.bf16.mxu0 0
        %743 = vmatpush1.bf16.msra.mxu0 %v723
        %744 = vmatprep.subr.bf16.mxu0 0
        %745 = vmatpush1.bf16.msra.mxu0 %v724
        %746 = vmatprep.subr.bf16.mxu0 0
        %747 = vmatpush1.bf16.msra.mxu0 %v725
        %748 = vmatprep.subr.bf16.mxu0 0
        %749 = vmatpush1.bf16.msra.mxu0 %v726
        %750 = vmatprep.subr.bf16.mxu0 0
        %751 = vmatpush1.bf16.msra.mxu0 %v727
        %752 = vmatprep.subr.bf16.mxu0 0
        %753 = vmatpush1.bf16.msra.mxu0 0
        %754 = vmatprep.subr.bf16.mxu0 0
        %755 = vmatpush1.bf16.msra.mxu0 0
        %756 = vmatprep.subr.bf16.mxu0 0
        %757 = vmatpush1.bf16.msra.mxu0 0
        %758 = vmatprep.subr.bf16.mxu0 0
        %759 = vmatpush1.bf16.msra.mxu0 0
        %760 = vmatprep.subr.bf16.mxu0 0
        %761 = vmatpush1.bf16.msra.mxu0 0
        %762 = vmatprep.subr.bf16.mxu0 0
        %763 = vmatpush1.bf16.msra.mxu0 0
        %764 = vmatprep.subr.bf16.mxu0 0
        %765 = vmatpush1.bf16.msra.mxu0 0
        %766 = vmatprep.subr.bf16.mxu0 0
        %767 = vmatpush1.bf16.msra.mxu0 0
        %768 = vmatprep.mubr.bf16.mxu0 0
        %769 = vmatmul.mubr.bf16.gmra.mrb[0].mxu0 %v557
        %v770 = vpop.f32.mrb[0].mxu0
        %v771 = vadd.f32 %v687, %v770
        %v772 = vpop.f32.mrb[0].mxu0
        %v773 = vpop.f32.mrb[0].mxu0
        %v774 = vadd.f32 %v687, %v773
        %v775 = vpop.f32.mrb[0].mxu0
        %776 = vdwg.mxu0
        %s777 = scalar_lea.vmem %s409, 256 [#allocation4]
        %v778 = vld [vmem:[%s777] sm:$0xf]
        %v779 = vld [vmem:[%s777 + $0x4] sm:$0xf]
        %v780 = vld [vmem:[%s777 + $0x8] sm:$0xf]
        %v781 = vld [vmem:[%s777 + $0xc] sm:$0xf]
        %v782 = vld [vmem:[%s777 + $0x10] sm:$0xf]
        %v783 = vld [vmem:[%s777 + $0x14] sm:$0xf]
        %v784 = vld [vmem:[%s777 + $0x18] sm:$0xf]
        %v785 = vld [vmem:[%s777 + $0x1c] sm:$0xf]
        %v786 = vld [vmem:[%s777 + $0x20] sm:$0xf]
        %v787 = vld [vmem:[%s777 + $0x24] sm:$0xf]
        %v788 = vld [vmem:[%s777 + $0x28] sm:$0xf]
        %v789 = vld [vmem:[%s777 + $0x2c] sm:$0xf]
        %v790 = vld [vmem:[%s777 + $0x30] sm:$0xf]
        %v791 = vld [vmem:[%s777 + $0x34] sm:$0xf]
        %v792 = vld [vmem:[%s777 + $0x38] sm:$0xf]
        %v793 = vld [vmem:[%s777 + $0x3c] sm:$0xf]
        %v794 = vlaneseq
        %v795 = vshrl.u32 %v794, 7
        %v796 = vsub.s32 6, %v795
        %v797 = vrot.slane %v514, %v796
        %v814 = vunpack.c.l.b16 %v778
        %v815 = vunpack.c.l.b16 %v779
        %v816 = vunpack.c.l.b16 %v780
        %v817 = vunpack.c.l.b16 %v781
        %v818 = vunpack.c.l.b16 %v782
        %v819 = vunpack.c.l.b16 %v783
        %v820 = vunpack.c.l.b16 %v784
        %v821 = vunpack.c.l.b16 %v785
        %v822 = vunpack.c.l.b16 %v786
        %v823 = vunpack.c.l.b16 %v787
        %v824 = vunpack.c.l.b16 %v788
        %v825 = vunpack.c.l.b16 %v789
        %v826 = vunpack.c.l.b16 %v790
        %v827 = vunpack.c.l.b16 %v791
        %v828 = vunpack.c.l.b16 %v792
        %v829 = vunpack.c.l.b16 %v793
        %v830 = vpack.c.b16 %v815, %v814
        %v831 = vpack.c.b16 %v817, %v816
        %v832 = vpack.c.b16 %v819, %v818
        %v833 = vpack.c.b16 %v821, %v820
        %v834 = vpack.c.b16 %v823, %v822
        %v835 = vpack.c.b16 %v825, %v824
        %v836 = vpack.c.b16 %v827, %v826
        %v837 = vpack.c.b16 %v829, %v828
        %846 = vmatprep.subr.bf16.mxu0 0
        %847 = vmatpush1.bf16.msra.mxu0 %v830
        %848 = vmatprep.subr.bf16.mxu0 0
        %849 = vmatpush1.bf16.msra.mxu0 %v831
        %850 = vmatprep.subr.bf16.mxu0 0
        %851 = vmatpush1.bf16.msra.mxu0 %v832
        %852 = vmatprep.subr.bf16.mxu0 0
        %853 = vmatpush1.bf16.msra.mxu0 %v833
        %854 = vmatprep.subr.bf16.mxu0 0
        %855 = vmatpush1.bf16.msra.mxu0 %v834
        %856 = vmatprep.subr.bf16.mxu0 0
        %857 = vmatpush1.bf16.msra.mxu0 %v835
        %858 = vmatprep.subr.bf16.mxu0 0
        %859 = vmatpush1.bf16.msra.mxu0 %v836
        %860 = vmatprep.subr.bf16.mxu0 0
        %861 = vmatpush1.bf16.msra.mxu0 %v837
        %862 = vmatprep.subr.bf16.mxu0 0
        %863 = vmatpush1.bf16.msra.mxu0 0
        %864 = vmatprep.subr.bf16.mxu0 0
        %865 = vmatpush1.bf16.msra.mxu0 0
        %866 = vmatprep.subr.bf16.mxu0 0
        %867 = vmatpush1.bf16.msra.mxu0 0
        %868 = vmatprep.subr.bf16.mxu0 0
        %869 = vmatpush1.bf16.msra.mxu0 0
        %870 = vmatprep.subr.bf16.mxu0 0
        %871 = vmatpush1.bf16.msra.mxu0 0
        %872 = vmatprep.subr.bf16.mxu0 0
        %873 = vmatpush1.bf16.msra.mxu0 0
        %874 = vmatprep.subr.bf16.mxu0 0
        %875 = vmatpush1.bf16.msra.mxu0 0
        %876 = vmatprep.subr.bf16.mxu0 0
        %877 = vmatpush1.bf16.msra.mxu0 0
        %878 = vmatprep.mubr.bf16.mxu0 0
        %879 = vmatmul.mubr.bf16.gmra.mrb[0].mxu0 %v557
        %v880 = vpop.f32.mrb[0].mxu0
        %v881 = vadd.f32 %v797, %v880
        %v882 = vpop.f32.mrb[0].mxu0
        %v883 = vpop.f32.mrb[0].mxu0
        %v884 = vadd.f32 %v797, %v883
        %v885 = vpop.f32.mrb[0].mxu0
        %886 = vdwg.mxu0
        %v887 = vpack.c.bf16 %v661, %v661
        %v888 = vpack.c.bf16 %v664, %v664
        %v889 = vpack.c.bf16 %v771, %v771
        %v890 = vpack.c.bf16 %v774, %v774
        %v891 = vpack.c.bf16 %v881, %v881
        %v892 = vpack.c.bf16 %v884, %v884
        %893 = vmatprep.subr.bf16.mxu0 0
        %894 = vmatpush1.bf16.xpose.msra.mxu0 %v889
        %895 = vmatprep.subr.bf16.mxu0 0
        %896 = vmatpush1.bf16.xpose.msra.mxu0 0
        %897 = vmatprep.subr.bf16.mxu0 0
        %898 = vmatpush1.bf16.xpose.msra.mxu0 0
        %899 = vmatprep.subr.bf16.mxu0 0
        %900 = vmatpush1.bf16.xpose.msra.mxu0 0
        %901 = vmatprep.subr.bf16.mxu0 0
        %902 = vmatpush1.bf16.xpose.msra.mxu0 0
        %903 = vmatprep.subr.bf16.mxu0 0
        %904 = vmatpush1.bf16.xpose.msra.mxu0 0
        %905 = vmatprep.subr.bf16.mxu0 0
        %906 = vmatpush1.bf16.xpose.msra.mxu0 0
        %907 = vmatprep.subr.bf16.mxu0 0
        %908 = vmatpush1.bf16.xpose.msra.mxu0 0
        %909 = vmatprep.subr.bf16.mxu0 0
        %910 = vmatpush1.bf16.xpose.msra.mxu0 0
        %911 = vmatprep.subr.bf16.mxu0 0
        %912 = vmatpush1.bf16.xpose.msra.mxu0 0
        %913 = vmatprep.subr.bf16.mxu0 0
        %914 = vmatpush1.bf16.xpose.msra.mxu0 0
        %915 = vmatprep.subr.bf16.mxu0 0
        %916 = vmatpush1.bf16.xpose.msra.mxu0 0
        %917 = vmatprep.subr.bf16.mxu0 0
        %918 = vmatpush1.bf16.xpose.msra.mxu0 0
        %919 = vmatprep.subr.bf16.mxu0 0
        %920 = vmatpush1.bf16.xpose.msra.mxu0 0
        %921 = vmatprep.subr.bf16.mxu0 0
        %922 = vmatpush1.bf16.xpose.msra.mxu0 0
        %923 = vmatprep.subr.bf16.mxu0 0
        %924 = vmatpush1.bf16.xpose.msra.mxu0 0
        %925 = vmatprep.mubr.bf16.mxu0 0
        %926 = vmatmul.mubr.bf16.gmra.mrb[0].mxu0 %v887
        %v927 = vpop.f32.mrb[0].mxu0
        %v928 = vadd.f32 0.0, %v927
        %v929 = vpop.f32.mrb[0].mxu0
        %v930 = vpop.f32.mrb[0].mxu0
        %v931 = vpop.f32.mrb[0].mxu0
        %932 = vdwg.mxu0
        %933 = vmatprep.subr.bf16.mxu0 0
        %934 = vmatpush1.bf16.xpose.msra.mxu0 %v890
        %935 = vmatprep.subr.bf16.mxu0 0
        %936 = vmatpush1.bf16.xpose.msra.mxu0 0
        %937 = vmatprep.subr.bf16.mxu0 0
        %938 = vmatpush1.bf16.xpose.msra.mxu0 0
        %939 = vmatprep.subr.bf16.mxu0 0
        %940 = vmatpush1.bf16.xpose.msra.mxu0 0
        %941 = vmatprep.subr.bf16.mxu0 0
        %942 = vmatpush1.bf16.xpose.msra.mxu0 0
        %943 = vmatprep.subr.bf16.mxu0 0
        %944 = vmatpush1.bf16.xpose.msra.mxu0 0
        %945 = vmatprep.subr.bf16.mxu0 0
        %946 = vmatpush1.bf16.xpose.msra.mxu0 0
        %947 = vmatprep.subr.bf16.mxu0 0
        %948 = vmatpush1.bf16.xpose.msra.mxu0 0
        %949 = vmatprep.subr.bf16.mxu0 0
        %950 = vmatpush1.bf16.xpose.msra.mxu0 0
        %951 = vmatprep.subr.bf16.mxu0 0
        %952 = vmatpush1.bf16.xpose.msra.mxu0 0
        %953 = vmatprep.subr.bf16.mxu0 0
        %954 = vmatpush1.bf16.xpose.msra.mxu0 0
        %955 = vmatprep.subr.bf16.mxu0 0
        %956 = vmatpush1.bf16.xpose.msra.mxu0 0
        %957 = vmatprep.subr.bf16.mxu0 0
        %958 = vmatpush1.bf16.xpose.msra.mxu0 0
        %959 = vmatprep.subr.bf16.mxu0 0
        %960 = vmatpush1.bf16.xpose.msra.mxu0 0
        %961 = vmatprep.subr.bf16.mxu0 0
        %962 = vmatpush1.bf16.xpose.msra.mxu0 0
        %963 = vmatprep.subr.bf16.mxu0 0
        %964 = vmatpush1.bf16.xpose.msra.mxu0 0
        %965 = vmatprep.mubr.bf16.mxu0 0
        %966 = vmatmul.mubr.bf16.gmra.mrb[0].mxu0 %v888
        %v967 = vpop.f32.mrb[0].mxu0
        %v968 = vadd.f32 0.0, %v967
        %v969 = vpop.f32.mrb[0].mxu0
        %v970 = vpop.f32.mrb[0].mxu0
        %v971 = vpop.f32.mrb[0].mxu0
        %972 = vdwg.mxu0
        %v973 = vmul.f32 %v928, 0.25
        %v974 = vmul.f32 %v968, 0.25
        %v975 = vadd.f32 %v973, %v520
        %v976 = vadd.f32 %v974, %v520
        %vm977 = vcmask 64512
        %v978 = vsel %vm977, %v975, -inf
        %979 = vmax.xlane.f32.xlu0 %v978
        %v980 = vpop.xlane.xlu0 %979
        %v981 = vsel %vm977, %v976, -inf
        %982 = vmax.xlane.f32.xlu0 %v981
        %v983 = vpop.xlane.xlu0 %982
        %v984 = vsub.f32 %v975, %v980
        %v985 = vsub.f32 %v976, %v983
        %v986 = vmul.f32 %v984, 1.442695
        %v987 = vpow.pop %v986
        %v988 = vmul.f32 %v985, 1.442695
        %v989 = vpow.pop %v988
        %v990 = vsel %vm977, %v987, 0.0
        %991 = vadd.xlane.f32.xlu0 %v990
        %v992 = vpop.xlane.xlu0 %991
        %v993 = vsel %vm977, %v989, 0.0
        %994 = vadd.xlane.f32.xlu0 %v993
        %v995 = vpop.xlane.xlu0 %994
        %v996 = vrcp.pop %v992
        %v997 = vmul.f32 %v987, %v996
        %v998 = vrcp.pop %v995
        %v999 = vmul.f32 %v989, %v998
        %v1000 = vpack.c.bf16 %v997, %v997
        %v1001 = vpack.c.bf16 %v999, %v999
        %v1003 = vsel %vm977, %v1000, 0
        %vm1005 = vcmask 1043456
        %v1007 = vsel %vm1005, %v891, 0
        %1009 = vmatprep.subr.bf16.mxu0 0
        %1010 = vmatpush1.bf16.msra.mxu0 %v1007
        %1011 = vmatprep.subr.bf16.mxu0 0
        %1012 = vmatpush1.bf16.msra.mxu0 0
        %1013 = vmatprep.subr.bf16.mxu0 0
        %1014 = vmatpush1.bf16.msra.mxu0 0
        %1015 = vmatprep.subr.bf16.mxu0 0
        %1016 = vmatpush1.bf16.msra.mxu0 0
        %1017 = vmatprep.subr.bf16.mxu0 0
        %1018 = vmatpush1.bf16.msra.mxu0 0
        %1019 = vmatprep.subr.bf16.mxu0 0
        %1020 = vmatpush1.bf16.msra.mxu0 0
        %1021 = vmatprep.subr.bf16.mxu0 0
        %1022 = vmatpush1.bf16.msra.mxu0 0
        %1023 = vmatprep.subr.bf16.mxu0 0
        %1024 = vmatpush1.bf16.msra.mxu0 0
        %1025 = vmatprep.subr.bf16.mxu0 0
        %1026 = vmatpush1.bf16.msra.mxu0 0
        %1027 = vmatprep.subr.bf16.mxu0 0
        %1028 = vmatpush1.bf16.msra.mxu0 0
        %1029 = vmatprep.subr.bf16.mxu0 0
        %1030 = vmatpush1.bf16.msra.mxu0 0
        %1031 = vmatprep.subr.bf16.mxu0 0
        %1032 = vmatpush1.bf16.msra.mxu0 0
        %1033 = vmatprep.subr.bf16.mxu0 0
        %1034 = vmatpush1.bf16.msra.mxu0 0
        %1035 = vmatprep.subr.bf16.mxu0 0
        %1036 = vmatpush1.bf16.msra.mxu0 0
        %1037 = vmatprep.subr.bf16.mxu0 0
        %1038 = vmatpush1.bf16.msra.mxu0 0
        %1039 = vmatprep.subr.bf16.mxu0 0
        %1040 = vmatpush1.bf16.msra.mxu0 0
        %1041 = vmatprep.mubr.bf16.mxu0 0
        %1042 = vmatmul.mubr.bf16.gmra.mrb[0].mxu0 %v1003
        %v1043 = vpop.f32.mrb[0].mxu0
        %v1044 = vadd.f32 0.0, %v1043
        %v1045 = vpop.f32.mrb[0].mxu0
        %v1046 = vpop.f32.mrb[0].mxu0
        %v1047 = vpop.f32.mrb[0].mxu0
        %1048 = vdwg.mxu0
        %v1050 = vsel %vm977, %v1001, 0
        %v1053 = vsel %vm1005, %v892, 0
        %1055 = vmatprep.subr.bf16.mxu0 0
        %1056 = vmatpush1.bf16.msra.mxu0 %v1053
        %1057 = vmatprep.subr.bf16.mxu0 0
        %1058 = vmatpush1.bf16.msra.mxu0 0
        %1059 = vmatprep.subr.bf16.mxu0 0
        %1060 = vmatpush1.bf16.msra.mxu0 0
        %1061 = vmatprep.subr.bf16.mxu0 0
        %1062 = vmatpush1.bf16.msra.mxu0 0
        %1063 = vmatprep.subr.bf16.mxu0 0
        %1064 = vmatpush1.bf16.msra.mxu0 0
        %1065 = vmatprep.subr.bf16.mxu0 0
        %1066 = vmatpush1.bf16.msra.mxu0 0
        %1067 = vmatprep.subr.bf16.mxu0 0
        %1068 = vmatpush1.bf16.msra.mxu0 0
        %1069 = vmatprep.subr.bf16.mxu0 0
        %1070 = vmatpush1.bf16.msra.mxu0 0
        %1071 = vmatprep.subr.bf16.mxu0 0
        %1072 = vmatpush1.bf16.msra.mxu0 0
        %1073 = vmatprep.subr.bf16.mxu0 0
        %1074 = vmatpush1.bf16.msra.mxu0 0
        %1075 = vmatprep.subr.bf16.mxu0 0
        %1076 = vmatpush1.bf16.msra.mxu0 0
        %1077 = vmatprep.subr.bf16.mxu0 0
        %1078 = vmatpush1.bf16.msra.mxu0 0
        %1079 = vmatprep.subr.bf16.mxu0 0
        %1080 = vmatpush1.bf16.msra.mxu0 0
        %1081 = vmatprep.subr.bf16.mxu0 0
        %1082 = vmatpush1.bf16.msra.mxu0 0
        %1083 = vmatprep.subr.bf16.mxu0 0
        %1084 = vmatpush1.bf16.msra.mxu0 0
        %1085 = vmatprep.subr.bf16.mxu0 0
        %1086 = vmatpush1.bf16.msra.mxu0 0
        %1087 = vmatprep.mubr.bf16.mxu0 0
        %1088 = vmatmul.mubr.bf16.gmra.mrb[0].mxu0 %v1050
        %v1089 = vpop.f32.mrb[0].mxu0
        %v1090 = vadd.f32 0.0, %v1089
        %v1091 = vpop.f32.mrb[0].mxu0
        %v1092 = vpop.f32.mrb[0].mxu0
        %v1093 = vpop.f32.mrb[0].mxu0
        %1094 = vdwg.mxu0
        %v1095 = vpack.c.bf16 %v1090, %v1044
        %v1096 = vld [vmem:[%s497] sm:$0xf]
        %v1097 = vld [vmem:[%s497 + $0x4] sm:$0xf]
        %v1098 = vld [vmem:[%s497 + $0x8] sm:$0xf]
        %v1099 = vld [vmem:[%s497 + $0xc] sm:$0xf]
        %v1100 = vld [vmem:[%s497 + $0x10] sm:$0xf]
        %v1101 = vld [vmem:[%s497 + $0x14] sm:$0xf]
        %v1102 = vld [vmem:[%s497 + $0x18] sm:$0xf]
        %v1103 = vld [vmem:[%s497 + $0x1c] sm:$0xf]
        %v1104 = vld [vmem:[%s497 + $0x20] sm:$0xf]
        %v1105 = vld [vmem:[%s497 + $0x24] sm:$0xf]
        %v1106 = vld [vmem:[%s497 + $0x28] sm:$0xf]
        %v1107 = vld [vmem:[%s497 + $0x2c] sm:$0xf]
        %v1108 = vld [vmem:[%s497 + $0x30] sm:$0xf]
        %v1109 = vld [vmem:[%s497 + $0x34] sm:$0xf]
        %v1110 = vld [vmem:[%s497 + $0x38] sm:$0xf]
        %v1111 = vld [vmem:[%s497 + $0x3c] sm:$0xf]
        %s1112 = scalar_lea.vmem %s409, 64 [#allocation4]
        %v1113 = vld [vmem:[%s1112] sm:$0xf]
        %v1114 = vld [vmem:[%s1112 + $0x4] sm:$0xf]
        %v1115 = vld [vmem:[%s1112 + $0x8] sm:$0xf]
        %v1116 = vld [vmem:[%s1112 + $0xc] sm:$0xf]
        %v1117 = vld [vmem:[%s1112 + $0x10] sm:$0xf]
        %v1118 = vld [vmem:[%s1112 + $0x14] sm:$0xf]
        %v1119 = vld [vmem:[%s1112 + $0x18] sm:$0xf]
        %v1120 = vld [vmem:[%s1112 + $0x1c] sm:$0xf]
        %v1121 = vld [vmem:[%s1112 + $0x20] sm:$0xf]
        %v1122 = vld [vmem:[%s1112 + $0x24] sm:$0xf]
        %v1123 = vld [vmem:[%s1112 + $0x28] sm:$0xf]
        %v1124 = vld [vmem:[%s1112 + $0x2c] sm:$0xf]
        %v1125 = vld [vmem:[%s1112 + $0x30] sm:$0xf]
        %v1126 = vld [vmem:[%s1112 + $0x34] sm:$0xf]
        %v1127 = vld [vmem:[%s1112 + $0x38] sm:$0xf]
        %v1128 = vld [vmem:[%s1112 + $0x3c] sm:$0xf]
        %v1129 = vlaneseq
        %v1130 = vshrl.u32 %v1129, 7
        %v1131 = vsub.s32 4, %v1130
        %v1132 = vrot.slane %v515, %v1131
        %v1149 = vunpack.c.l.b16 %v1113
        %v1150 = vunpack.c.l.b16 %v1114
        %v1151 = vunpack.c.l.b16 %v1115
        %v1152 = vunpack.c.l.b16 %v1116
        %v1153 = vunpack.c.l.b16 %v1117
        %v1154 = vunpack.c.l.b16 %v1118
        %v1155 = vunpack.c.l.b16 %v1119
        %v1156 = vunpack.c.l.b16 %v1120
        %v1157 = vunpack.c.l.b16 %v1121
        %v1158 = vunpack.c.l.b16 %v1122
        %v1159 = vunpack.c.l.b16 %v1123
        %v1160 = vunpack.c.l.b16 %v1124
        %v1161 = vunpack.c.l.b16 %v1125
        %v1162 = vunpack.c.l.b16 %v1126
        %v1163 = vunpack.c.l.b16 %v1127
        %v1164 = vunpack.c.l.b16 %v1128
        %v1165 = vpack.c.b16 %v1150, %v1149
        %v1166 = vpack.c.b16 %v1152, %v1151
        %v1167 = vpack.c.b16 %v1154, %v1153
        %v1168 = vpack.c.b16 %v1156, %v1155
        %v1169 = vpack.c.b16 %v1158, %v1157
        %v1170 = vpack.c.b16 %v1160, %v1159
        %v1171 = vpack.c.b16 %v1162, %v1161
        %v1172 = vpack.c.b16 %v1164, %v1163
        %1181 = vmatprep.subr.bf16.mxu0 0
        %1182 = vmatpush1.bf16.msra.mxu0 %v1165
        %1183 = vmatprep.subr.bf16.mxu0 0
        %1184 = vmatpush1.bf16.msra.mxu0 %v1166
        %1185 = vmatprep.subr.bf16.mxu0 0
        %1186 = vmatpush1.bf16.msra.mxu0 %v1167
        %1187 = vmatprep.subr.bf16.mxu0 0
        %1188 = vmatpush1.bf16.msra.mxu0 %v1168
        %1189 = vmatprep.subr.bf16.mxu0 0
        %1190 = vmatpush1.bf16.msra.mxu0 %v1169
        %1191 = vmatprep.subr.bf16.mxu0 0
        %1192 = vmatpush1.bf16.msra.mxu0 %v1170
        %1193 = vmatprep.subr.bf16.mxu0 0
        %1194 = vmatpush1.bf16.msra.mxu0 %v1171
        %1195 = vmatprep.subr.bf16.mxu0 0
        %1196 = vmatpush1.bf16.msra.mxu0 %v1172
        %1197 = vmatprep.subr.bf16.mxu0 0
        %1198 = vmatpush1.bf16.msra.mxu0 0
        %1199 = vmatprep.subr.bf16.mxu0 0
        %1200 = vmatpush1.bf16.msra.mxu0 0
        %1201 = vmatprep.subr.bf16.mxu0 0
        %1202 = vmatpush1.bf16.msra.mxu0 0
        %1203 = vmatprep.subr.bf16.mxu0 0
        %1204 = vmatpush1.bf16.msra.mxu0 0
        %1205 = vmatprep.subr.bf16.mxu0 0
        %1206 = vmatpush1.bf16.msra.mxu0 0
        %1207 = vmatprep.subr.bf16.mxu0 0
        %1208 = vmatpush1.bf16.msra.mxu0 0
        %1209 = vmatprep.subr.bf16.mxu0 0
        %1210 = vmatpush1.bf16.msra.mxu0 0
        %1211 = vmatprep.subr.bf16.mxu0 0
        %1212 = vmatpush1.bf16.msra.mxu0 0
        %1213 = vmatprep.mubr.bf16.mxu0 0
        %1214 = vmatmul.mubr.bf16.gmra.mrb[0].mxu0 %v557
        %v1215 = vpop.f32.mrb[0].mxu0
        %v1216 = vadd.f32 %v1132, %v1215
        %v1217 = vpop.f32.mrb[0].mxu0
        %v1218 = vpop.f32.mrb[0].mxu0
        %v1219 = vadd.f32 %v1132, %v1218
        %v1220 = vpop.f32.mrb[0].mxu0
        %1221 = vdwg.mxu0
        %s1222 = scalar_lea.vmem %s409, 192 [#allocation4]
        %v1223 = vld [vmem:[%s1222] sm:$0xf]
        %v1224 = vld [vmem:[%s1222 + $0x4] sm:$0xf]
        %v1225 = vld [vmem:[%s1222 + $0x8] sm:$0xf]
        %v1226 = vld [vmem:[%s1222 + $0xc] sm:$0xf]
        %v1227 = vld [vmem:[%s1222 + $0x10] sm:$0xf]
        %v1228 = vld [vmem:[%s1222 + $0x14] sm:$0xf]
        %v1229 = vld [vmem:[%s1222 + $0x18] sm:$0xf]
        %v1230 = vld [vmem:[%s1222 + $0x1c] sm:$0xf]
        %v1231 = vld [vmem:[%s1222 + $0x20] sm:$0xf]
        %v1232 = vld [vmem:[%s1222 + $0x24] sm:$0xf]
        %v1233 = vld [vmem:[%s1222 + $0x28] sm:$0xf]
        %v1234 = vld [vmem:[%s1222 + $0x2c] sm:$0xf]
        %v1235 = vld [vmem:[%s1222 + $0x30] sm:$0xf]
        %v1236 = vld [vmem:[%s1222 + $0x34] sm:$0xf]
        %v1237 = vld [vmem:[%s1222 + $0x38] sm:$0xf]
        %v1238 = vld [vmem:[%s1222 + $0x3c] sm:$0xf]
        %v1239 = vlaneseq
        %v1240 = vshrl.u32 %v1239, 7
        %v1241 = vsub.s32 5, %v1240
        %v1242 = vrot.slane %v515, %v1241
        %v1259 = vunpack.c.l.b16 %v1223
        %v1260 = vunpack.c.l.b16 %v1224
        %v1261 = vunpack.c.l.b16 %v1225
        %v1262 = vunpack.c.l.b16 %v1226
        %v1263 = vunpack.c.l.b16 %v1227
        %v1264 = vunpack.c.l.b16 %v1228
        %v1265 = vunpack.c.l.b16 %v1229
        %v1266 = vunpack.c.l.b16 %v1230
        %v1267 = vunpack.c.l.b16 %v1231
        %v1268 = vunpack.c.l.b16 %v1232
        %v1269 = vunpack.c.l.b16 %v1233
        %v1270 = vunpack.c.l.b16 %v1234
        %v1271 = vunpack.c.l.b16 %v1235
        %v1272 = vunpack.c.l.b16 %v1236
        %v1273 = vunpack.c.l.b16 %v1237
        %v1274 = vunpack.c.l.b16 %v1238
        %v1275 = vpack.c.b16 %v1260, %v1259
        %v1276 = vpack.c.b16 %v1262, %v1261
        %v1277 = vpack.c.b16 %v1264, %v1263
        %v1278 = vpack.c.b16 %v1266, %v1265
        %v1279 = vpack.c.b16 %v1268, %v1267
        %v1280 = vpack.c.b16 %v1270, %v1269
        %v1281 = vpack.c.b16 %v1272, %v1271
        %v1282 = vpack.c.b16 %v1274, %v1273
        %1291 = vmatprep.subr.bf16.mxu0 0
        %1292 = vmatpush1.bf16.msra.mxu0 %v1275
        %1293 = vmatprep.subr.bf16.mxu0 0
        %1294 = vmatpush1.bf16.msra.mxu0 %v1276
        %1295 = vmatprep.subr.bf16.mxu0 0
        %1296 = vmatpush1.bf16.msra.mxu0 %v1277
        %1297 = vmatprep.subr.bf16.mxu0 0
        %1298 = vmatpush1.bf16.msra.mxu0 %v1278
        %1299 = vmatprep.subr.bf16.mxu0 0
        %1300 = vmatpush1.bf16.msra.mxu0 %v1279
        %1301 = vmatprep.subr.bf16.mxu0 0
        %1302 = vmatpush1.bf16.msra.mxu0 %v1280
        %1303 = vmatprep.subr.bf16.mxu0 0
        %1304 = vmatpush1.bf16.msra.mxu0 %v1281
        %1305 = vmatprep.subr.bf16.mxu0 0
        %1306 = vmatpush1.bf16.msra.mxu0 %v1282
        %1307 = vmatprep.subr.bf16.mxu0 0
        %1308 = vmatpush1.bf16.msra.mxu0 0
        %1309 = vmatprep.subr.bf16.mxu0 0
        %1310 = vmatpush1.bf16.msra.mxu0 0
        %1311 = vmatprep.subr.bf16.mxu0 0
        %1312 = vmatpush1.bf16.msra.mxu0 0
        %1313 = vmatprep.subr.bf16.mxu0 0
        %1314 = vmatpush1.bf16.msra.mxu0 0
        %1315 = vmatprep.subr.bf16.mxu0 0
        %1316 = vmatpush1.bf16.msra.mxu0 0
        %1317 = vmatprep.subr.bf16.mxu0 0
        %1318 = vmatpush1.bf16.msra.mxu0 0
        %1319 = vmatprep.subr.bf16.mxu0 0
        %1320 = vmatpush1.bf16.msra.mxu0 0
        %1321 = vmatprep.subr.bf16.mxu0 0
        %1322 = vmatpush1.bf16.msra.mxu0 0
        %1323 = vmatprep.mubr.bf16.mxu0 0
        %1324 = vmatmul.mubr.bf16.gmra.mrb[0].mxu0 %v557
        %v1325 = vpop.f32.mrb[0].mxu0
        %v1326 = vadd.f32 %v1242, %v1325
        %v1327 = vpop.f32.mrb[0].mxu0
        %v1328 = vpop.f32.mrb[0].mxu0
        %v1329 = vadd.f32 %v1242, %v1328
        %v1330 = vpop.f32.mrb[0].mxu0
        %1331 = vdwg.mxu0
        %s1332 = scalar_lea.vmem %s409, 320 [#allocation4]
        %v1333 = vld [vmem:[%s1332] sm:$0xf]
        %v1334 = vld [vmem:[%s1332 + $0x4] sm:$0xf]
        %v1335 = vld [vmem:[%s1332 + $0x8] sm:$0xf]
        %v1336 = vld [vmem:[%s1332 + $0xc] sm:$0xf]
        %v1337 = vld [vmem:[%s1332 + $0x10] sm:$0xf]
        %v1338 = vld [vmem:[%s1332 + $0x14] sm:$0xf]
        %v1339 = vld [vmem:[%s1332 + $0x18] sm:$0xf]
        %v1340 = vld [vmem:[%s1332 + $0x1c] sm:$0xf]
        %v1341 = vld [vmem:[%s1332 + $0x20] sm:$0xf]
        %v1342 = vld [vmem:[%s1332 + $0x24] sm:$0xf]
        %v1343 = vld [vmem:[%s1332 + $0x28] sm:$0xf]
        %v1344 = vld [vmem:[%s1332 + $0x2c] sm:$0xf]
        %v1345 = vld [vmem:[%s1332 + $0x30] sm:$0xf]
        %v1346 = vld [vmem:[%s1332 + $0x34] sm:$0xf]
        %v1347 = vld [vmem:[%s1332 + $0x38] sm:$0xf]
        %v1348 = vld [vmem:[%s1332 + $0x3c] sm:$0xf]
        %v1349 = vlaneseq
        %v1350 = vshrl.u32 %v1349, 7
        %v1351 = vsub.s32 6, %v1350
        %v1352 = vrot.slane %v515, %v1351
        %v1369 = vunpack.c.l.b16 %v1333
        %v1370 = vunpack.c.l.b16 %v1334
        %v1371 = vunpack.c.l.b16 %v1335
        %v1372 = vunpack.c.l.b16 %v1336
        %v1373 = vunpack.c.l.b16 %v1337
        %v1374 = vunpack.c.l.b16 %v1338
        %v1375 = vunpack.c.l.b16 %v1339
        %v1376 = vunpack.c.l.b16 %v1340
        %v1377 = vunpack.c.l.b16 %v1341
        %v1378 = vunpack.c.l.b16 %v1342
        %v1379 = vunpack.c.l.b16 %v1343
        %v1380 = vunpack.c.l.b16 %v1344
        %v1381 = vunpack.c.l.b16 %v1345
        %v1382 = vunpack.c.l.b16 %v1346
        %v1383 = vunpack.c.l.b16 %v1347
        %v1384 = vunpack.c.l.b16 %v1348
        %v1385 = vpack.c.b16 %v1370, %v1369
        %v1386 = vpack.c.b16 %v1372, %v1371
        %v1387 = vpack.c.b16 %v1374, %v1373
        %v1388 = vpack.c.b16 %v1376, %v1375
        %v1389 = vpack.c.b16 %v1378, %v1377
        %v1390 = vpack.c.b16 %v1380, %v1379
        %v1391 = vpack.c.b16 %v1382, %v1381
        %v1392 = vpack.c.b16 %v1384, %v1383
        %1401 = vmatprep.subr.bf16.mxu0 0
        %1402 = vmatpush1.bf16.msra.mxu0 %v1385
        %1403 = vmatprep.subr.bf16.mxu0 0
        %1404 = vmatpush1.bf16.msra.mxu0 %v1386
        %1405 = vmatprep.subr.bf16.mxu0 0
        %1406 = vmatpush1.bf16.msra.mxu0 %v1387
        %1407 = vmatprep.subr.bf16.mxu0 0
        %1408 = vmatpush1.bf16.msra.mxu0 %v1388
        %1409 = vmatprep.subr.bf16.mxu0 0
        %1410 = vmatpush1.bf16.msra.mxu0 %v1389
        %1411 = vmatprep.subr.bf16.mxu0 0
        %1412 = vmatpush1.bf16.msra.mxu0 %v1390
        %1413 = vmatprep.subr.bf16.mxu0 0
        %1414 = vmatpush1.bf16.msra.mxu0 %v1391
        %1415 = vmatprep.subr.bf16.mxu0 0
        %1416 = vmatpush1.bf16.msra.mxu0 %v1392
        %1417 = vmatprep.subr.bf16.mxu0 0
        %1418 = vmatpush1.bf16.msra.mxu0 0
        %1419 = vmatprep.subr.bf16.mxu0 0
        %1420 = vmatpush1.bf16.msra.mxu0 0
        %1421 = vmatprep.subr.bf16.mxu0 0
        %1422 = vmatpush1.bf16.msra.mxu0 0
        %1423 = vmatprep.subr.bf16.mxu0 0
        %1424 = vmatpush1.bf16.msra.mxu0 0
        %1425 = vmatprep.subr.bf16.mxu0 0
        %1426 = vmatpush1.bf16.msra.mxu0 0
        %1427 = vmatprep.subr.bf16.mxu0 0
        %1428 = vmatpush1.bf16.msra.mxu0 0
        %1429 = vmatprep.subr.bf16.mxu0 0
        %1430 = vmatpush1.bf16.msra.mxu0 0
        %1431 = vmatprep.subr.bf16.mxu0 0
        %1432 = vmatpush1.bf16.msra.mxu0 0
        %1433 = vmatprep.mubr.bf16.mxu0 0
        %1434 = vmatmul.mubr.bf16.gmra.mrb[0].mxu0 %v557
        %v1435 = vpop.f32.mrb[0].mxu0
        %v1436 = vadd.f32 %v1352, %v1435
        %v1437 = vpop.f32.mrb[0].mxu0
        %v1438 = vpop.f32.mrb[0].mxu0
        %v1439 = vadd.f32 %v1352, %v1438
        %v1440 = vpop.f32.mrb[0].mxu0
        %1441 = vdwg.mxu0
        %v1442 = vpack.c.bf16 %v1216, %v1216
        %v1443 = vpack.c.bf16 %v1219, %v1219
        %v1444 = vpack.c.bf16 %v1326, %v1326
        %v1445 = vpack.c.bf16 %v1329, %v1329
        %v1446 = vpack.c.bf16 %v1436, %v1436
        %v1447 = vpack.c.bf16 %v1439, %v1439
        %1448 = vmatprep.subr.bf16.mxu0 0
        %1449 = vmatpush1.bf16.xpose.msra.mxu0 %v1444
        %1450 = vmatprep.subr.bf16.mxu0 0
        %1451 = vmatpush1.bf16.xpose.msra.mxu0 0
        %1452 = vmatprep.subr.bf16.mxu0 0
        %1453 = vmatpush1.bf16.xpose.msra.mxu0 0
        %1454 = vmatprep.subr.bf16.mxu0 0
        %1455 = vmatpush1.bf16.xpose.msra.mxu0 0
        %1456 = vmatprep.subr.bf16.mxu0 0
        %1457 = vmatpush1.bf16.xpose.msra.mxu0 0
        %1458 = vmatprep.subr.bf16.mxu0 0
        %1459 = vmatpush1.bf16.xpose.msra.mxu0 0
        %1460 = vmatprep.subr.bf16.mxu0 0
        %1461 = vmatpush1.bf16.xpose.msra.mxu0 0
        %1462 = vmatprep.subr.bf16.mxu0 0
        %1463 = vmatpush1.bf16.xpose.msra.mxu0 0
        %1464 = vmatprep.subr.bf16.mxu0 0
        %1465 = vmatpush1.bf16.xpose.msra.mxu0 0
        %1466 = vmatprep.subr.bf16.mxu0 0
        %1467 = vmatpush1.bf16.xpose.msra.mxu0 0
        %1468 = vmatprep.subr.bf16.mxu0 0
        %1469 = vmatpush1.bf16.xpose.msra.mxu0 0
        %1470 = vmatprep.subr.bf16.mxu0 0
        %1471 = vmatpush1.bf16.xpose.msra.mxu0 0
        %1472 = vmatprep.subr.bf16.mxu0 0
        %1473 = vmatpush1.bf16.xpose.msra.mxu0 0
        %1474 = vmatprep.subr.bf16.mxu0 0
        %1475 = vmatpush1.bf16.xpose.msra.mxu0 0
        %1476 = vmatprep.subr.bf16.mxu0 0
        %1477 = vmatpush1.bf16.xpose.msra.mxu0 0
        %1478 = vmatprep.subr.bf16.mxu0 0
        %1479 = vmatpush1.bf16.xpose.msra.mxu0 0
        %1480 = vmatprep.mubr.bf16.mxu0 0
        %1481 = vmatmul.mubr.bf16.gmra.mrb[0].mxu0 %v1442
        %v1482 = vpop.f32.mrb[0].mxu0
        %v1483 = vadd.f32 0.0, %v1482
        %v1484 = vpop.f32.mrb[0].mxu0
        %v1485 = vpop.f32.mrb[0].mxu0
        %v1486 = vpop.f32.mrb[0].mxu0
        %1487 = vdwg.mxu0
        %1488 = vmatprep.subr.bf16.mxu0 0
        %1489 = vmatpush1.bf16.xpose.msra.mxu0 %v1445
        %1490 = vmatprep.subr.bf16.mxu0 0
        %1491 = vmatpush1.bf16.xpose.msra.mxu0 0
        %1492 = vmatprep.subr.bf16.mxu0 0
        %1493 = vmatpush1.bf16.xpose.msra.mxu0 0
        %1494 = vmatprep.subr.bf16.mxu0 0
        %1495 = vmatpush1.bf16.xpose.msra.mxu0 0
        %1496 = vmatprep.subr.bf16.mxu0 0
        %1497 = vmatpush1.bf16.xpose.msra.mxu0 0
        %1498 = vmatprep.subr.bf16.mxu0 0
        %1499 = vmatpush1.bf16.xpose.msra.mxu0 0
        %1500 = vmatprep.subr.bf16.mxu0 0
        %1501 = vmatpush1.bf16.xpose.msra.mxu0 0
        %1502 = vmatprep.subr.bf16.mxu0 0
        %1503 = vmatpush1.bf16.xpose.msra.mxu0 0
        %1504 = vmatprep.subr.bf16.mxu0 0
        %1505 = vmatpush1.bf16.xpose.msra.mxu0 0
        %1506 = vmatprep.subr.bf16.mxu0 0
        %1507 = vmatpush1.bf16.xpose.msra.mxu0 0
        %1508 = vmatprep.subr.bf16.mxu0 0
        %1509 = vmatpush1.bf16.xpose.msra.mxu0 0
        %1510 = vmatprep.subr.bf16.mxu0 0
        %1511 = vmatpush1.bf16.xpose.msra.mxu0 0
        %1512 = vmatprep.subr.bf16.mxu0 0
        %1513 = vmatpush1.bf16.xpose.msra.mxu0 0
        %1514 = vmatprep.subr.bf16.mxu0 0
        %1515 = vmatpush1.bf16.xpose.msra.mxu0 0
        %1516 = vmatprep.subr.bf16.mxu0 0
        %1517 = vmatpush1.bf16.xpose.msra.mxu0 0
        %1518 = vmatprep.subr.bf16.mxu0 0
        %1519 = vmatpush1.bf16.xpose.msra.mxu0 0
        %1520 = vmatprep.mubr.bf16.mxu0 0
        %1521 = vmatmul.mubr.bf16.gmra.mrb[0].mxu0 %v1443
        %v1522 = vpop.f32.mrb[0].mxu0
        %v1523 = vadd.f32 0.0, %v1522
        %v1524 = vpop.f32.mrb[0].mxu0
        %v1525 = vpop.f32.mrb[0].mxu0
        %v1526 = vpop.f32.mrb[0].mxu0
        %1527 = vdwg.mxu0
        %v1528 = vmul.f32 %v1483, 0.25
        %v1529 = vmul.f32 %v1523, 0.25
        %v1530 = vadd.f32 %v1528, %v520
        %v1531 = vadd.f32 %v1529, %v520
        %v1532 = vsel %vm977, %v1530, -inf
        %1533 = vmax.xlane.f32.xlu0 %v1532
        %v1534 = vpop.xlane.xlu0 %1533
        %v1535 = vsel %vm977, %v1531, -inf
        %1536 = vmax.xlane.f32.xlu0 %v1535
        %v1537 = vpop.xlane.xlu0 %1536
        %v1538 = vsub.f32 %v1530, %v1534
        %v1539 = vsub.f32 %v1531, %v1537
        %v1540 = vmul.f32 %v1538, 1.442695
        %v1541 = vpow.pop %v1540
        %v1542 = vmul.f32 %v1539, 1.442695
        %v1543 = vpow.pop %v1542
        %v1544 = vsel %vm977, %v1541, 0.0
        %1545 = vadd.xlane.f32.xlu0 %v1544
        %v1546 = vpop.xlane.xlu0 %1545
        %v1547 = vsel %vm977, %v1543, 0.0
        %1548 = vadd.xlane.f32.xlu0 %v1547
        %v1549 = vpop.xlane.xlu0 %1548
        %v1550 = vrcp.pop %v1546
        %v1551 = vmul.f32 %v1541, %v1550
        %v1552 = vrcp.pop %v1549
        %v1553 = vmul.f32 %v1543, %v1552
        %v1554 = vpack.c.bf16 %v1551, %v1551
        %v1555 = vpack.c.bf16 %v1553, %v1553
        %v1557 = vsel %vm977, %v1554, 0
        %v1560 = vsel %vm1005, %v1446, 0
        %1562 = vmatprep.subr.bf16.mxu0 0
        %1563 = vmatpush1.bf16.msra.mxu0 %v1560
        %1564 = vmatprep.subr.bf16.mxu0 0
        %1565 = vmatpush1.bf16.msra.mxu0 0
        %1566 = vmatprep.subr.bf16.mxu0 0
        %1567 = vmatpush1.bf16.msra.mxu0 0
        %1568 = vmatprep.subr.bf16.mxu0 0
        %1569 = vmatpush1.bf16.msra.mxu0 0
        %1570 = vmatprep.subr.bf16.mxu0 0
        %1571 = vmatpush1.bf16.msra.mxu0 0
        %1572 = vmatprep.subr.bf16.mxu0 0
        %1573 = vmatpush1.bf16.msra.mxu0 0
        %1574 = vmatprep.subr.bf16.mxu0 0
        %1575 = vmatpush1.bf16.msra.mxu0 0
        %1576 = vmatprep.subr.bf16.mxu0 0
        %1577 = vmatpush1.bf16.msra.mxu0 0
        %1578 = vmatprep.subr.bf16.mxu0 0
        %1579 = vmatpush1.bf16.msra.mxu0 0
        %1580 = vmatprep.subr.bf16.mxu0 0
        %1581 = vmatpush1.bf16.msra.mxu0 0
        %1582 = vmatprep.subr.bf16.mxu0 0
        %1583 = vmatpush1.bf16.msra.mxu0 0
        %1584 = vmatprep.subr.bf16.mxu0 0
        %1585 = vmatpush1.bf16.msra.mxu0 0
        %1586 = vmatprep.subr.bf16.mxu0 0
        %1587 = vmatpush1.bf16.msra.mxu0 0
        %1588 = vmatprep.subr.bf16.mxu0 0
        %1589 = vmatpush1.bf16.msra.mxu0 0
        %1590 = vmatprep.subr.bf16.mxu0 0
        %1591 = vmatpush1.bf16.msra.mxu0 0
        %1592 = vmatprep.subr.bf16.mxu0 0
        %1593 = vmatpush1.bf16.msra.mxu0 0
        %1594 = vmatprep.mubr.bf16.mxu0 0
        %1595 = vmatmul.mubr.bf16.gmra.mrb[0].mxu0 %v1557
        %v1596 = vpop.f32.mrb[0].mxu0
        %v1597 = vadd.f32 0.0, %v1596
        %v1598 = vpop.f32.mrb[0].mxu0
        %v1599 = vpop.f32.mrb[0].mxu0
        %v1600 = vpop.f32.mrb[0].mxu0
        %1601 = vdwg.mxu0
        %v1603 = vsel %vm977, %v1555, 0
        %v1606 = vsel %vm1005, %v1447, 0
        %1608 = vmatprep.subr.bf16.mxu0 0
        %1609 = vmatpush1.bf16.msra.mxu0 %v1606
        %1610 = vmatprep.subr.bf16.mxu0 0
        %1611 = vmatpush1.bf16.msra.mxu0 0
        %1612 = vmatprep.subr.bf16.mxu0 0
        %1613 = vmatpush1.bf16.msra.mxu0 0
        %1614 = vmatprep.subr.bf16.mxu0 0
        %1615 = vmatpush1.bf16.msra.mxu0 0
        %1616 = vmatprep.subr.bf16.mxu0 0
        %1617 = vmatpush1.bf16.msra.mxu0 0
        %1618 = vmatprep.subr.bf16.mxu0 0
        %1619 = vmatpush1.bf16.msra.mxu0 0
        %1620 = vmatprep.subr.bf16.mxu0 0
        %1621 = vmatpush1.bf16.msra.mxu0 0
        %1622 = vmatprep.subr.bf16.mxu0 0
        %1623 = vmatpush1.bf16.msra.mxu0 0
        %1624 = vmatprep.subr.bf16.mxu0 0
        %1625 = vmatpush1.bf16.msra.mxu0 0
        %1626 = vmatprep.subr.bf16.mxu0 0
        %1627 = vmatpush1.bf16.msra.mxu0 0
        %1628 = vmatprep.subr.bf16.mxu0 0
        %1629 = vmatpush1.bf16.msra.mxu0 0
        %1630 = vmatprep.subr.bf16.mxu0 0
        %1631 = vmatpush1.bf16.msra.mxu0 0
        %1632 = vmatprep.subr.bf16.mxu0 0
        %1633 = vmatpush1.bf16.msra.mxu0 0
        %1634 = vmatprep.subr.bf16.mxu0 0
        %1635 = vmatpush1.bf16.msra.mxu0 0
        %1636 = vmatprep.subr.bf16.mxu0 0
        %1637 = vmatpush1.bf16.msra.mxu0 0
        %1638 = vmatprep.subr.bf16.mxu0 0
        %1639 = vmatpush1.bf16.msra.mxu0 0
        %1640 = vmatprep.mubr.bf16.mxu0 0
        %1641 = vmatmul.mubr.bf16.gmra.mrb[0].mxu0 %v1603
        %v1642 = vpop.f32.mrb[0].mxu0
        %v1643 = vadd.f32 0.0, %v1642
        %v1644 = vpop.f32.mrb[0].mxu0
        %v1645 = vpop.f32.mrb[0].mxu0
        %v1646 = vpop.f32.mrb[0].mxu0
        %1647 = vdwg.mxu0
        %v1648 = vpack.c.bf16 %v1643, %v1597
        %s1649 = scalar_lea.vmem %s497, 64
        %v1650 = vld [vmem:[%s1649] sm:$0xf]
        %v1651 = vld [vmem:[%s1649 + $0x4] sm:$0xf]
        %v1652 = vld [vmem:[%s1649 + $0x8] sm:$0xf]
        %v1653 = vld [vmem:[%s1649 + $0xc] sm:$0xf]
        %v1654 = vld [vmem:[%s1649 + $0x10] sm:$0xf]
        %v1655 = vld [vmem:[%s1649 + $0x14] sm:$0xf]
        %v1656 = vld [vmem:[%s1649 + $0x18] sm:$0xf]
        %v1657 = vld [vmem:[%s1649 + $0x1c] sm:$0xf]
        %v1658 = vld [vmem:[%s1649 + $0x20] sm:$0xf]
        %v1659 = vld [vmem:[%s1649 + $0x24] sm:$0xf]
        %v1660 = vld [vmem:[%s1649 + $0x28] sm:$0xf]
        %v1661 = vld [vmem:[%s1649 + $0x2c] sm:$0xf]
        %v1662 = vld [vmem:[%s1649 + $0x30] sm:$0xf]
        %v1663 = vld [vmem:[%s1649 + $0x34] sm:$0xf]
        %v1664 = vld [vmem:[%s1649 + $0x38] sm:$0xf]
        %v1665 = vld [vmem:[%s1649 + $0x3c] sm:$0xf]
        %v1682 = vunpack.c.l.b16 %v1650
        %v1683 = vunpack.c.l.b16 %v1651
        %v1684 = vunpack.c.l.b16 %v1652
        %v1685 = vunpack.c.l.b16 %v1653
        %v1686 = vunpack.c.l.b16 %v1654
        %v1687 = vunpack.c.l.b16 %v1655
        %v1688 = vunpack.c.l.b16 %v1656
        %v1689 = vunpack.c.l.b16 %v1657
        %v1690 = vunpack.c.l.b16 %v1658
        %v1691 = vunpack.c.l.b16 %v1659
        %v1692 = vunpack.c.l.b16 %v1660
        %v1693 = vunpack.c.l.b16 %v1661
        %v1694 = vunpack.c.l.b16 %v1662
        %v1695 = vunpack.c.l.b16 %v1663
        %v1696 = vunpack.c.l.b16 %v1664
        %v1697 = vunpack.c.l.b16 %v1665
        %v1698 = vpack.c.b16 %v1683, %v1682
        %v1699 = vpack.c.b16 %v1685, %v1684
        %v1700 = vpack.c.b16 %v1687, %v1686
        %v1701 = vpack.c.b16 %v1689, %v1688
        %v1702 = vpack.c.b16 %v1691, %v1690
        %v1703 = vpack.c.b16 %v1693, %v1692
        %v1704 = vpack.c.b16 %v1695, %v1694
        %v1705 = vpack.c.b16 %v1697, %v1696
        %1714 = vmatprep.subr.bf16.mxu0 0
        %1715 = vmatpush1.bf16.msra.mxu0 %v1698
        %1716 = vmatprep.subr.bf16.mxu0 0
        %1717 = vmatpush1.bf16.msra.mxu0 %v1699
        %1718 = vmatprep.subr.bf16.mxu0 0
        %1719 = vmatpush1.bf16.msra.mxu0 %v1700
        %1720 = vmatprep.subr.bf16.mxu0 0
        %1721 = vmatpush1.bf16.msra.mxu0 %v1701
        %1722 = vmatprep.subr.bf16.mxu0 0
        %1723 = vmatpush1.bf16.msra.mxu0 %v1702
        %1724 = vmatprep.subr.bf16.mxu0 0
        %1725 = vmatpush1.bf16.msra.mxu0 %v1703
        %1726 = vmatprep.subr.bf16.mxu0 0
        %1727 = vmatpush1.bf16.msra.mxu0 %v1704
        %1728 = vmatprep.subr.bf16.mxu0 0
        %1729 = vmatpush1.bf16.msra.mxu0 %v1705
        %1730 = vmatprep.subr.bf16.mxu0 0
        %1731 = vmatpush1.bf16.msra.mxu0 0
        %1732 = vmatprep.subr.bf16.mxu0 0
        %1733 = vmatpush1.bf16.msra.mxu0 0
        %1734 = vmatprep.subr.bf16.mxu0 0
        %1735 = vmatpush1.bf16.msra.mxu0 0
        %1736 = vmatprep.subr.bf16.mxu0 0
        %1737 = vmatpush1.bf16.msra.mxu0 0
        %1738 = vmatprep.subr.bf16.mxu0 0
        %1739 = vmatpush1.bf16.msra.mxu0 0
        %1740 = vmatprep.subr.bf16.mxu0 0
        %1741 = vmatpush1.bf16.msra.mxu0 0
        %1742 = vmatprep.subr.bf16.mxu0 0
        %1743 = vmatpush1.bf16.msra.mxu0 0
        %1744 = vmatprep.subr.bf16.mxu0 0
        %1745 = vmatpush1.bf16.msra.mxu0 0
        %1746 = vmatprep.mubr.bf16.mxu0 0
        %1747 = vmatmul.mubr.bf16.gmra.mrb[0].mxu0 %v1648
        %v1748 = vpop.f32.mrb[0].mxu0
        %v1749 = vadd.f32 0.0, %v1748
        %v1750 = vpop.f32.mrb[0].mxu0
        %v1751 = vpop.f32.mrb[0].mxu0
        %v1752 = vadd.f32 0.0, %v1751
        %v1753 = vpop.f32.mrb[0].mxu0
        %1754 = vdwg.mxu0
        %v1771 = vunpack.c.l.b16 %v1096
        %v1772 = vunpack.c.l.b16 %v1097
        %v1773 = vunpack.c.l.b16 %v1098
        %v1774 = vunpack.c.l.b16 %v1099
        %v1775 = vunpack.c.l.b16 %v1100
        %v1776 = vunpack.c.l.b16 %v1101
        %v1777 = vunpack.c.l.b16 %v1102
        %v1778 = vunpack.c.l.b16 %v1103
        %v1779 = vunpack.c.l.b16 %v1104
        %v1780 = vunpack.c.l.b16 %v1105
        %v1781 = vunpack.c.l.b16 %v1106
        %v1782 = vunpack.c.l.b16 %v1107
        %v1783 = vunpack.c.l.b16 %v1108
        %v1784 = vunpack.c.l.b16 %v1109
        %v1785 = vunpack.c.l.b16 %v1110
        %v1786 = vunpack.c.l.b16 %v1111
        %v1787 = vpack.c.b16 %v1772, %v1771
        %v1788 = vpack.c.b16 %v1774, %v1773
        %v1789 = vpack.c.b16 %v1776, %v1775
        %v1790 = vpack.c.b16 %v1778, %v1777
        %v1791 = vpack.c.b16 %v1780, %v1779
        %v1792 = vpack.c.b16 %v1782, %v1781
        %v1793 = vpack.c.b16 %v1784, %v1783
        %v1794 = vpack.c.b16 %v1786, %v1785
        %1803 = vmatprep.subr.bf16.mxu0 0
        %1804 = vmatpush1.bf16.msra.mxu0 %v1787
        %1805 = vmatprep.subr.bf16.mxu0 0
        %1806 = vmatpush1.bf16.msra.mxu0 %v1788
        %1807 = vmatprep.subr.bf16.mxu0 0
        %1808 = vmatpush1.bf16.msra.mxu0 %v1789
        %1809 = vmatprep.subr.bf16.mxu0 0
        %1810 = vmatpush1.bf16.msra.mxu0 %v1790
        %1811 = vmatprep.subr.bf16.mxu0 0
        %1812 = vmatpush1.bf16.msra.mxu0 %v1791
        %1813 = vmatprep.subr.bf16.mxu0 0
        %1814 = vmatpush1.bf16.msra.mxu0 %v1792
        %1815 = vmatprep.subr.bf16.mxu0 0
        %1816 = vmatpush1.bf16.msra.mxu0 %v1793
        %1817 = vmatprep.subr.bf16.mxu0 0
        %1818 = vmatpush1.bf16.msra.mxu0 %v1794
        %1819 = vmatprep.subr.bf16.mxu0 0
        %1820 = vmatpush1.bf16.msra.mxu0 0
        %1821 = vmatprep.subr.bf16.mxu0 0
        %1822 = vmatpush1.bf16.msra.mxu0 0
        %1823 = vmatprep.subr.bf16.mxu0 0
        %1824 = vmatpush1.bf16.msra.mxu0 0
        %1825 = vmatprep.subr.bf16.mxu0 0
        %1826 = vmatpush1.bf16.msra.mxu0 0
        %1827 = vmatprep.subr.bf16.mxu0 0
        %1828 = vmatpush1.bf16.msra.mxu0 0
        %1829 = vmatprep.subr.bf16.mxu0 0
        %1830 = vmatpush1.bf16.msra.mxu0 0
        %1831 = vmatprep.subr.bf16.mxu0 0
        %1832 = vmatpush1.bf16.msra.mxu0 0
        %1833 = vmatprep.subr.bf16.mxu0 0
        %1834 = vmatpush1.bf16.msra.mxu0 0
        %1835 = vmatprep.mubr.bf16.mxu0 0
        %1836 = vmatmul.mubr.bf16.gmra.mrb[0].mxu0 %v1095
        %v1837 = vpop.f32.mrb[0].mxu0
        %v1838 = vadd.f32 %v1749, %v1837
        %v1839 = vpop.f32.mrb[0].mxu0
        %v1840 = vpop.f32.mrb[0].mxu0
        %v1841 = vadd.f32 %v1752, %v1840
        %v1842 = vpop.f32.mrb[0].mxu0
        %1843 = vdwg.mxu0
        %v1844 = vlaneseq
        %v1845 = vshrl.u32 %v1844, 7
        %v1846 = vsub.s32 7, %v1845
        %v1847 = vrot.slane %v514, %v1846
        %v1848 = vadd.f32 %v1838, %v1847
        %v1849 = vadd.f32 %v1841, %v1847
        %v1850 = vlaneseq
        %v1851 = vshrl.u32 %v1850, 7
        %v1852 = vsub.s32 3, %v1851
        %v1853 = vrot.slane %v516, %v1852
        %v1854 = vmul.f32 %v1853, %v1848
        %v1855 = vmul.f32 %v1853, %v1849
        %v1856 = vadd.f32 %v507, %v1854
        %v1857 = vadd.f32 %v508, %v1855
        %1858 = vadd.xlane.f32.xlu0 %v1856
        %v1859 = vpop.xlane.xlu0 %1858
        %1860 = vadd.xlane.f32.xlu0 %v1857
        %v1861 = vpop.xlane.xlu0 %1860
        %v1862 = vmul.f32 %v1859, 0.03125
        %v1863 = vmul.f32 %v1861, 0.03125
        %v1864 = vsub.f32 %v1856, %v1862
        %v1865 = vsub.f32 %v1857, %v1863
        %v1866 = vmul.f32 %v1864, %v513
        %v1867 = vmul.f32 %v1865, %v513
        %v1868 = vmul.f32 %v1866, %v1866
        %v1869 = vmul.f32 %v1867, %v1867
        %1870 = vadd.xlane.f32.xlu0 %v1868
        %v1871 = vpop.xlane.xlu0 %1870
        %1872 = vadd.xlane.f32.xlu0 %v1869
        %v1873 = vpop.xlane.xlu0 %1872
        %v1874 = vmul.f32 %v1871, 0.03125
        %v1875 = vmul.f32 %v1873, 0.03125
        %v1876 = vadd.f32 %v1874, 1e-05
        %v1877 = vadd.f32 %v1875, 1e-05
        %v1878 = vrsqrt.pop %v1876
        %v1879 = vrsqrt.pop %v1877
        %v1880 = vmul.f32 %v1866, %v1878
        %v1881 = vmul.f32 %v1867, %v1879
        %v1882 = vlaneseq
        %v1883 = vshrl.u32 %v1882, 7
        %v1884 = vsub.s32 2, %v1883
        %v1885 = vrot.slane %v514, %v1884
        %v1886 = vmul.f32 %v1880, %v1885
        %v1887 = vmul.f32 %v1881, %v1885
        %v1888 = vlaneseq
        %v1889 = vshrl.u32 %v1888, 7
        %v1890 = vsub.s32 3, %v1889
        %v1891 = vrot.slane %v514, %v1890
        %v1892 = vadd.f32 %v1886, %v1891
        %v1893 = vadd.f32 %v1887, %v1891
        %v1894 = vpack.c.bf16 %v1893, %v1892
        %v1895 = vld [vmem:[%s418] sm:$0xf]
        %v1896 = vld [vmem:[%s418 + $0x4] sm:$0xf]
        %v1897 = vld [vmem:[%s418 + $0x8] sm:$0xf]
        %v1898 = vld [vmem:[%s418 + $0xc] sm:$0xf]
        %v1899 = vld [vmem:[%s418 + $0x10] sm:$0xf]
        %v1900 = vld [vmem:[%s418 + $0x14] sm:$0xf]
        %v1901 = vld [vmem:[%s418 + $0x18] sm:$0xf]
        %v1902 = vld [vmem:[%s418 + $0x1c] sm:$0xf]
        %v1903 = vld [vmem:[%s418 + $0x20] sm:$0xf]
        %v1904 = vld [vmem:[%s418 + $0x24] sm:$0xf]
        %v1905 = vld [vmem:[%s418 + $0x28] sm:$0xf]
        %v1906 = vld [vmem:[%s418 + $0x2c] sm:$0xf]
        %v1907 = vld [vmem:[%s418 + $0x30] sm:$0xf]
        %v1908 = vld [vmem:[%s418 + $0x34] sm:$0xf]
        %v1909 = vld [vmem:[%s418 + $0x38] sm:$0xf]
        %v1910 = vld [vmem:[%s418 + $0x3c] sm:$0xf]
        %v1911 = vlaneseq
        %v1912 = vshrl.u32 %v1911, 7
        %v1913 = vsub.s32 0, %v1912
        %v1914 = vrot.slane %v516, %v1913
        %v1931 = vunpack.c.l.b16 %v1895
        %v1932 = vunpack.c.l.b16 %v1896
        %v1933 = vunpack.c.l.b16 %v1897
        %v1934 = vunpack.c.l.b16 %v1898
        %v1935 = vunpack.c.l.b16 %v1899
        %v1936 = vunpack.c.l.b16 %v1900
        %v1937 = vunpack.c.l.b16 %v1901
        %v1938 = vunpack.c.l.b16 %v1902
        %v1939 = vunpack.c.l.b16 %v1903
        %v1940 = vunpack.c.l.b16 %v1904
        %v1941 = vunpack.c.l.b16 %v1905
        %v1942 = vunpack.c.l.b16 %v1906
        %v1943 = vunpack.c.l.b16 %v1907
        %v1944 = vunpack.c.l.b16 %v1908
        %v1945 = vunpack.c.l.b16 %v1909
        %v1946 = vunpack.c.l.b16 %v1910
        %v1947 = vpack.c.b16 %v1932, %v1931
        %v1948 = vpack.c.b16 %v1934, %v1933
        %v1949 = vpack.c.b16 %v1936, %v1935
        %v1950 = vpack.c.b16 %v1938, %v1937
        %v1951 = vpack.c.b16 %v1940, %v1939
        %v1952 = vpack.c.b16 %v1942, %v1941
        %v1953 = vpack.c.b16 %v1944, %v1943
        %v1954 = vpack.c.b16 %v1946, %v1945
        %1963 = vmatprep.subr.bf16.mxu0 0
        %1964 = vmatpush1.bf16.msra.mxu0 %v1947
        %1965 = vmatprep.subr.bf16.mxu0 0
        %1966 = vmatpush1.bf16.msra.mxu0 %v1948
        %1967 = vmatprep.subr.bf16.mxu0 0
        %1968 = vmatpush1.bf16.msra.mxu0 %v1949
        %1969 = vmatprep.subr.bf16.mxu0 0
        %1970 = vmatpush1.bf16.msra.mxu0 %v1950
        %1971 = vmatprep.subr.bf16.mxu0 0
        %1972 = vmatpush1.bf16.msra.mxu0 %v1951
        %1973 = vmatprep.subr.bf16.mxu0 0
        %1974 = vmatpush1.bf16.msra.mxu0 %v1952
        %1975 = vmatprep.subr.bf16.mxu0 0
        %1976 = vmatpush1.bf16.msra.mxu0 %v1953
        %1977 = vmatprep.subr.bf16.mxu0 0
        %1978 = vmatpush1.bf16.msra.mxu0 %v1954
        %1979 = vmatprep.subr.bf16.mxu0 0
        %1980 = vmatpush1.bf16.msra.mxu0 0
        %1981 = vmatprep.subr.bf16.mxu0 0
        %1982 = vmatpush1.bf16.msra.mxu0 0
        %1983 = vmatprep.subr.bf16.mxu0 0
        %1984 = vmatpush1.bf16.msra.mxu0 0
        %1985 = vmatprep.subr.bf16.mxu0 0
        %1986 = vmatpush1.bf16.msra.mxu0 0
        %1987 = vmatprep.subr.bf16.mxu0 0
        %1988 = vmatpush1.bf16.msra.mxu0 0
        %1989 = vmatprep.subr.bf16.mxu0 0
        %1990 = vmatpush1.bf16.msra.mxu0 0
        %1991 = vmatprep.subr.bf16.mxu0 0
        %1992 = vmatpush1.bf16.msra.mxu0 0
        %1993 = vmatprep.subr.bf16.mxu0 0
        %1994 = vmatpush1.bf16.msra.mxu0 0
        %1995 = vmatprep.mubr.bf16.mxu0 0
        %1996 = vmatmul.mubr.bf16.gmra.mrb[0].mxu0 %v1894
        %v1997 = vpop.f32.mrb[0].mxu0
        %v1998 = vadd.f32 %v1914, %v1997
        %v1999 = vpop.f32.mrb[0].mxu0
        %v2000 = vpop.f32.mrb[0].mxu0
        %v2001 = vadd.f32 %v1914, %v2000
        %v2002 = vpop.f32.mrb[0].mxu0
        %2003 = vdwg.mxu0
        %v2004 = vmul.f32 %v1998, 0.5
        %v2005 = vmul.f32 %v2001, 0.5
        %v2006 = vmul.f32 %v1998, 0.70710677
        %v2007 = vmul.f32 %v2001, 0.70710677
        %v2008 = vand.u32 2147483647, %v2006
        %v2009 = vand.u32 2147483647, %v2007
        %v2010 = vmul.f32 %v2008, 0.3275911
        %v2011 = vmul.f32 %v2009, 0.3275911
        %v2012 = vadd.f32 %v2010, 1.0
        %v2013 = vadd.f32 %v2011, 1.0
        %v2014 = vrcp.pop %v2012
        %v2015 = vmul.f32 1.0, %v2014
        %v2016 = vrcp.pop %v2013
        %v2017 = vmul.f32 1.0, %v2016
        %v2018 = vmul.f32 %v2015, 1.0614054
        %v2019 = vmul.f32 %v2017, 1.0614054
        %v2020 = vadd.f32 %v2018, -1.4531521
        %v2021 = vadd.f32 %v2019, -1.4531521
        %v2022 = vmul.f32 %v2020, %v2015
        %v2023 = vmul.f32 %v2021, %v2017
        %v2024 = vadd.f32 %v2022, 1.4214138
        %v2025 = vadd.f32 %v2023, 1.4214138
        %v2026 = vmul.f32 %v2024, %v2015
        %v2027 = vmul.f32 %v2025, %v2017
        %v2028 = vadd.f32 %v2026, -0.28449672
        %v2029 = vadd.f32 %v2027, -0.28449672
        %v2030 = vmul.f32 %v2028, %v2015
        %v2031 = vmul.f32 %v2029, %v2017
        %v2032 = vadd.f32 %v2030, 0.2548296
        %v2033 = vadd.f32 %v2031, 0.2548296
        %v2034 = vmul.f32 %v2032, %v2015
        %v2035 = vmul.f32 %v2033, %v2017
        %v2036 = vsub.f32 0.0, %v2008
        %v2037 = vsub.f32 0.0, %v2009
        %v2038 = vmul.f32 %v2036, %v2008
        %v2039 = vmul.f32 %v2037, %v2009
        %v2040 = vmul.f32 %v2038, 1.442695
        %v2041 = vpow.pop %v2040
        %v2042 = vmul.f32 %v2039, 1.442695
        %v2043 = vpow.pop %v2042
        %v2044 = vmul.f32 %v2034, %v2041
        %v2045 = vmul.f32 %v2035, %v2043
        %v2046 = vsub.f32 1.0, %v2044
        %v2047 = vsub.f32 1.0, %v2045
        %vm2048 = vcmp.ge.f32.partialorder %v2006, 0.0
        %vm2049 = vcmp.ge.f32.partialorder %v2007, 0.0
        %v2050 = vsub.f32 0.0, %v2046
        %v2051 = vsub.f32 0.0, %v2047
        %v2052 = vsel %vm2048, %v2046, %v2050
        %v2053 = vsel %vm2049, %v2047, %v2051
        %v2054 = vadd.f32 %v2052, 1.0
        %v2055 = vadd.f32 %v2053, 1.0
        %v2056 = vmul.f32 %v2004, %v2054
        %v2057 = vmul.f32 %v2005, %v2055
        %v2058 = vpack.c.bf16 %v2057, %v2056
        %v2059 = vld [vmem:[%s427] sm:$0xf]
        %v2060 = vld [vmem:[%s427 + $0x4] sm:$0xf]
        %v2061 = vld [vmem:[%s427 + $0x8] sm:$0xf]
        %v2062 = vld [vmem:[%s427 + $0xc] sm:$0xf]
        %v2063 = vld [vmem:[%s427 + $0x10] sm:$0xf]
        %v2064 = vld [vmem:[%s427 + $0x14] sm:$0xf]
        %v2065 = vld [vmem:[%s427 + $0x18] sm:$0xf]
        %v2066 = vld [vmem:[%s427 + $0x1c] sm:$0xf]
        %v2067 = vld [vmem:[%s427 + $0x20] sm:$0xf]
        %v2068 = vld [vmem:[%s427 + $0x24] sm:$0xf]
        %v2069 = vld [vmem:[%s427 + $0x28] sm:$0xf]
        %v2070 = vld [vmem:[%s427 + $0x2c] sm:$0xf]
        %v2071 = vld [vmem:[%s427 + $0x30] sm:$0xf]
        %v2072 = vld [vmem:[%s427 + $0x34] sm:$0xf]
        %v2073 = vld [vmem:[%s427 + $0x38] sm:$0xf]
        %v2074 = vld [vmem:[%s427 + $0x3c] sm:$0xf]
        %v2075 = vlaneseq
        %v2076 = vshrl.u32 %v2075, 7
        %v2077 = vsub.s32 1, %v2076
        %v2078 = vrot.slane %v516, %v2077
        %v2095 = vunpack.c.l.b16 %v2059
        %v2096 = vunpack.c.l.b16 %v2060
        %v2097 = vunpack.c.l.b16 %v2061
        %v2098 = vunpack.c.l.b16 %v2062
        %v2099 = vunpack.c.l.b16 %v2063
        %v2100 = vunpack.c.l.b16 %v2064
        %v2101 = vunpack.c.l.b16 %v2065
        %v2102 = vunpack.c.l.b16 %v2066
        %v2103 = vunpack.c.l.b16 %v2067
        %v2104 = vunpack.c.l.b16 %v2068
        %v2105 = vunpack.c.l.b16 %v2069
        %v2106 = vunpack.c.l.b16 %v2070
        %v2107 = vunpack.c.l.b16 %v2071
        %v2108 = vunpack.c.l.b16 %v2072
        %v2109 = vunpack.c.l.b16 %v2073
        %v2110 = vunpack.c.l.b16 %v2074
        %v2111 = vpack.c.b16 %v2096, %v2095
        %v2112 = vpack.c.b16 %v2098, %v2097
        %v2113 = vpack.c.b16 %v2100, %v2099
        %v2114 = vpack.c.b16 %v2102, %v2101
        %v2115 = vpack.c.b16 %v2104, %v2103
        %v2116 = vpack.c.b16 %v2106, %v2105
        %v2117 = vpack.c.b16 %v2108, %v2107
        %v2118 = vpack.c.b16 %v2110, %v2109
        %2127 = vmatprep.subr.bf16.mxu0 0
        %2128 = vmatpush1.bf16.msra.mxu0 %v2111
        %2129 = vmatprep.subr.bf16.mxu0 0
        %2130 = vmatpush1.bf16.msra.mxu0 %v2112
        %2131 = vmatprep.subr.bf16.mxu0 0
        %2132 = vmatpush1.bf16.msra.mxu0 %v2113
        %2133 = vmatprep.subr.bf16.mxu0 0
        %2134 = vmatpush1.bf16.msra.mxu0 %v2114
        %2135 = vmatprep.subr.bf16.mxu0 0
        %2136 = vmatpush1.bf16.msra.mxu0 %v2115
        %2137 = vmatprep.subr.bf16.mxu0 0
        %2138 = vmatpush1.bf16.msra.mxu0 %v2116
        %2139 = vmatprep.subr.bf16.mxu0 0
        %2140 = vmatpush1.bf16.msra.mxu0 %v2117
        %2141 = vmatprep.subr.bf16.mxu0 0
        %2142 = vmatpush1.bf16.msra.mxu0 %v2118
        %2143 = vmatprep.subr.bf16.mxu0 0
        %2144 = vmatpush1.bf16.msra.mxu0 0
        %2145 = vmatprep.subr.bf16.mxu0 0
        %2146 = vmatpush1.bf16.msra.mxu0 0
        %2147 = vmatprep.subr.bf16.mxu0 0
        %2148 = vmatpush1.bf16.msra.mxu0 0
        %2149 = vmatprep.subr.bf16.mxu0 0
        %2150 = vmatpush1.bf16.msra.mxu0 0
        %2151 = vmatprep.subr.bf16.mxu0 0
        %2152 = vmatpush1.bf16.msra.mxu0 0
        %2153 = vmatprep.subr.bf16.mxu0 0
        %2154 = vmatpush1.bf16.msra.mxu0 0
        %2155 = vmatprep.subr.bf16.mxu0 0
        %2156 = vmatpush1.bf16.msra.mxu0 0
        %2157 = vmatprep.subr.bf16.mxu0 0
        %2158 = vmatpush1.bf16.msra.mxu0 0
        %2159 = vmatprep.mubr.bf16.mxu0 0
        %2160 = vmatmul.mubr.bf16.gmra.mrb[0].mxu0 %v2058
        %v2161 = vpop.f32.mrb[0].mxu0
        %v2162 = vadd.f32 %v2078, %v2161
        %v2163 = vpop.f32.mrb[0].mxu0
        %v2164 = vpop.f32.mrb[0].mxu0
        %v2165 = vadd.f32 %v2078, %v2164
        %v2166 = vpop.f32.mrb[0].mxu0
        %2167 = vdwg.mxu0
        %v2168 = vmul.f32 %v2162, 0.5
        %v2169 = vmul.f32 %v2165, 0.5
        %v2170 = vmul.f32 %v2162, 0.70710677
        %v2171 = vmul.f32 %v2165, 0.70710677
        %v2172 = vand.u32 2147483647, %v2170
        %v2173 = vand.u32 2147483647, %v2171
        %v2174 = vmul.f32 %v2172, 0.3275911
        %v2175 = vmul.f32 %v2173, 0.3275911
        %v2176 = vadd.f32 %v2174, 1.0
        %v2177 = vadd.f32 %v2175, 1.0
        %v2178 = vrcp.pop %v2176
        %v2179 = vmul.f32 1.0, %v2178
        %v2180 = vrcp.pop %v2177
        %v2181 = vmul.f32 1.0, %v2180
        %v2182 = vmul.f32 %v2179, 1.0614054
        %v2183 = vmul.f32 %v2181, 1.0614054
        %v2184 = vadd.f32 %v2182, -1.4531521
        %v2185 = vadd.f32 %v2183, -1.4531521
        %v2186 = vmul.f32 %v2184, %v2179
        %v2187 = vmul.f32 %v2185, %v2181
        %v2188 = vadd.f32 %v2186, 1.4214138
        %v2189 = vadd.f32 %v2187, 1.4214138
        %v2190 = vmul.f32 %v2188, %v2179
        %v2191 = vmul.f32 %v2189, %v2181
        %v2192 = vadd.f32 %v2190, -0.28449672
        %v2193 = vadd.f32 %v2191, -0.28449672
        %v2194 = vmul.f32 %v2192, %v2179
        %v2195 = vmul.f32 %v2193, %v2181
        %v2196 = vadd.f32 %v2194, 0.2548296
        %v2197 = vadd.f32 %v2195, 0.2548296
        %v2198 = vmul.f32 %v2196, %v2179
        %v2199 = vmul.f32 %v2197, %v2181
        %v2200 = vsub.f32 0.0, %v2172
        %v2201 = vsub.f32 0.0, %v2173
        %v2202 = vmul.f32 %v2200, %v2172
        %v2203 = vmul.f32 %v2201, %v2173
        %v2204 = vmul.f32 %v2202, 1.442695
        %v2205 = vpow.pop %v2204
        %v2206 = vmul.f32 %v2203, 1.442695
        %v2207 = vpow.pop %v2206
        %v2208 = vmul.f32 %v2198, %v2205
        %v2209 = vmul.f32 %v2199, %v2207
        %v2210 = vsub.f32 1.0, %v2208
        %v2211 = vsub.f32 1.0, %v2209
        %vm2212 = vcmp.ge.f32.partialorder %v2170, 0.0
        %vm2213 = vcmp.ge.f32.partialorder %v2171, 0.0
        %v2214 = vsub.f32 0.0, %v2210
        %v2215 = vsub.f32 0.0, %v2211
        %v2216 = vsel %vm2212, %v2210, %v2214
        %v2217 = vsel %vm2213, %v2211, %v2215
        %v2218 = vadd.f32 %v2216, 1.0
        %v2219 = vadd.f32 %v2217, 1.0
        %v2220 = vmul.f32 %v2168, %v2218
        %v2221 = vmul.f32 %v2169, %v2219
        %v2222 = vpack.c.bf16 %v2221, %v2220
        %v2223 = vld [vmem:[%s436] sm:$0xf]
        %v2224 = vld [vmem:[%s436 + $0x4] sm:$0xf]
        %v2225 = vld [vmem:[%s436 + $0x8] sm:$0xf]
        %v2226 = vld [vmem:[%s436 + $0xc] sm:$0xf]
        %v2227 = vld [vmem:[%s436 + $0x10] sm:$0xf]
        %v2228 = vld [vmem:[%s436 + $0x14] sm:$0xf]
        %v2229 = vld [vmem:[%s436 + $0x18] sm:$0xf]
        %v2230 = vld [vmem:[%s436 + $0x1c] sm:$0xf]
        %v2231 = vld [vmem:[%s436 + $0x20] sm:$0xf]
        %v2232 = vld [vmem:[%s436 + $0x24] sm:$0xf]
        %v2233 = vld [vmem:[%s436 + $0x28] sm:$0xf]
        %v2234 = vld [vmem:[%s436 + $0x2c] sm:$0xf]
        %v2235 = vld [vmem:[%s436 + $0x30] sm:$0xf]
        %v2236 = vld [vmem:[%s436 + $0x34] sm:$0xf]
        %v2237 = vld [vmem:[%s436 + $0x38] sm:$0xf]
        %v2238 = vld [vmem:[%s436 + $0x3c] sm:$0xf]
        %v2239 = vlaneseq
        %v2240 = vshrl.u32 %v2239, 7
        %v2241 = vsub.s32 2, %v2240
        %v2242 = vrot.slane %v516, %v2241
        %v2259 = vunpack.c.l.b16 %v2223
        %v2260 = vunpack.c.l.b16 %v2224
        %v2261 = vunpack.c.l.b16 %v2225
        %v2262 = vunpack.c.l.b16 %v2226
        %v2263 = vunpack.c.l.b16 %v2227
        %v2264 = vunpack.c.l.b16 %v2228
        %v2265 = vunpack.c.l.b16 %v2229
        %v2266 = vunpack.c.l.b16 %v2230
        %v2267 = vunpack.c.l.b16 %v2231
        %v2268 = vunpack.c.l.b16 %v2232
        %v2269 = vunpack.c.l.b16 %v2233
        %v2270 = vunpack.c.l.b16 %v2234
        %v2271 = vunpack.c.l.b16 %v2235
        %v2272 = vunpack.c.l.b16 %v2236
        %v2273 = vunpack.c.l.b16 %v2237
        %v2274 = vunpack.c.l.b16 %v2238
        %v2275 = vpack.c.b16 %v2260, %v2259
        %v2276 = vpack.c.b16 %v2262, %v2261
        %v2277 = vpack.c.b16 %v2264, %v2263
        %v2278 = vpack.c.b16 %v2266, %v2265
        %v2279 = vpack.c.b16 %v2268, %v2267
        %v2280 = vpack.c.b16 %v2270, %v2269
        %v2281 = vpack.c.b16 %v2272, %v2271
        %v2282 = vpack.c.b16 %v2274, %v2273
        %2291 = vmatprep.subr.bf16.mxu0 0
        %2292 = vmatpush1.bf16.msra.mxu0 %v2275
        %2293 = vmatprep.subr.bf16.mxu0 0
        %2294 = vmatpush1.bf16.msra.mxu0 %v2276
        %2295 = vmatprep.subr.bf16.mxu0 0
        %2296 = vmatpush1.bf16.msra.mxu0 %v2277
        %2297 = vmatprep.subr.bf16.mxu0 0
        %2298 = vmatpush1.bf16.msra.mxu0 %v2278
        %2299 = vmatprep.subr.bf16.mxu0 0
        %2300 = vmatpush1.bf16.msra.mxu0 %v2279
        %2301 = vmatprep.subr.bf16.mxu0 0
        %2302 = vmatpush1.bf16.msra.mxu0 %v2280
        %2303 = vmatprep.subr.bf16.mxu0 0
        %2304 = vmatpush1.bf16.msra.mxu0 %v2281
        %2305 = vmatprep.subr.bf16.mxu0 0
        %2306 = vmatpush1.bf16.msra.mxu0 %v2282
        %2307 = vmatprep.subr.bf16.mxu0 0
        %2308 = vmatpush1.bf16.msra.mxu0 0
        %2309 = vmatprep.subr.bf16.mxu0 0
        %2310 = vmatpush1.bf16.msra.mxu0 0
        %2311 = vmatprep.subr.bf16.mxu0 0
        %2312 = vmatpush1.bf16.msra.mxu0 0
        %2313 = vmatprep.subr.bf16.mxu0 0
        %2314 = vmatpush1.bf16.msra.mxu0 0
        %2315 = vmatprep.subr.bf16.mxu0 0
        %2316 = vmatpush1.bf16.msra.mxu0 0
        %2317 = vmatprep.subr.bf16.mxu0 0
        %2318 = vmatpush1.bf16.msra.mxu0 0
        %2319 = vmatprep.subr.bf16.mxu0 0
        %2320 = vmatpush1.bf16.msra.mxu0 0
        %2321 = vmatprep.subr.bf16.mxu0 0
        %2322 = vmatpush1.bf16.msra.mxu0 0
        %2323 = vmatprep.mubr.bf16.mxu0 0
        %2324 = vmatmul.mubr.bf16.gmra.mrb[0].mxu0 %v2222
        %v2325 = vpop.f32.mrb[0].mxu0
        %v2326 = vadd.f32 %v2242, %v2325
        %v2327 = vpop.f32.mrb[0].mxu0
        %v2328 = vpop.f32.mrb[0].mxu0
        %v2329 = vadd.f32 %v2242, %v2328
        %v2330 = vpop.f32.mrb[0].mxu0
        %2331 = vdwg.mxu0
        %v2332 = vlaneseq
        %v2333 = vshrl.u32 %v2332, 7
        %v2334 = vsub.s32 4, %v2333
        %v2335 = vrot.slane %v516, %v2334
        %v2336 = vmul.f32 %v2335, %v2326
        %v2337 = vmul.f32 %v2335, %v2329
        %v2338 = vadd.f32 %v1856, %v2336
        %v2339 = vadd.f32 %v1857, %v2337
        %2340 = vst [vmem:[%s8] sm:$0xff] %v2338
        %2341 = vst [vmem:[%s8 + $0x8] sm:$0xff] %v2339
        %p2342 = scmp.eq.s32.totalorder %s29, 1
        // Predicated region
        $region81: #{_lambda_.2} parent=51 // pred_check
          %p2343 = pneg %p2342
        $region82: #{_lambda_.2} parent=51 // pred_check_branch
          %2345 = sbr.rel (%p2343) target = $region84
        $region83: #{_lambda_.2} parent=51 // pred_region
          %v2346 = vld [vmem:[#allocation10] sm:$0x3]
          %2347 = vadd.xlane.f32.xlu0 %v2338
          %v2348 = vpop.xlane.xlu0 %2347
          %2349 = vadd.xlane.f32.xlu0 %v2339
          %v2350 = vpop.xlane.xlu0 %2349
          %v2351 = vmul.f32 %v2348, 0.03125
          %v2352 = vmul.f32 %v2350, 0.03125
          %v2353 = vsub.f32 %v2338, %v2351
          %v2354 = vsub.f32 %v2339, %v2352
          %v2355 = vmul.f32 %v2353, %v513
          %v2356 = vmul.f32 %v2354, %v513
          %v2357 = vmul.f32 %v2355, %v2355
          %v2358 = vmul.f32 %v2356, %v2356
          %2359 = vadd.xlane.f32.xlu0 %v2357
          %v2360 = vpop.xlane.xlu0 %2359
          %2361 = vadd.xlane.f32.xlu0 %v2358
          %v2362 = vpop.xlane.xlu0 %2361
          %v2363 = vmul.f32 %v2360, 0.03125
          %v2364 = vmul.f32 %v2362, 0.03125
          %v2365 = vadd.f32 %v2363, 1e-05
          %v2366 = vadd.f32 %v2364, 1e-05
          %v2367 = vrsqrt.pop %v2365
          %v2368 = vrsqrt.pop %v2366
          %v2369 = vmul.f32 %v2355, %v2367
          %v2370 = vmul.f32 %v2356, %v2368
          %v2371 = vlaneseq
          %v2372 = vshrl.u32 %v2371, 7
          %v2373 = vsub.s32 0, %v2372
          %v2374 = vrot.slane %v2346, %v2373
          %v2375 = vmul.f32 %v2369, %v2374
          %v2376 = vmul.f32 %v2370, %v2374
          %v2377 = vlaneseq
          %v2378 = vshrl.u32 %v2377, 7
          %v2379 = vsub.s32 1, %v2378
          %v2380 = vrot.slane %v2346, %v2379
          %v2381 = vadd.f32 %v2375, %v2380
          %v2382 = vadd.f32 %v2376, %v2380
          %2383 = vst [vmem:[%s8] sm:$0xff] %v2381
          %2384 = vst [vmem:[%s8 + $0x8] sm:$0xff] %v2382
        $region84: #{_lambda_.2} parent=51 // pred_fallthru
          _
        // Predicated region
        $region85: #{_lambda_.2} parent=51 // pred_check
          %p2385 = pneg %p240
        $region86: #{_lambda_.2} parent=51 // pred_check_branch
          %2387 = sbr.rel (%p2385) target = $region88
        $region87: #{_lambda_.2} parent=51 // pred_region
          _
        $region88: #{_lambda_.2} parent=51 // pred_fallthru
          _
        // Predicated region
        $region89: #{_lambda_.2} parent=51 // pred_check
          %p2388 = pneg %p240
        $region90: #{_lambda_.2} parent=51 // pred_check_branch
          %2390 = sbr.rel (%p2388) target = $region92
        $region91: #{_lambda_.2} parent=51 // pred_region
          _
        $region92: #{_lambda_.2} parent=51 // pred_fallthru
          _
      $region52: #{_lambda_.2} parent=5 // pred_fallthru
        _
      %p2391 = scmp.le.s32.totalorder 2, %s24
      // Predicated region
      $region93: #{_lambda_.2} parent=5 // pred_check
        %p2392 = pneg %p2391
      $region94: #{_lambda_.2} parent=5 // pred_check_branch
        %2394 = sbr.rel (%p2392) target = $region96
      $region95: #{_lambda_.2} parent=5 // pred_region
        %s2395 = ssub.s32 %s24, 2
      $region96: #{_lambda_.2} parent=5 // pred_fallthru
        _
    $region6: #{_lambda_.2} parent=1 // loop_footer
      %s28 = sadd.s32 1, %s24
    $region7: #{_lambda_.2} parent=1 // loop_footer_branch
      %23 = sbr.rel target = $region3
    $region8: #{_lambda_.2} parent=1 // loop_exit
      _
    %2396 = vsyncpa [#allocation3], 1
    %s2397 = scalar_lea.sflag [#allocation3], 1
    %2398 = vsyncpa %s2397, 1
    %2399 = vsyncpa [#allocation5], 1
    %s2400 = scalar_lea.sflag [#allocation5], 1
    %2401 = vsyncpa %s2400, 1
    %2402 = vsyncpa [#allocation8], 1
    %s2403 = scalar_lea.sflag [#allocation8], 1
    %2404 = vsyncpa %s2403, 1
    %2405 = vsyncpa [#allocation11], 1

</llo_original>
